<compile_context>
chip_gen: v5e
topology: v5e:2x2
jax: 0.10.0
libtpu: 0.0.40
codegen_flags: <defaults>
</compile_context>

<pallas_src>
import functools

import numpy as np
import jax
import jax.numpy as jnp
from jax.experimental import pallas as pl
from jax.experimental.pallas import tpu as pltpu

CONV_PAD = 5       # Conv1d(kernel_size=10, padding=5)
NEG_SLOPE = 0.01   # nn.LeakyReLU() default
HG = 64            # per-direction gate width (hidden size 50 padded to 64 lanes)
OUT_LANES = 128    # lane padding of both kernel outputs (sliced back in the wrapper)


# ----------------------------------------------------------------------------
# Fused kernel: conv(MXU)+pool -> bi-LSTM1 (bf16 MXU + f32 VPU) -> bi-LSTM2 (VPU) -> decoder GEMM
# ----------------------------------------------------------------------------
def tae_fused_kernel(xcol_ref, wck_ref, cbias_ref, wih1_ref, b1_ref, whh1_ref,
                     wih2_ref, b2_ref, whh2_ref, smat_ref, bdec_ref,
                     feat_ref, dec_ref, *, BP, K, C, P, T):
    f32 = jnp.float32
    bf16 = jnp.bfloat16
    NG = 8 * HG                       # 512 gate lanes = 4 blocks [i|f|o|g], each [fwd 64|bwd 64]

    # ---------- Conv1d(1->C) as ONE MXU matmul + LeakyReLU, then MaxPool1d(P) ----------
    # xcol rows are ordered (l, b): row = l*BP + b, with l = t*P + p.
    y = jnp.dot(xcol_ref[...], wck_ref[...], preferred_element_type=f32) + cbias_ref[...]
    y = jnp.where(y > 0, y, NEG_SLOPE * y)                         # (T*P*BP, C)
    pooled_parts = []
    for t in range(T):                                             # pooled rows ordered (t, b)
        base = t * P * BP
        acc = y[base:base + BP, :]                                 # all slices sublane-aligned
        for p in range(1, P):
            acc = jnp.maximum(acc, y[base + p * BP:base + (p + 1) * BP, :])
        pooled_parts.append(acc)
    pooled = jnp.concatenate(pooled_parts, axis=0)                 # (T*BP, C)

    # ---------- bi-LSTM layer 1 (H=50): hoisted bf16 projection + merged fwd/bwd recurrence ----------
    A = jnp.dot(pooled.astype(bf16), wih1_ref[...],
                preferred_element_type=f32) + b1_ref[...]          # (T*BP, 512)
    lane = jax.lax.broadcasted_iota(jnp.int32, (BP, NG), 1)
    fwd_half = (lane % (2 * HG)) < HG
    # gate-input assembly hoisted out of the serial loop: fwd halves use x[t], bwd use x[T-1-t]
    gi = [jnp.where(fwd_half, A[t * BP:(t + 1) * BP, :],
                    A[(T - 1 - t) * BP:(T - t) * BP, :]) for t in range(T)]

    whh1 = whh1_ref[...]                                           # (2*HG, NG) bf16, block-diag halves
    h = jnp.zeros((BP, 2 * HG), f32)                               # [h_f | h_b]
    c = jnp.zeros((BP, 2 * HG), f32)
    h_list = [None] * T
    for t in range(T):                                             # fully unrolled serial chain
        g = gi[t] + jnp.dot(h.astype(bf16), whh1, preferred_element_type=f32)
        sg = jax.nn.sigmoid(g[:, 0:6 * HG])                        # [i | f | o] slabs (both dirs)
        gg = jnp.tanh(g[:, 6 * HG:NG])                             # [g] slab (both dirs)
        c = sg[:, 2 * HG:4 * HG] * c + sg[:, 0:2 * HG] * gg
        h = sg[:, 4 * HG:6 * HG] * jnp.tanh(c)
        h_list[t] = h

    # LSTM-1 output (sum over directions): y1[s] = h_f(s) + h_b(s); padded lanes stay exactly 0
    y1 = jnp.concatenate(
        [h_list[s][:, 0:HG] + h_list[T - 1 - s][:, HG:2 * HG] for s in range(T)], axis=0)

    # ---------- bi-LSTM layer 2 (H=1): hoisted projection, fwd/bwd stacked on sublanes ----------
    G2 = jnp.dot(y1, wih2_ref[...], preferred_element_type=f32) + b2_ref[...]   # (T*BP, 8)
    gi2 = [jnp.concatenate([G2[t * BP:(t + 1) * BP, 0:4],
                            G2[(T - 1 - t) * BP:(T - t) * BP, 4:8]], axis=0)
           for t in range(T)]                                      # each (2*BP, 4)
    whh2 = whh2_ref[...]                                           # (2, 4): [fwd; bwd], gates i,f,o,g
    whh2_all = jnp.concatenate([jnp.broadcast_to(whh2[0:1, :], (BP, 4)),
                                jnp.broadcast_to(whh2[1:2, :], (BP, 4))], axis=0)
    h2 = jnp.zeros((2 * BP, 1), f32)
    c2 = jnp.zeros((2 * BP, 1), f32)
    h2_list = [None] * T
    for t in range(T):
        a = gi2[t] + h2 * whh2_all                                 # (2*BP, 4), pure VPU/EUP
        sg = jax.nn.sigmoid(a[:, 0:3])                             # i, f, o
        gg = jnp.tanh(a[:, 3:4])                                   # g
        c2 = sg[:, 1:2] * c2 + sg[:, 0:1] * gg
        h2 = sg[:, 2:3] * jnp.tanh(c2)
        h2_list[t] = h2

    # ---------- features (lane-padded, single store) + decoder as one matmul ----------
    cols = [h2_list[s][0:BP, :] + h2_list[T - 1 - s][BP:2 * BP, :] for s in range(T)]
    feat_pad = jnp.concatenate(cols + [jnp.zeros((BP, OUT_LANES - T), f32)], axis=1)
    feat_ref[...] = feat_pad
    dec_ref[...] = jnp.dot(feat_pad, smat_ref[...], preferred_element_type=f32) + bdec_ref[...]


# ----------------------------------------------------------------------------
# One-time (outside jit) packing of all weight-derived operands
# ----------------------------------------------------------------------------
def pack_params(params, *, P, L):
    conv_w = np.asarray(params['conv_w'], np.float32)              # (C, 1, K)
    conv_b = np.asarray(params['conv_b'], np.float32)              # (C,)
    C, _, K = conv_w.shape
    pad = CONV_PAD
    L1 = L + 2 * pad - K + 1
    T = L1 // P                                                    # == n_hidden of the PyTorch model
    assert T <= OUT_LANES and T * P <= OUT_LANES

    w_kc = np.ascontiguousarray(conv_w[:, 0, :].T)                 # (K, C)
    cbias = conv_b.reshape(1, C)

    # --- bi-LSTM 1: 512 gate lanes = 4 blocks [i|f|o|g] of 128 lanes, each [fwd 0:64 | bwd 64:128] ---
    p1 = params['lstm1']
    H1 = np.asarray(p1['whh_f']).shape[1]
    assert H1 <= HG
    blk2torch = (0, 1, 3, 2)                                       # our order i,f,o,g <- torch i,f,g,o
    wih1 = np.zeros((C, 8 * HG), np.float32)
    b1 = np.zeros((1, 8 * HG), np.float32)
    whh1 = np.zeros((2 * HG, 8 * HG), np.float32)
    for d, sfx in enumerate(('f', 'b')):
        wih_d = np.asarray(p1['wih_' + sfx], np.float32)           # (4H, C)
        whh_d = np.asarray(p1['whh_' + sfx], np.float32)           # (4H, H)
        bias_d = (np.asarray(p1['bih_' + sfx], np.float32)
                  + np.asarray(p1['bhh_' + sfx], np.float32))
        for blk, tg in enumerate(blk2torch):
            col = blk * 2 * HG + d * HG
            rows = slice(tg * H1, (tg + 1) * H1)
            wih1[:, col:col + H1] = wih_d[rows, :].T
            whh1[d * HG:d * HG + H1, col:col + H1] = whh_d[rows, :].T
            b1[0, col:col + H1] = bias_d[rows]
    # padded-lane invariant: lanes H1:HG of every 64-lane half must be exactly zero so the padded
    # hidden lanes provably stay 0 through the recurrence.
    pad_lane = (np.arange(8 * HG) % HG) >= H1
    assert not wih1[:, pad_lane].any() and not whh1[:, pad_lane].any() and not b1[0, pad_lane].any()
    pad_rows = np.concatenate([np.arange(H1, HG), np.arange(HG + H1, 2 * HG)])
    assert not whh1[pad_rows, :].any()

    # --- bi-LSTM 2 (H=1): tiny dense gates for the VPU path; gate order i,f,o,g; fwd 0:4 / bwd 4:8 ---
    p2 = params['lstm2']
    H2 = np.asarray(p2['whh_f']).shape[1]
    assert H2 == 1, "VPU path of the fused kernel is specialised to filter_lstm[1] == 1"
    I2 = np.asarray(p2['wih_f']).shape[1]
    assert I2 <= HG
    wih2 = np.zeros((HG, 8), np.float32)
    b2 = np.zeros((1, 8), np.float32)
    whh2 = np.zeros((2, 4), np.float32)
    for d, sfx in enumerate(('f', 'b')):
        wih_d = np.asarray(p2['wih_' + sfx], np.float32)           # (4, I2)
        whh_d = np.asarray(p2['whh_' + sfx], np.float32)           # (4, 1)
        bias_d = (np.asarray(p2['bih_' + sfx], np.float32)
                  + np.asarray(p2['bhh_' + sfx], np.float32))
        for g_new, tg in enumerate(blk2torch):
            wih2[:I2, d * 4 + g_new] = wih_d[tg, :]
            b2[0, d * 4 + g_new] = bias_d[tg]
            whh2[d, g_new] = whh_d[tg, 0]

    # --- decoder: Upsample(size=P, nearest) + ConvTranspose1d(...)[:, :, :P] collapses to
    #     out[b, co*P + l] = sum_ci feat[b, ci] * S[ci, co*P + l] + bias[co], with
    #     S[ci, co, l] = sum_{k: 0 <= l + P//2 - k < P} dec_w[ci, co, k]. Lane-padded to 128. ---
    dec_w = np.asarray(params['dec_w'], np.float32)                # (T, T, Kd)
    dec_b = np.asarray(params['dec_b'], np.float32)                # (T,)
    assert dec_w.shape[0] == T and dec_w.shape[1] == T
    Kd = dec_w.shape[2]
    pd = P // 2
    S = np.zeros((T, T, P), np.float32)
    for l in range(P):
        k_lo = max(0, l + pd - P + 1)
        k_hi = min(Kd - 1, l + pd)
        if k_hi >= k_lo:
            S[:, :, l] = dec_w[:, :, k_lo:k_hi + 1].sum(axis=2)
    smat = np.zeros((OUT_LANES, OUT_LANES), np.float32)
    smat[:T, :T * P] = S.reshape(T, T * P)
    bdec = np.zeros((1, OUT_LANES), np.float32)
    bdec[0, :T * P] = np.repeat(dec_b, P)

    packed = dict(
        w_kc=jnp.asarray(w_kc), cbias=jnp.asarray(cbias),
        wih1=jnp.asarray(wih1, jnp.bfloat16), b1=jnp.asarray(b1),
        whh1=jnp.asarray(whh1, jnp.bfloat16),
        wih2=jnp.asarray(wih2), b2=jnp.asarray(b2), whh2=jnp.asarray(whh2),
        smat=jnp.asarray(smat), bdec=jnp.asarray(bdec))
    dims = dict(P=P, K=K, C=C, T=T, pad=pad)
    return packed, dims


# ----------------------------------------------------------------------------
# Forward wrapper: one gridless pallas_call, whole (tiny) operands resident in VMEM
# ----------------------------------------------------------------------------
@functools.partial(jax.jit, static_argnames=('P', 'K', 'C', 'T', 'pad'))
def tae_forward(x, packed, *, P, K, C, T, pad):
    B, cin, L = x.shape
    assert cin == 1
    BP = ((B + 7) // 8) * 8          # pad batch to full sublanes; padded rows are sliced off below
    LP = T * P                        # conv output rows actually consumed by the pooling
    assert LP + K - 1 <= L + 2 * pad

    # zero-pad batch + signal, then build the tiny im2col so the conv is one MXU matmul in-kernel
    xp = jnp.pad(x[:, 0, :], ((0, BP - B), (pad, pad)))                       # (BP, L+2pad)
    taps = jnp.arange(LP)[:, None] + jnp.arange(K)[None, :]                   # (LP, K)
    xcol = jnp.transpose(xp[:, taps], (1, 0, 2)).reshape(LP * BP, K)          # rows ordered (l, b)

    # TODO(synk): for large B on v7x, shard the BP//8 batch blocks across the 2 TensorCores with a
    # ("parallel",) grid; kept gridless here since the example batch fits one core's latency path.
    vmem = pl.BlockSpec(memory_space=pltpu.MemorySpace.VMEM)
    kern = functools.partial(tae_fused_kernel, BP=BP, K=K, C=C, P=P, T=T)
    feat_pad, dec_pad = pl.pallas_call(
        kern,
        out_shape=(jax.ShapeDtypeStruct((BP, OUT_LANES), jnp.float32),
                   jax.ShapeDtypeStruct((BP, OUT_LANES), jnp.float32)),
        in_specs=[vmem] * 11,
        out_specs=(vmem, vmem),
    )(xcol, packed['w_kc'], packed['cbias'], packed['wih1'], packed['b1'],
      packed['whh1'], packed['wih2'], packed['b2'], packed['whh2'],
      packed['smat'], packed['bdec'])
    return feat_pad[:B, :T], dec_pad[:B, :T * P]


# ----------------------------------------------------------------------------
# Deterministic parameter init (shapes follow the PyTorch module __init__)
# ----------------------------------------------------------------------------
def init_params(key, *, C, H1, H2, K, T):
    ks = jax.random.split(key, 20)
    s = 0.1
    rn = lambda k, shape: s * jax.random.normal(k, shape, jnp.float32)
    return {
        'conv_w': rn(ks[0], (C, 1, K)),
        'conv_b': rn(ks[1], (C,)),
        'lstm1': {
            'wih_f': rn(ks[2], (4 * H1, C)),  'whh_f': rn(ks[3], (4 * H1, H1)),
            'bih_f': rn(ks[4], (4 * H1,)),    'bhh_f': rn(ks[5], (4 * H1,)),
            'wih_b': rn(ks[6], (4 * H1, C)),  'whh_b': rn(ks[7], (4 * H1, H1)),
            'bih_b': rn(ks[8], (4 * H1,)),    'bhh_b': rn(ks[9], (4 * H1,)),
        },
        'lstm2': {
            'wih_f': rn(ks[10], (4 * H2, H1)), 'whh_f': rn(ks[11], (4 * H2, H2)),
            'bih_f': rn(ks[12], (4 * H2,)),    'bhh_f': rn(ks[13], (4 * H2,)),
            'wih_b': rn(ks[14], (4 * H2, H1)), 'whh_b': rn(ks[15], (4 * H2, H2)),
            'bih_b': rn(ks[16], (4 * H2,)),    'bhh_b': rn(ks[17], (4 * H2,)),
        },
        'dec_w': rn(ks[18], (T, T, K)),   # ConvTranspose1d weight: (in, out, K)
        'dec_b': rn(ks[19], (T,)),
    }


# ----------------------------------------------------------------------------
# Independent pure-numpy reference of the PyTorch forward (correctness check)
# ----------------------------------------------------------------------------
def reference_forward(x, params, P):
    def sigmoid(v):
        return 1.0 / (1.0 + np.exp(-v))

    x = np.asarray(x, np.float64)
    conv_w = np.asarray(params['conv_w'], np.float64)
    conv_b = np.asarray(params['conv_b'], np.float64)
    B, _, L = x.shape
    C, _, K = conv_w.shape
    pad = CONV_PAD
    L1 = L + 2 * pad - K + 1
    T = L1 // P
    xp = np.zeros((B, L + 2 * pad))
    xp[:, pad:pad + L] = x[:, 0, :]
    y = np.zeros((B, L1, C))
    for k in range(K):
        y += xp[:, k:k + L1][:, :, None] * conv_w[:, 0, k][None, None, :]
    y += conv_b[None, None, :]
    y = np.where(y > 0, y, NEG_SLOPE * y)
    y = y[:, :T * P, :].reshape(B, T, P, C).max(axis=2)            # (B, T, C)

    def lstm_dir(xs, wih, whh, bih, bhh, reverse):
        Bn, Tn, _ = xs.shape
        H = whh.shape[1]
        h = np.zeros((Bn, H)); c = np.zeros((Bn, H))
        out = np.zeros((Bn, Tn, H))
        order = range(Tn - 1, -1, -1) if reverse else range(Tn)
        for t in order:
            g = xs[:, t, :] @ wih.T + h @ whh.T + bih + bhh
            i = sigmoid(g[:, 0:H]); f = sigmoid(g[:, H:2 * H])
            gg = np.tanh(g[:, 2 * H:3 * H]); o = sigmoid(g[:, 3 * H:4 * H])
            c = f * c + i * gg
            h = o * np.tanh(c)
            out[:, t, :] = h
        return out

    def bilstm(xs, p):
        a = {k: np.asarray(v, np.float64) for k, v in p.items()}
        return (lstm_dir(xs, a['wih_f'], a['whh_f'], a['bih_f'], a['bhh_f'], False)
                + lstm_dir(xs, a['wih_b'], a['whh_b'], a['bih_b'], a['bhh_b'], True))

    l1 = bilstm(y, params['lstm1'])
    l2 = bilstm(l1, params['lstm2'])                               # (B, T, 1)
    feats = l2[:, :, 0]

    dec_w = np.asarray(params['dec_w'], np.float64)
    dec_b = np.asarray(params['dec_b'], np.float64)
    Kd = dec_w.shape[2]
    pd = P // 2
    up = np.broadcast_to(feats[:, :, None], (B, T, P))             # Upsample(size=P), nearest
    out = np.zeros((B, T, P))
    for j in range(P):                                             # ConvTranspose1d(...)[:, :, :P]
        acc = np.zeros((B, T))
        for m in range(P):
            k = j + pd - m
            if 0 <= k < Kd:
                acc += up[:, :, m] @ dec_w[:, :, k]
        out[:, :, j] = acc + dec_b[None, :]
    return feats, out.reshape(B, T * P)


if __name__ == "__main__":
    B = 2            # batch
    L = 63           # serie_size  -> conv output length 64
    P = 8            # pooling (args.pool)
    C = 50           # filter_1
    H1, H2 = 50, 1   # filter_lstm
    K = 10
    L1 = L + 2 * CONV_PAD - K + 1
    T = L1 // P      # n_hidden discovered by get_hidden() in the PyTorch module

    key = jax.random.PRNGKey(0)
    kp, kx = jax.random.split(key)
    params = init_params(kp, C=C, H1=H1, H2=H2, K=K, T=T)
    x = jax.random.normal(kx, (B, 1, L), jnp.float32)              # NCW like PyTorch

    packed, dims = pack_params(params, P=P, L=L)
    feats, out_deconv = tae_forward(x, packed, **dims)
    jax.block_until_ready((feats, out_deconv))

    assert feats.shape == (B, T), feats.shape
    assert out_deconv.shape == (B, T * P), out_deconv.shape
    assert bool(jnp.all(jnp.isfinite(feats))) and bool(jnp.all(jnp.isfinite(out_deconv)))

    feats_ref, dec_ref_np = reference_forward(x, params, P)
    assert np.allclose(np.asarray(feats), feats_ref, rtol=1e-2, atol=1e-2)
    assert np.allclose(np.asarray(out_deconv), dec_ref_np, rtol=1e-2, atol=1e-2)
    print("KERNEL_OK")
</pallas_src>

<mosaic_0001>
module attributes {stable_mosaic.version = 11 : i64} {
  func.func @tae_fused_kernel(%arg0: memref<512x10xf32, #tpu.memory_space<vmem>>, %arg1: memref<10x50xf32, #tpu.memory_space<vmem>>, %arg2: memref<1x50xf32, #tpu.memory_space<vmem>>, %arg3: memref<50x512xbf16, #tpu.memory_space<vmem>>, %arg4: memref<1x512xf32, #tpu.memory_space<vmem>>, %arg5: memref<128x512xbf16, #tpu.memory_space<vmem>>, %arg6: memref<64x8xf32, #tpu.memory_space<vmem>>, %arg7: memref<1x8xf32, #tpu.memory_space<vmem>>, %arg8: memref<2x4xf32, #tpu.memory_space<vmem>>, %arg9: memref<128x128xf32, #tpu.memory_space<vmem>>, %arg10: memref<1x128xf32, #tpu.memory_space<vmem>>, %arg11: memref<8x128xf32, #tpu.memory_space<vmem>>, %arg12: memref<8x128xf32, #tpu.memory_space<vmem>>) attributes {dimension_semantics = [], scalar_prefetch = 0 : i64, scratch_operands = 0 : i64, tpu.core_type = #tpu.core_type<tc>} {
    %c0 = arith.constant 0 : index
    %c0_0 = arith.constant 0 : index
    %0 = vector.load %arg0[%c0, %c0_0] : memref<512x10xf32, #tpu.memory_space<vmem>>, vector<512x10xf32>
    %c0_1 = arith.constant 0 : index
    %c0_2 = arith.constant 0 : index
    %1 = vector.load %arg1[%c0_1, %c0_2] : memref<10x50xf32, #tpu.memory_space<vmem>>, vector<10x50xf32>
    %cst = arith.constant dense<0.000000e+00> : vector<512x50xf32>
    %2 = tpu.matmul %0, %1, %cst {dimension_numbers = #tpu.dot_dimension_numbers<[1], [0], [0], [1], [0, 0, 1, 1], [], []>} : vector<512x10xf32>, vector<10x50xf32>, vector<512x50xf32> -> vector<512x50xf32>
    %c0_3 = arith.constant 0 : index
    %c0_4 = arith.constant 0 : index
    %3 = vector.load %arg2[%c0_3, %c0_4] : memref<1x50xf32, #tpu.memory_space<vmem>>, vector<1x50xf32>
    %4 = vector.broadcast %3 : vector<1x50xf32> to vector<512x50xf32>
    %5 = arith.addf %2, %4 : vector<512x50xf32>
    %cst_5 = arith.constant 0.000000e+00 : f32
    %6 = vector.broadcast %cst_5 : f32 to vector<512x50xf32>
    %7 = arith.cmpf ogt, %5, %6 : vector<512x50xf32>
    %cst_6 = arith.constant 0.00999999977 : f32
    %8 = vector.broadcast %cst_6 : f32 to vector<512x50xf32>
    %9 = arith.mulf %8, %5 : vector<512x50xf32>
    %10 = arith.select %7, %5, %9 : vector<512x50xi1>, vector<512x50xf32>
    %11 = vector.extract_strided_slice %10 {offsets = [0, 0], sizes = [8, 50], strides = [1, 1]} : vector<512x50xf32> to vector<8x50xf32>
    %12 = vector.extract_strided_slice %10 {offsets = [8, 0], sizes = [8, 50], strides = [1, 1]} : vector<512x50xf32> to vector<8x50xf32>
    %13 = arith.maximumf %11, %12 : vector<8x50xf32>
    %14 = vector.extract_strided_slice %10 {offsets = [16, 0], sizes = [8, 50], strides = [1, 1]} : vector<512x50xf32> to vector<8x50xf32>
    %15 = arith.maximumf %13, %14 : vector<8x50xf32>
    %16 = vector.extract_strided_slice %10 {offsets = [24, 0], sizes = [8, 50], strides = [1, 1]} : vector<512x50xf32> to vector<8x50xf32>
    %17 = arith.maximumf %15, %16 : vector<8x50xf32>
    %18 = vector.extract_strided_slice %10 {offsets = [32, 0], sizes = [8, 50], strides = [1, 1]} : vector<512x50xf32> to vector<8x50xf32>
    %19 = arith.maximumf %17, %18 : vector<8x50xf32>
    %20 = vector.extract_strided_slice %10 {offsets = [40, 0], sizes = [8, 50], strides = [1, 1]} : vector<512x50xf32> to vector<8x50xf32>
    %21 = arith.maximumf %19, %20 : vector<8x50xf32>
    %22 = vector.extract_strided_slice %10 {offsets = [48, 0], sizes = [8, 50], strides = [1, 1]} : vector<512x50xf32> to vector<8x50xf32>
    %23 = arith.maximumf %21, %22 : vector<8x50xf32>
    %24 = vector.extract_strided_slice %10 {offsets = [56, 0], sizes = [8, 50], strides = [1, 1]} : vector<512x50xf32> to vector<8x50xf32>
    %25 = arith.maximumf %23, %24 : vector<8x50xf32>
    %26 = vector.extract_strided_slice %10 {offsets = [64, 0], sizes = [8, 50], strides = [1, 1]} : vector<512x50xf32> to vector<8x50xf32>
    %27 = vector.extract_strided_slice %10 {offsets = [72, 0], sizes = [8, 50], strides = [1, 1]} : vector<512x50xf32> to vector<8x50xf32>
    %28 = arith.maximumf %26, %27 : vector<8x50xf32>
    %29 = vector.extract_strided_slice %10 {offsets = [80, 0], sizes = [8, 50], strides = [1, 1]} : vector<512x50xf32> to vector<8x50xf32>
    %30 = arith.maximumf %28, %29 : vector<8x50xf32>
    %31 = vector.extract_strided_slice %10 {offsets = [88, 0], sizes = [8, 50], strides = [1, 1]} : vector<512x50xf32> to vector<8x50xf32>
    %32 = arith.maximumf %30, %31 : vector<8x50xf32>
    %33 = vector.extract_strided_slice %10 {offsets = [96, 0], sizes = [8, 50], strides = [1, 1]} : vector<512x50xf32> to vector<8x50xf32>
    %34 = arith.maximumf %32, %33 : vector<8x50xf32>
    %35 = vector.extract_strided_slice %10 {offsets = [104, 0], sizes = [8, 50], strides = [1, 1]} : vector<512x50xf32> to vector<8x50xf32>
    %36 = arith.maximumf %34, %35 : vector<8x50xf32>
    %37 = vector.extract_strided_slice %10 {offsets = [112, 0], sizes = [8, 50], strides = [1, 1]} : vector<512x50xf32> to vector<8x50xf32>
    %38 = arith.maximumf %36, %37 : vector<8x50xf32>
    %39 = vector.extract_strided_slice %10 {offsets = [120, 0], sizes = [8, 50], strides = [1, 1]} : vector<512x50xf32> to vector<8x50xf32>
    %40 = arith.maximumf %38, %39 : vector<8x50xf32>
    %41 = vector.extract_strided_slice %10 {offsets = [128, 0], sizes = [8, 50], strides = [1, 1]} : vector<512x50xf32> to vector<8x50xf32>
    %42 = vector.extract_strided_slice %10 {offsets = [136, 0], sizes = [8, 50], strides = [1, 1]} : vector<512x50xf32> to vector<8x50xf32>
    %43 = arith.maximumf %41, %42 : vector<8x50xf32>
    %44 = vector.extract_strided_slice %10 {offsets = [144, 0], sizes = [8, 50], strides = [1, 1]} : vector<512x50xf32> to vector<8x50xf32>
    %45 = arith.maximumf %43, %44 : vector<8x50xf32>
    %46 = vector.extract_strided_slice %10 {offsets = [152, 0], sizes = [8, 50], strides = [1, 1]} : vector<512x50xf32> to vector<8x50xf32>
    %47 = arith.maximumf %45, %46 : vector<8x50xf32>
    %48 = vector.extract_strided_slice %10 {offsets = [160, 0], sizes = [8, 50], strides = [1, 1]} : vector<512x50xf32> to vector<8x50xf32>
    %49 = arith.maximumf %47, %48 : vector<8x50xf32>
    %50 = vector.extract_strided_slice %10 {offsets = [168, 0], sizes = [8, 50], strides = [1, 1]} : vector<512x50xf32> to vector<8x50xf32>
    %51 = arith.maximumf %49, %50 : vector<8x50xf32>
    %52 = vector.extract_strided_slice %10 {offsets = [176, 0], sizes = [8, 50], strides = [1, 1]} : vector<512x50xf32> to vector<8x50xf32>
    %53 = arith.maximumf %51, %52 : vector<8x50xf32>
    %54 = vector.extract_strided_slice %10 {offsets = [184, 0], sizes = [8, 50], strides = [1, 1]} : vector<512x50xf32> to vector<8x50xf32>
    %55 = arith.maximumf %53, %54 : vector<8x50xf32>
    %56 = vector.extract_strided_slice %10 {offsets = [192, 0], sizes = [8, 50], strides = [1, 1]} : vector<512x50xf32> to vector<8x50xf32>
    %57 = vector.extract_strided_slice %10 {offsets = [200, 0], sizes = [8, 50], strides = [1, 1]} : vector<512x50xf32> to vector<8x50xf32>
    %58 = arith.maximumf %56, %57 : vector<8x50xf32>
    %59 = vector.extract_strided_slice %10 {offsets = [208, 0], sizes = [8, 50], strides = [1, 1]} : vector<512x50xf32> to vector<8x50xf32>
    %60 = arith.maximumf %58, %59 : vector<8x50xf32>
    %61 = vector.extract_strided_slice %10 {offsets = [216, 0], sizes = [8, 50], strides = [1, 1]} : vector<512x50xf32> to vector<8x50xf32>
    %62 = arith.maximumf %60, %61 : vector<8x50xf32>
    %63 = vector.extract_strided_slice %10 {offsets = [224, 0], sizes = [8, 50], strides = [1, 1]} : vector<512x50xf32> to vector<8x50xf32>
    %64 = arith.maximumf %62, %63 : vector<8x50xf32>
    %65 = vector.extract_strided_slice %10 {offsets = [232, 0], sizes = [8, 50], strides = [1, 1]} : vector<512x50xf32> to vector<8x50xf32>
    %66 = arith.maximumf %64, %65 : vector<8x50xf32>
    %67 = vector.extract_strided_slice %10 {offsets = [240, 0], sizes = [8, 50], strides = [1, 1]} : vector<512x50xf32> to vector<8x50xf32>
    %68 = arith.maximumf %66, %67 : vector<8x50xf32>
    %69 = vector.extract_strided_slice %10 {offsets = [248, 0], sizes = [8, 50], strides = [1, 1]} : vector<512x50xf32> to vector<8x50xf32>
    %70 = arith.maximumf %68, %69 : vector<8x50xf32>
    %71 = vector.extract_strided_slice %10 {offsets = [256, 0], sizes = [8, 50], strides = [1, 1]} : vector<512x50xf32> to vector<8x50xf32>
    %72 = vector.extract_strided_slice %10 {offsets = [264, 0], sizes = [8, 50], strides = [1, 1]} : vector<512x50xf32> to vector<8x50xf32>
    %73 = arith.maximumf %71, %72 : vector<8x50xf32>
    %74 = vector.extract_strided_slice %10 {offsets = [272, 0], sizes = [8, 50], strides = [1, 1]} : vector<512x50xf32> to vector<8x50xf32>
    %75 = arith.maximumf %73, %74 : vector<8x50xf32>
    %76 = vector.extract_strided_slice %10 {offsets = [280, 0], sizes = [8, 50], strides = [1, 1]} : vector<512x50xf32> to vector<8x50xf32>
    %77 = arith.maximumf %75, %76 : vector<8x50xf32>
    %78 = vector.extract_strided_slice %10 {offsets = [288, 0], sizes = [8, 50], strides = [1, 1]} : vector<512x50xf32> to vector<8x50xf32>
    %79 = arith.maximumf %77, %78 : vector<8x50xf32>
    %80 = vector.extract_strided_slice %10 {offsets = [296, 0], sizes = [8, 50], strides = [1, 1]} : vector<512x50xf32> to vector<8x50xf32>
    %81 = arith.maximumf %79, %80 : vector<8x50xf32>
    %82 = vector.extract_strided_slice %10 {offsets = [304, 0], sizes = [8, 50], strides = [1, 1]} : vector<512x50xf32> to vector<8x50xf32>
    %83 = arith.maximumf %81, %82 : vector<8x50xf32>
    %84 = vector.extract_strided_slice %10 {offsets = [312, 0], sizes = [8, 50], strides = [1, 1]} : vector<512x50xf32> to vector<8x50xf32>
    %85 = arith.maximumf %83, %84 : vector<8x50xf32>
    %86 = vector.extract_strided_slice %10 {offsets = [320, 0], sizes = [8, 50], strides = [1, 1]} : vector<512x50xf32> to vector<8x50xf32>
    %87 = vector.extract_strided_slice %10 {offsets = [328, 0], sizes = [8, 50], strides = [1, 1]} : vector<512x50xf32> to vector<8x50xf32>
    %88 = arith.maximumf %86, %87 : vector<8x50xf32>
    %89 = vector.extract_strided_slice %10 {offsets = [336, 0], sizes = [8, 50], strides = [1, 1]} : vector<512x50xf32> to vector<8x50xf32>
    %90 = arith.maximumf %88, %89 : vector<8x50xf32>
    %91 = vector.extract_strided_slice %10 {offsets = [344, 0], sizes = [8, 50], strides = [1, 1]} : vector<512x50xf32> to vector<8x50xf32>
    %92 = arith.maximumf %90, %91 : vector<8x50xf32>
    %93 = vector.extract_strided_slice %10 {offsets = [352, 0], sizes = [8, 50], strides = [1, 1]} : vector<512x50xf32> to vector<8x50xf32>
    %94 = arith.maximumf %92, %93 : vector<8x50xf32>
    %95 = vector.extract_strided_slice %10 {offsets = [360, 0], sizes = [8, 50], strides = [1, 1]} : vector<512x50xf32> to vector<8x50xf32>
    %96 = arith.maximumf %94, %95 : vector<8x50xf32>
    %97 = vector.extract_strided_slice %10 {offsets = [368, 0], sizes = [8, 50], strides = [1, 1]} : vector<512x50xf32> to vector<8x50xf32>
    %98 = arith.maximumf %96, %97 : vector<8x50xf32>
    %99 = vector.extract_strided_slice %10 {offsets = [376, 0], sizes = [8, 50], strides = [1, 1]} : vector<512x50xf32> to vector<8x50xf32>
    %100 = arith.maximumf %98, %99 : vector<8x50xf32>
    %101 = vector.extract_strided_slice %10 {offsets = [384, 0], sizes = [8, 50], strides = [1, 1]} : vector<512x50xf32> to vector<8x50xf32>
    %102 = vector.extract_strided_slice %10 {offsets = [392, 0], sizes = [8, 50], strides = [1, 1]} : vector<512x50xf32> to vector<8x50xf32>
    %103 = arith.maximumf %101, %102 : vector<8x50xf32>
    %104 = vector.extract_strided_slice %10 {offsets = [400, 0], sizes = [8, 50], strides = [1, 1]} : vector<512x50xf32> to vector<8x50xf32>
    %105 = arith.maximumf %103, %104 : vector<8x50xf32>
    %106 = vector.extract_strided_slice %10 {offsets = [408, 0], sizes = [8, 50], strides = [1, 1]} : vector<512x50xf32> to vector<8x50xf32>
    %107 = arith.maximumf %105, %106 : vector<8x50xf32>
    %108 = vector.extract_strided_slice %10 {offsets = [416, 0], sizes = [8, 50], strides = [1, 1]} : vector<512x50xf32> to vector<8x50xf32>
    %109 = arith.maximumf %107, %108 : vector<8x50xf32>
    %110 = vector.extract_strided_slice %10 {offsets = [424, 0], sizes = [8, 50], strides = [1, 1]} : vector<512x50xf32> to vector<8x50xf32>
    %111 = arith.maximumf %109, %110 : vector<8x50xf32>
    %112 = vector.extract_strided_slice %10 {offsets = [432, 0], sizes = [8, 50], strides = [1, 1]} : vector<512x50xf32> to vector<8x50xf32>
    %113 = arith.maximumf %111, %112 : vector<8x50xf32>
    %114 = vector.extract_strided_slice %10 {offsets = [440, 0], sizes = [8, 50], strides = [1, 1]} : vector<512x50xf32> to vector<8x50xf32>
    %115 = arith.maximumf %113, %114 : vector<8x50xf32>
    %116 = vector.extract_strided_slice %10 {offsets = [448, 0], sizes = [8, 50], strides = [1, 1]} : vector<512x50xf32> to vector<8x50xf32>
    %117 = vector.extract_strided_slice %10 {offsets = [456, 0], sizes = [8, 50], strides = [1, 1]} : vector<512x50xf32> to vector<8x50xf32>
    %118 = arith.maximumf %116, %117 : vector<8x50xf32>
    %119 = vector.extract_strided_slice %10 {offsets = [464, 0], sizes = [8, 50], strides = [1, 1]} : vector<512x50xf32> to vector<8x50xf32>
    %120 = arith.maximumf %118, %119 : vector<8x50xf32>
    %121 = vector.extract_strided_slice %10 {offsets = [472, 0], sizes = [8, 50], strides = [1, 1]} : vector<512x50xf32> to vector<8x50xf32>
    %122 = arith.maximumf %120, %121 : vector<8x50xf32>
    %123 = vector.extract_strided_slice %10 {offsets = [480, 0], sizes = [8, 50], strides = [1, 1]} : vector<512x50xf32> to vector<8x50xf32>
    %124 = arith.maximumf %122, %123 : vector<8x50xf32>
    %125 = vector.extract_strided_slice %10 {offsets = [488, 0], sizes = [8, 50], strides = [1, 1]} : vector<512x50xf32> to vector<8x50xf32>
    %126 = arith.maximumf %124, %125 : vector<8x50xf32>
    %127 = vector.extract_strided_slice %10 {offsets = [496, 0], sizes = [8, 50], strides = [1, 1]} : vector<512x50xf32> to vector<8x50xf32>
    %128 = arith.maximumf %126, %127 : vector<8x50xf32>
    %129 = vector.extract_strided_slice %10 {offsets = [504, 0], sizes = [8, 50], strides = [1, 1]} : vector<512x50xf32> to vector<8x50xf32>
    %130 = arith.maximumf %128, %129 : vector<8x50xf32>
    %131 = tpu.concatenate %25, %40, %55, %70, %85, %100, %115, %130 in 0 : vector<8x50xf32>, vector<8x50xf32>, vector<8x50xf32>, vector<8x50xf32>, vector<8x50xf32>, vector<8x50xf32>, vector<8x50xf32>, vector<8x50xf32> -> vector<64x50xf32>
    %132 = arith.truncf %131 : vector<64x50xf32> to vector<64x50xbf16>
    %c0_7 = arith.constant 0 : index
    %c0_8 = arith.constant 0 : index
    %133 = vector.load %arg3[%c0_7, %c0_8] : memref<50x512xbf16, #tpu.memory_space<vmem>>, vector<50x512xbf16>
    %cst_9 = arith.constant dense<0.000000e+00> : vector<64x512xf32>
    %134 = tpu.matmul %132, %133, %cst_9 {dimension_numbers = #tpu.dot_dimension_numbers<[1], [0], [0], [1], [0, 0, 1, 1], [], []>} : vector<64x50xbf16>, vector<50x512xbf16>, vector<64x512xf32> -> vector<64x512xf32>
    %c0_10 = arith.constant 0 : index
    %c0_11 = arith.constant 0 : index
    %135 = vector.load %arg4[%c0_10, %c0_11] : memref<1x512xf32, #tpu.memory_space<vmem>>, vector<1x512xf32>
    %136 = vector.broadcast %135 : vector<1x512xf32> to vector<64x512xf32>
    %137 = arith.addf %134, %136 : vector<64x512xf32>
    %138 = tpu.iota {dimensions = array<i32: 1>} : vector<8x512xi32>
    %c128_i32 = arith.constant 128 : i32
    %c0_i32 = arith.constant 0 : i32
    %139 = arith.cmpi eq, %c128_i32, %c0_i32 : i32
    %c1_i32 = arith.constant 1 : i32
    %140 = arith.select %139, %c1_i32, %c128_i32 : i32
    %141 = vector.broadcast %140 : i32 to vector<8x512xi32>
    %142 = arith.remsi %138, %141 : vector<8x512xi32>
    %c0_i32_12 = arith.constant 0 : i32
    %143 = vector.broadcast %c0_i32_12 : i32 to vector<8x512xi32>
    %144 = arith.cmpi ne, %142, %143 : vector<8x512xi32>
    %c0_i32_13 = arith.constant 0 : i32
    %145 = vector.broadcast %c0_i32_13 : i32 to vector<8x512xi32>
    %146 = arith.cmpi slt, %142, %145 : vector<8x512xi32>
    %c0_i32_14 = arith.constant 0 : i32
    %147 = arith.cmpi slt, %140, %c0_i32_14 : i32
    %148 = vector.broadcast %147 : i1 to vector<8x512xi1>
    %149 = vector.broadcast %148 : vector<8x512xi1> to vector<8x512xi1>
    %150 = arith.xori %146, %149 : vector<8x512xi1>
    %151 = arith.andi %150, %144 : vector<8x512xi1>
    %152 = vector.broadcast %140 : i32 to vector<8x512xi32>
    %153 = arith.addi %142, %152 : vector<8x512xi32>
    %154 = arith.select %151, %153, %142 : vector<8x512xi1>, vector<8x512xi32>
    %c64_i32 = arith.constant 64 : i32
    %155 = vector.broadcast %c64_i32 : i32 to vector<8x512xi32>
    %156 = arith.cmpi slt, %154, %155 : vector<8x512xi32>
    %157 = vector.extract_strided_slice %137 {offsets = [0, 0], sizes = [8, 512], strides = [1, 1]} : vector<64x512xf32> to vector<8x512xf32>
    %158 = vector.extract_strided_slice %137 {offsets = [56, 0], sizes = [8, 512], strides = [1, 1]} : vector<64x512xf32> to vector<8x512xf32>
    %159 = arith.select %156, %157, %158 : vector<8x512xi1>, vector<8x512xf32>
    %160 = vector.extract_strided_slice %137 {offsets = [8, 0], sizes = [8, 512], strides = [1, 1]} : vector<64x512xf32> to vector<8x512xf32>
    %161 = vector.extract_strided_slice %137 {offsets = [48, 0], sizes = [8, 512], strides = [1, 1]} : vector<64x512xf32> to vector<8x512xf32>
    %162 = arith.select %156, %160, %161 : vector<8x512xi1>, vector<8x512xf32>
    %163 = vector.extract_strided_slice %137 {offsets = [16, 0], sizes = [8, 512], strides = [1, 1]} : vector<64x512xf32> to vector<8x512xf32>
    %164 = vector.extract_strided_slice %137 {offsets = [40, 0], sizes = [8, 512], strides = [1, 1]} : vector<64x512xf32> to vector<8x512xf32>
    %165 = arith.select %156, %163, %164 : vector<8x512xi1>, vector<8x512xf32>
    %166 = vector.extract_strided_slice %137 {offsets = [24, 0], sizes = [8, 512], strides = [1, 1]} : vector<64x512xf32> to vector<8x512xf32>
    %167 = vector.extract_strided_slice %137 {offsets = [32, 0], sizes = [8, 512], strides = [1, 1]} : vector<64x512xf32> to vector<8x512xf32>
    %168 = arith.select %156, %166, %167 : vector<8x512xi1>, vector<8x512xf32>
    %169 = vector.extract_strided_slice %137 {offsets = [32, 0], sizes = [8, 512], strides = [1, 1]} : vector<64x512xf32> to vector<8x512xf32>
    %170 = vector.extract_strided_slice %137 {offsets = [24, 0], sizes = [8, 512], strides = [1, 1]} : vector<64x512xf32> to vector<8x512xf32>
    %171 = arith.select %156, %169, %170 : vector<8x512xi1>, vector<8x512xf32>
    %172 = vector.extract_strided_slice %137 {offsets = [40, 0], sizes = [8, 512], strides = [1, 1]} : vector<64x512xf32> to vector<8x512xf32>
    %173 = vector.extract_strided_slice %137 {offsets = [16, 0], sizes = [8, 512], strides = [1, 1]} : vector<64x512xf32> to vector<8x512xf32>
    %174 = arith.select %156, %172, %173 : vector<8x512xi1>, vector<8x512xf32>
    %175 = vector.extract_strided_slice %137 {offsets = [48, 0], sizes = [8, 512], strides = [1, 1]} : vector<64x512xf32> to vector<8x512xf32>
    %176 = vector.extract_strided_slice %137 {offsets = [8, 0], sizes = [8, 512], strides = [1, 1]} : vector<64x512xf32> to vector<8x512xf32>
    %177 = arith.select %156, %175, %176 : vector<8x512xi1>, vector<8x512xf32>
    %178 = vector.extract_strided_slice %137 {offsets = [56, 0], sizes = [8, 512], strides = [1, 1]} : vector<64x512xf32> to vector<8x512xf32>
    %179 = vector.extract_strided_slice %137 {offsets = [0, 0], sizes = [8, 512], strides = [1, 1]} : vector<64x512xf32> to vector<8x512xf32>
    %180 = arith.select %156, %178, %179 : vector<8x512xi1>, vector<8x512xf32>
    %c0_15 = arith.constant 0 : index
    %c0_16 = arith.constant 0 : index
    %181 = vector.load %arg5[%c0_15, %c0_16] : memref<128x512xbf16, #tpu.memory_space<vmem>>, vector<128x512xbf16>
    %cst_17 = arith.constant 0.000000e+00 : f32
    %182 = vector.broadcast %cst_17 : f32 to vector<8x128xf32>
    %cst_18 = arith.constant 0.000000e+00 : f32
    %183 = vector.broadcast %cst_18 : f32 to vector<8x128xf32>
    %184 = arith.truncf %182 : vector<8x128xf32> to vector<8x128xbf16>
    %cst_19 = arith.constant dense<0.000000e+00> : vector<8x512xf32>
    %185 = tpu.matmul %184, %181, %cst_19 {dimension_numbers = #tpu.dot_dimension_numbers<[1], [0], [0], [1], [0, 0, 1, 1], [], []>} : vector<8x128xbf16>, vector<128x512xbf16>, vector<8x512xf32> -> vector<8x512xf32>
    %186 = arith.addf %159, %185 : vector<8x512xf32>
    %187 = vector.extract_strided_slice %186 {offsets = [0, 0], sizes = [8, 384], strides = [1, 1]} : vector<8x512xf32> to vector<8x384xf32>
    %188 = arith.negf %187 : vector<8x384xf32>
    %189 = math.exp %188 : vector<8x384xf32>
    %cst_20 = arith.constant 1.000000e+00 : f32
    %190 = vector.broadcast %cst_20 : f32 to vector<8x384xf32>
    %191 = arith.addf %190, %189 : vector<8x384xf32>
    %192 = arith.divf %190, %191 : vector<8x384xf32>
    %193 = vector.extract_strided_slice %186 {offsets = [0, 384], sizes = [8, 128], strides = [1, 1]} : vector<8x512xf32> to vector<8x128xf32>
    %194 = math.tanh %193 : vector<8x128xf32>
    %195 = vector.extract_strided_slice %192 {offsets = [0, 128], sizes = [8, 128], strides = [1, 1]} : vector<8x384xf32> to vector<8x128xf32>
    %196 = arith.mulf %195, %183 : vector<8x128xf32>
    %197 = vector.extract_strided_slice %192 {offsets = [0, 0], sizes = [8, 128], strides = [1, 1]} : vector<8x384xf32> to vector<8x128xf32>
    %198 = arith.mulf %197, %194 : vector<8x128xf32>
    %199 = arith.addf %196, %198 : vector<8x128xf32>
    %200 = vector.extract_strided_slice %192 {offsets = [0, 256], sizes = [8, 128], strides = [1, 1]} : vector<8x384xf32> to vector<8x128xf32>
    %201 = math.tanh %199 : vector<8x128xf32>
    %202 = arith.mulf %200, %201 : vector<8x128xf32>
    %203 = arith.truncf %202 : vector<8x128xf32> to vector<8x128xbf16>
    %cst_21 = arith.constant dense<0.000000e+00> : vector<8x512xf32>
    %204 = tpu.matmul %203, %181, %cst_21 {dimension_numbers = #tpu.dot_dimension_numbers<[1], [0], [0], [1], [0, 0, 1, 1], [], []>} : vector<8x128xbf16>, vector<128x512xbf16>, vector<8x512xf32> -> vector<8x512xf32>
    %205 = arith.addf %162, %204 : vector<8x512xf32>
    %206 = vector.extract_strided_slice %205 {offsets = [0, 0], sizes = [8, 384], strides = [1, 1]} : vector<8x512xf32> to vector<8x384xf32>
    %207 = arith.negf %206 : vector<8x384xf32>
    %208 = math.exp %207 : vector<8x384xf32>
    %cst_22 = arith.constant 1.000000e+00 : f32
    %209 = vector.broadcast %cst_22 : f32 to vector<8x384xf32>
    %210 = arith.addf %209, %208 : vector<8x384xf32>
    %211 = arith.divf %209, %210 : vector<8x384xf32>
    %212 = vector.extract_strided_slice %205 {offsets = [0, 384], sizes = [8, 128], strides = [1, 1]} : vector<8x512xf32> to vector<8x128xf32>
    %213 = math.tanh %212 : vector<8x128xf32>
    %214 = vector.extract_strided_slice %211 {offsets = [0, 128], sizes = [8, 128], strides = [1, 1]} : vector<8x384xf32> to vector<8x128xf32>
    %215 = arith.mulf %214, %199 : vector<8x128xf32>
    %216 = vector.extract_strided_slice %211 {offsets = [0, 0], sizes = [8, 128], strides = [1, 1]} : vector<8x384xf32> to vector<8x128xf32>
    %217 = arith.mulf %216, %213 : vector<8x128xf32>
    %218 = arith.addf %215, %217 : vector<8x128xf32>
    %219 = vector.extract_strided_slice %211 {offsets = [0, 256], sizes = [8, 128], strides = [1, 1]} : vector<8x384xf32> to vector<8x128xf32>
    %220 = math.tanh %218 : vector<8x128xf32>
    %221 = arith.mulf %219, %220 : vector<8x128xf32>
    %222 = arith.truncf %221 : vector<8x128xf32> to vector<8x128xbf16>
    %cst_23 = arith.constant dense<0.000000e+00> : vector<8x512xf32>
    %223 = tpu.matmul %222, %181, %cst_23 {dimension_numbers = #tpu.dot_dimension_numbers<[1], [0], [0], [1], [0, 0, 1, 1], [], []>} : vector<8x128xbf16>, vector<128x512xbf16>, vector<8x512xf32> -> vector<8x512xf32>
    %224 = arith.addf %165, %223 : vector<8x512xf32>
    %225 = vector.extract_strided_slice %224 {offsets = [0, 0], sizes = [8, 384], strides = [1, 1]} : vector<8x512xf32> to vector<8x384xf32>
    %226 = arith.negf %225 : vector<8x384xf32>
    %227 = math.exp %226 : vector<8x384xf32>
    %cst_24 = arith.constant 1.000000e+00 : f32
    %228 = vector.broadcast %cst_24 : f32 to vector<8x384xf32>
    %229 = arith.addf %228, %227 : vector<8x384xf32>
    %230 = arith.divf %228, %229 : vector<8x384xf32>
    %231 = vector.extract_strided_slice %224 {offsets = [0, 384], sizes = [8, 128], strides = [1, 1]} : vector<8x512xf32> to vector<8x128xf32>
    %232 = math.tanh %231 : vector<8x128xf32>
    %233 = vector.extract_strided_slice %230 {offsets = [0, 128], sizes = [8, 128], strides = [1, 1]} : vector<8x384xf32> to vector<8x128xf32>
    %234 = arith.mulf %233, %218 : vector<8x128xf32>
    %235 = vector.extract_strided_slice %230 {offsets = [0, 0], sizes = [8, 128], strides = [1, 1]} : vector<8x384xf32> to vector<8x128xf32>
    %236 = arith.mulf %235, %232 : vector<8x128xf32>
    %237 = arith.addf %234, %236 : vector<8x128xf32>
    %238 = vector.extract_strided_slice %230 {offsets = [0, 256], sizes = [8, 128], strides = [1, 1]} : vector<8x384xf32> to vector<8x128xf32>
    %239 = math.tanh %237 : vector<8x128xf32>
    %240 = arith.mulf %238, %239 : vector<8x128xf32>
    %241 = arith.truncf %240 : vector<8x128xf32> to vector<8x128xbf16>
    %cst_25 = arith.constant dense<0.000000e+00> : vector<8x512xf32>
    %242 = tpu.matmul %241, %181, %cst_25 {dimension_numbers = #tpu.dot_dimension_numbers<[1], [0], [0], [1], [0, 0, 1, 1], [], []>} : vector<8x128xbf16>, vector<128x512xbf16>, vector<8x512xf32> -> vector<8x512xf32>
    %243 = arith.addf %168, %242 : vector<8x512xf32>
    %244 = vector.extract_strided_slice %243 {offsets = [0, 0], sizes = [8, 384], strides = [1, 1]} : vector<8x512xf32> to vector<8x384xf32>
    %245 = arith.negf %244 : vector<8x384xf32>
    %246 = math.exp %245 : vector<8x384xf32>
    %cst_26 = arith.constant 1.000000e+00 : f32
    %247 = vector.broadcast %cst_26 : f32 to vector<8x384xf32>
    %248 = arith.addf %247, %246 : vector<8x384xf32>
    %249 = arith.divf %247, %248 : vector<8x384xf32>
    %250 = vector.extract_strided_slice %243 {offsets = [0, 384], sizes = [8, 128], strides = [1, 1]} : vector<8x512xf32> to vector<8x128xf32>
    %251 = math.tanh %250 : vector<8x128xf32>
    %252 = vector.extract_strided_slice %249 {offsets = [0, 128], sizes = [8, 128], strides = [1, 1]} : vector<8x384xf32> to vector<8x128xf32>
    %253 = arith.mulf %252, %237 : vector<8x128xf32>
    %254 = vector.extract_strided_slice %249 {offsets = [0, 0], sizes = [8, 128], strides = [1, 1]} : vector<8x384xf32> to vector<8x128xf32>
    %255 = arith.mulf %254, %251 : vector<8x128xf32>
    %256 = arith.addf %253, %255 : vector<8x128xf32>
    %257 = vector.extract_strided_slice %249 {offsets = [0, 256], sizes = [8, 128], strides = [1, 1]} : vector<8x384xf32> to vector<8x128xf32>
    %258 = math.tanh %256 : vector<8x128xf32>
    %259 = arith.mulf %257, %258 : vector<8x128xf32>
    %260 = arith.truncf %259 : vector<8x128xf32> to vector<8x128xbf16>
    %cst_27 = arith.constant dense<0.000000e+00> : vector<8x512xf32>
    %261 = tpu.matmul %260, %181, %cst_27 {dimension_numbers = #tpu.dot_dimension_numbers<[1], [0], [0], [1], [0, 0, 1, 1], [], []>} : vector<8x128xbf16>, vector<128x512xbf16>, vector<8x512xf32> -> vector<8x512xf32>
    %262 = arith.addf %171, %261 : vector<8x512xf32>
    %263 = vector.extract_strided_slice %262 {offsets = [0, 0], sizes = [8, 384], strides = [1, 1]} : vector<8x512xf32> to vector<8x384xf32>
    %264 = arith.negf %263 : vector<8x384xf32>
    %265 = math.exp %264 : vector<8x384xf32>
    %cst_28 = arith.constant 1.000000e+00 : f32
    %266 = vector.broadcast %cst_28 : f32 to vector<8x384xf32>
    %267 = arith.addf %266, %265 : vector<8x384xf32>
    %268 = arith.divf %266, %267 : vector<8x384xf32>
    %269 = vector.extract_strided_slice %262 {offsets = [0, 384], sizes = [8, 128], strides = [1, 1]} : vector<8x512xf32> to vector<8x128xf32>
    %270 = math.tanh %269 : vector<8x128xf32>
    %271 = vector.extract_strided_slice %268 {offsets = [0, 128], sizes = [8, 128], strides = [1, 1]} : vector<8x384xf32> to vector<8x128xf32>
    %272 = arith.mulf %271, %256 : vector<8x128xf32>
    %273 = vector.extract_strided_slice %268 {offsets = [0, 0], sizes = [8, 128], strides = [1, 1]} : vector<8x384xf32> to vector<8x128xf32>
    %274 = arith.mulf %273, %270 : vector<8x128xf32>
    %275 = arith.addf %272, %274 : vector<8x128xf32>
    %276 = vector.extract_strided_slice %268 {offsets = [0, 256], sizes = [8, 128], strides = [1, 1]} : vector<8x384xf32> to vector<8x128xf32>
    %277 = math.tanh %275 : vector<8x128xf32>
    %278 = arith.mulf %276, %277 : vector<8x128xf32>
    %279 = arith.truncf %278 : vector<8x128xf32> to vector<8x128xbf16>
    %cst_29 = arith.constant dense<0.000000e+00> : vector<8x512xf32>
    %280 = tpu.matmul %279, %181, %cst_29 {dimension_numbers = #tpu.dot_dimension_numbers<[1], [0], [0], [1], [0, 0, 1, 1], [], []>} : vector<8x128xbf16>, vector<128x512xbf16>, vector<8x512xf32> -> vector<8x512xf32>
    %281 = arith.addf %174, %280 : vector<8x512xf32>
    %282 = vector.extract_strided_slice %281 {offsets = [0, 0], sizes = [8, 384], strides = [1, 1]} : vector<8x512xf32> to vector<8x384xf32>
    %283 = arith.negf %282 : vector<8x384xf32>
    %284 = math.exp %283 : vector<8x384xf32>
    %cst_30 = arith.constant 1.000000e+00 : f32
    %285 = vector.broadcast %cst_30 : f32 to vector<8x384xf32>
    %286 = arith.addf %285, %284 : vector<8x384xf32>
    %287 = arith.divf %285, %286 : vector<8x384xf32>
    %288 = vector.extract_strided_slice %281 {offsets = [0, 384], sizes = [8, 128], strides = [1, 1]} : vector<8x512xf32> to vector<8x128xf32>
    %289 = math.tanh %288 : vector<8x128xf32>
    %290 = vector.extract_strided_slice %287 {offsets = [0, 128], sizes = [8, 128], strides = [1, 1]} : vector<8x384xf32> to vector<8x128xf32>
    %291 = arith.mulf %290, %275 : vector<8x128xf32>
    %292 = vector.extract_strided_slice %287 {offsets = [0, 0], sizes = [8, 128], strides = [1, 1]} : vector<8x384xf32> to vector<8x128xf32>
    %293 = arith.mulf %292, %289 : vector<8x128xf32>
    %294 = arith.addf %291, %293 : vector<8x128xf32>
    %295 = vector.extract_strided_slice %287 {offsets = [0, 256], sizes = [8, 128], strides = [1, 1]} : vector<8x384xf32> to vector<8x128xf32>
    %296 = math.tanh %294 : vector<8x128xf32>
    %297 = arith.mulf %295, %296 : vector<8x128xf32>
    %298 = arith.truncf %297 : vector<8x128xf32> to vector<8x128xbf16>
    %cst_31 = arith.constant dense<0.000000e+00> : vector<8x512xf32>
    %299 = tpu.matmul %298, %181, %cst_31 {dimension_numbers = #tpu.dot_dimension_numbers<[1], [0], [0], [1], [0, 0, 1, 1], [], []>} : vector<8x128xbf16>, vector<128x512xbf16>, vector<8x512xf32> -> vector<8x512xf32>
    %300 = arith.addf %177, %299 : vector<8x512xf32>
    %301 = vector.extract_strided_slice %300 {offsets = [0, 0], sizes = [8, 384], strides = [1, 1]} : vector<8x512xf32> to vector<8x384xf32>
    %302 = arith.negf %301 : vector<8x384xf32>
    %303 = math.exp %302 : vector<8x384xf32>
    %cst_32 = arith.constant 1.000000e+00 : f32
    %304 = vector.broadcast %cst_32 : f32 to vector<8x384xf32>
    %305 = arith.addf %304, %303 : vector<8x384xf32>
    %306 = arith.divf %304, %305 : vector<8x384xf32>
    %307 = vector.extract_strided_slice %300 {offsets = [0, 384], sizes = [8, 128], strides = [1, 1]} : vector<8x512xf32> to vector<8x128xf32>
    %308 = math.tanh %307 : vector<8x128xf32>
    %309 = vector.extract_strided_slice %306 {offsets = [0, 128], sizes = [8, 128], strides = [1, 1]} : vector<8x384xf32> to vector<8x128xf32>
    %310 = arith.mulf %309, %294 : vector<8x128xf32>
    %311 = vector.extract_strided_slice %306 {offsets = [0, 0], sizes = [8, 128], strides = [1, 1]} : vector<8x384xf32> to vector<8x128xf32>
    %312 = arith.mulf %311, %308 : vector<8x128xf32>
    %313 = arith.addf %310, %312 : vector<8x128xf32>
    %314 = vector.extract_strided_slice %306 {offsets = [0, 256], sizes = [8, 128], strides = [1, 1]} : vector<8x384xf32> to vector<8x128xf32>
    %315 = math.tanh %313 : vector<8x128xf32>
    %316 = arith.mulf %314, %315 : vector<8x128xf32>
    %317 = arith.truncf %316 : vector<8x128xf32> to vector<8x128xbf16>
    %cst_33 = arith.constant dense<0.000000e+00> : vector<8x512xf32>
    %318 = tpu.matmul %317, %181, %cst_33 {dimension_numbers = #tpu.dot_dimension_numbers<[1], [0], [0], [1], [0, 0, 1, 1], [], []>} : vector<8x128xbf16>, vector<128x512xbf16>, vector<8x512xf32> -> vector<8x512xf32>
    %319 = arith.addf %180, %318 : vector<8x512xf32>
    %320 = vector.extract_strided_slice %319 {offsets = [0, 0], sizes = [8, 384], strides = [1, 1]} : vector<8x512xf32> to vector<8x384xf32>
    %321 = arith.negf %320 : vector<8x384xf32>
    %322 = math.exp %321 : vector<8x384xf32>
    %cst_34 = arith.constant 1.000000e+00 : f32
    %323 = vector.broadcast %cst_34 : f32 to vector<8x384xf32>
    %324 = arith.addf %323, %322 : vector<8x384xf32>
    %325 = arith.divf %323, %324 : vector<8x384xf32>
    %326 = vector.extract_strided_slice %319 {offsets = [0, 384], sizes = [8, 128], strides = [1, 1]} : vector<8x512xf32> to vector<8x128xf32>
    %327 = math.tanh %326 : vector<8x128xf32>
    %328 = vector.extract_strided_slice %325 {offsets = [0, 128], sizes = [8, 128], strides = [1, 1]} : vector<8x384xf32> to vector<8x128xf32>
    %329 = arith.mulf %328, %313 : vector<8x128xf32>
    %330 = vector.extract_strided_slice %325 {offsets = [0, 0], sizes = [8, 128], strides = [1, 1]} : vector<8x384xf32> to vector<8x128xf32>
    %331 = arith.mulf %330, %327 : vector<8x128xf32>
    %332 = arith.addf %329, %331 : vector<8x128xf32>
    %333 = vector.extract_strided_slice %325 {offsets = [0, 256], sizes = [8, 128], strides = [1, 1]} : vector<8x384xf32> to vector<8x128xf32>
    %334 = math.tanh %332 : vector<8x128xf32>
    %335 = arith.mulf %333, %334 : vector<8x128xf32>
    %336 = vector.extract_strided_slice %202 {offsets = [0, 0], sizes = [8, 64], strides = [1, 1]} : vector<8x128xf32> to vector<8x64xf32>
    %337 = vector.extract_strided_slice %335 {offsets = [0, 64], sizes = [8, 64], strides = [1, 1]} : vector<8x128xf32> to vector<8x64xf32>
    %338 = arith.addf %336, %337 : vector<8x64xf32>
    %339 = vector.extract_strided_slice %221 {offsets = [0, 0], sizes = [8, 64], strides = [1, 1]} : vector<8x128xf32> to vector<8x64xf32>
    %340 = vector.extract_strided_slice %316 {offsets = [0, 64], sizes = [8, 64], strides = [1, 1]} : vector<8x128xf32> to vector<8x64xf32>
    %341 = arith.addf %339, %340 : vector<8x64xf32>
    %342 = vector.extract_strided_slice %240 {offsets = [0, 0], sizes = [8, 64], strides = [1, 1]} : vector<8x128xf32> to vector<8x64xf32>
    %343 = vector.extract_strided_slice %297 {offsets = [0, 64], sizes = [8, 64], strides = [1, 1]} : vector<8x128xf32> to vector<8x64xf32>
    %344 = arith.addf %342, %343 : vector<8x64xf32>
    %345 = vector.extract_strided_slice %259 {offsets = [0, 0], sizes = [8, 64], strides = [1, 1]} : vector<8x128xf32> to vector<8x64xf32>
    %346 = vector.extract_strided_slice %278 {offsets = [0, 64], sizes = [8, 64], strides = [1, 1]} : vector<8x128xf32> to vector<8x64xf32>
    %347 = arith.addf %345, %346 : vector<8x64xf32>
    %348 = vector.extract_strided_slice %278 {offsets = [0, 0], sizes = [8, 64], strides = [1, 1]} : vector<8x128xf32> to vector<8x64xf32>
    %349 = vector.extract_strided_slice %259 {offsets = [0, 64], sizes = [8, 64], strides = [1, 1]} : vector<8x128xf32> to vector<8x64xf32>
    %350 = arith.addf %348, %349 : vector<8x64xf32>
    %351 = vector.extract_strided_slice %297 {offsets = [0, 0], sizes = [8, 64], strides = [1, 1]} : vector<8x128xf32> to vector<8x64xf32>
    %352 = vector.extract_strided_slice %240 {offsets = [0, 64], sizes = [8, 64], strides = [1, 1]} : vector<8x128xf32> to vector<8x64xf32>
    %353 = arith.addf %351, %352 : vector<8x64xf32>
    %354 = vector.extract_strided_slice %316 {offsets = [0, 0], sizes = [8, 64], strides = [1, 1]} : vector<8x128xf32> to vector<8x64xf32>
    %355 = vector.extract_strided_slice %221 {offsets = [0, 64], sizes = [8, 64], strides = [1, 1]} : vector<8x128xf32> to vector<8x64xf32>
    %356 = arith.addf %354, %355 : vector<8x64xf32>
    %357 = vector.extract_strided_slice %335 {offsets = [0, 0], sizes = [8, 64], strides = [1, 1]} : vector<8x128xf32> to vector<8x64xf32>
    %358 = vector.extract_strided_slice %202 {offsets = [0, 64], sizes = [8, 64], strides = [1, 1]} : vector<8x128xf32> to vector<8x64xf32>
    %359 = arith.addf %357, %358 : vector<8x64xf32>
    %360 = tpu.concatenate %338, %341, %344, %347, %350, %353, %356, %359 in 0 : vector<8x64xf32>, vector<8x64xf32>, vector<8x64xf32>, vector<8x64xf32>, vector<8x64xf32>, vector<8x64xf32>, vector<8x64xf32>, vector<8x64xf32> -> vector<64x64xf32>
    %c0_35 = arith.constant 0 : index
    %c0_36 = arith.constant 0 : index
    %361 = vector.load %arg6[%c0_35, %c0_36] : memref<64x8xf32, #tpu.memory_space<vmem>>, vector<64x8xf32>
    %cst_37 = arith.constant dense<0.000000e+00> : vector<64x8xf32>
    %362 = tpu.matmul %360, %361, %cst_37 {dimension_numbers = #tpu.dot_dimension_numbers<[1], [0], [0], [1], [0, 0, 1, 1], [], []>} : vector<64x64xf32>, vector<64x8xf32>, vector<64x8xf32> -> vector<64x8xf32>
    %c0_38 = arith.constant 0 : index
    %c0_39 = arith.constant 0 : index
    %363 = vector.load %arg7[%c0_38, %c0_39] : memref<1x8xf32, #tpu.memory_space<vmem>>, vector<1x8xf32>
    %364 = vector.broadcast %363 : vector<1x8xf32> to vector<64x8xf32>
    %365 = arith.addf %362, %364 : vector<64x8xf32>
    %366 = vector.extract_strided_slice %365 {offsets = [0, 0], sizes = [8, 4], strides = [1, 1]} : vector<64x8xf32> to vector<8x4xf32>
    %367 = vector.extract_strided_slice %365 {offsets = [56, 4], sizes = [8, 4], strides = [1, 1]} : vector<64x8xf32> to vector<8x4xf32>
    %368 = tpu.concatenate %366, %367 in 0 : vector<8x4xf32>, vector<8x4xf32> -> vector<16x4xf32>
    %369 = vector.extract_strided_slice %365 {offsets = [8, 0], sizes = [8, 4], strides = [1, 1]} : vector<64x8xf32> to vector<8x4xf32>
    %370 = vector.extract_strided_slice %365 {offsets = [48, 4], sizes = [8, 4], strides = [1, 1]} : vector<64x8xf32> to vector<8x4xf32>
    %371 = tpu.concatenate %369, %370 in 0 : vector<8x4xf32>, vector<8x4xf32> -> vector<16x4xf32>
    %372 = vector.extract_strided_slice %365 {offsets = [16, 0], sizes = [8, 4], strides = [1, 1]} : vector<64x8xf32> to vector<8x4xf32>
    %373 = vector.extract_strided_slice %365 {offsets = [40, 4], sizes = [8, 4], strides = [1, 1]} : vector<64x8xf32> to vector<8x4xf32>
    %374 = tpu.concatenate %372, %373 in 0 : vector<8x4xf32>, vector<8x4xf32> -> vector<16x4xf32>
    %375 = vector.extract_strided_slice %365 {offsets = [24, 0], sizes = [8, 4], strides = [1, 1]} : vector<64x8xf32> to vector<8x4xf32>
    %376 = vector.extract_strided_slice %365 {offsets = [32, 4], sizes = [8, 4], strides = [1, 1]} : vector<64x8xf32> to vector<8x4xf32>
    %377 = tpu.concatenate %375, %376 in 0 : vector<8x4xf32>, vector<8x4xf32> -> vector<16x4xf32>
    %378 = vector.extract_strided_slice %365 {offsets = [32, 0], sizes = [8, 4], strides = [1, 1]} : vector<64x8xf32> to vector<8x4xf32>
    %379 = vector.extract_strided_slice %365 {offsets = [24, 4], sizes = [8, 4], strides = [1, 1]} : vector<64x8xf32> to vector<8x4xf32>
    %380 = tpu.concatenate %378, %379 in 0 : vector<8x4xf32>, vector<8x4xf32> -> vector<16x4xf32>
    %381 = vector.extract_strided_slice %365 {offsets = [40, 0], sizes = [8, 4], strides = [1, 1]} : vector<64x8xf32> to vector<8x4xf32>
    %382 = vector.extract_strided_slice %365 {offsets = [16, 4], sizes = [8, 4], strides = [1, 1]} : vector<64x8xf32> to vector<8x4xf32>
    %383 = tpu.concatenate %381, %382 in 0 : vector<8x4xf32>, vector<8x4xf32> -> vector<16x4xf32>
    %384 = vector.extract_strided_slice %365 {offsets = [48, 0], sizes = [8, 4], strides = [1, 1]} : vector<64x8xf32> to vector<8x4xf32>
    %385 = vector.extract_strided_slice %365 {offsets = [8, 4], sizes = [8, 4], strides = [1, 1]} : vector<64x8xf32> to vector<8x4xf32>
    %386 = tpu.concatenate %384, %385 in 0 : vector<8x4xf32>, vector<8x4xf32> -> vector<16x4xf32>
    %387 = vector.extract_strided_slice %365 {offsets = [56, 0], sizes = [8, 4], strides = [1, 1]} : vector<64x8xf32> to vector<8x4xf32>
    %388 = vector.extract_strided_slice %365 {offsets = [0, 4], sizes = [8, 4], strides = [1, 1]} : vector<64x8xf32> to vector<8x4xf32>
    %389 = tpu.concatenate %387, %388 in 0 : vector<8x4xf32>, vector<8x4xf32> -> vector<16x4xf32>
    %c0_40 = arith.constant 0 : index
    %c0_41 = arith.constant 0 : index
    %390 = vector.load %arg8[%c0_40, %c0_41] : memref<2x4xf32, #tpu.memory_space<vmem>>, vector<2x4xf32>
    %391 = vector.extract_strided_slice %390 {offsets = [0, 0], sizes = [1, 4], strides = [1, 1]} : vector<2x4xf32> to vector<1x4xf32>
    %392 = vector.shape_cast %391 : vector<1x4xf32> to vector<1x4xf32>
    %393 = vector.broadcast %392 : vector<1x4xf32> to vector<8x4xf32>
    %394 = vector.extract_strided_slice %390 {offsets = [1, 0], sizes = [1, 4], strides = [1, 1]} : vector<2x4xf32> to vector<1x4xf32>
    %395 = vector.shape_cast %394 : vector<1x4xf32> to vector<1x4xf32>
    %396 = vector.broadcast %395 : vector<1x4xf32> to vector<8x4xf32>
    %397 = tpu.concatenate %393, %396 in 0 : vector<8x4xf32>, vector<8x4xf32> -> vector<16x4xf32>
    %cst_42 = arith.constant 0.000000e+00 : f32
    %398 = vector.broadcast %cst_42 : f32 to vector<16x1xf32>
    %cst_43 = arith.constant 0.000000e+00 : f32
    %399 = vector.broadcast %cst_43 : f32 to vector<16x1xf32>
    %400 = vector.broadcast %398 : vector<16x1xf32> to vector<16x4xf32>
    %401 = arith.mulf %400, %397 : vector<16x4xf32>
    %402 = arith.addf %368, %401 : vector<16x4xf32>
    %403 = vector.extract_strided_slice %402 {offsets = [0, 0], sizes = [16, 3], strides = [1, 1]} : vector<16x4xf32> to vector<16x3xf32>
    %404 = arith.negf %403 : vector<16x3xf32>
    %405 = math.exp %404 : vector<16x3xf32>
    %cst_44 = arith.constant 1.000000e+00 : f32
    %406 = vector.broadcast %cst_44 : f32 to vector<16x3xf32>
    %407 = arith.addf %406, %405 : vector<16x3xf32>
    %408 = arith.divf %406, %407 : vector<16x3xf32>
    %409 = vector.extract_strided_slice %402 {offsets = [0, 3], sizes = [16, 1], strides = [1, 1]} : vector<16x4xf32> to vector<16x1xf32>
    %410 = math.tanh %409 : vector<16x1xf32>
    %411 = vector.extract_strided_slice %408 {offsets = [0, 1], sizes = [16, 1], strides = [1, 1]} : vector<16x3xf32> to vector<16x1xf32>
    %412 = arith.mulf %411, %399 : vector<16x1xf32>
    %413 = vector.extract_strided_slice %408 {offsets = [0, 0], sizes = [16, 1], strides = [1, 1]} : vector<16x3xf32> to vector<16x1xf32>
    %414 = arith.mulf %413, %410 : vector<16x1xf32>
    %415 = arith.addf %412, %414 : vector<16x1xf32>
    %416 = vector.extract_strided_slice %408 {offsets = [0, 2], sizes = [16, 1], strides = [1, 1]} : vector<16x3xf32> to vector<16x1xf32>
    %417 = math.tanh %415 : vector<16x1xf32>
    %418 = arith.mulf %416, %417 : vector<16x1xf32>
    %419 = vector.broadcast %418 : vector<16x1xf32> to vector<16x4xf32>
    %420 = arith.mulf %419, %397 : vector<16x4xf32>
    %421 = arith.addf %371, %420 : vector<16x4xf32>
    %422 = vector.extract_strided_slice %421 {offsets = [0, 0], sizes = [16, 3], strides = [1, 1]} : vector<16x4xf32> to vector<16x3xf32>
    %423 = arith.negf %422 : vector<16x3xf32>
    %424 = math.exp %423 : vector<16x3xf32>
    %cst_45 = arith.constant 1.000000e+00 : f32
    %425 = vector.broadcast %cst_45 : f32 to vector<16x3xf32>
    %426 = arith.addf %425, %424 : vector<16x3xf32>
    %427 = arith.divf %425, %426 : vector<16x3xf32>
    %428 = vector.extract_strided_slice %421 {offsets = [0, 3], sizes = [16, 1], strides = [1, 1]} : vector<16x4xf32> to vector<16x1xf32>
    %429 = math.tanh %428 : vector<16x1xf32>
    %430 = vector.extract_strided_slice %427 {offsets = [0, 1], sizes = [16, 1], strides = [1, 1]} : vector<16x3xf32> to vector<16x1xf32>
    %431 = arith.mulf %430, %415 : vector<16x1xf32>
    %432 = vector.extract_strided_slice %427 {offsets = [0, 0], sizes = [16, 1], strides = [1, 1]} : vector<16x3xf32> to vector<16x1xf32>
    %433 = arith.mulf %432, %429 : vector<16x1xf32>
    %434 = arith.addf %431, %433 : vector<16x1xf32>
    %435 = vector.extract_strided_slice %427 {offsets = [0, 2], sizes = [16, 1], strides = [1, 1]} : vector<16x3xf32> to vector<16x1xf32>
    %436 = math.tanh %434 : vector<16x1xf32>
    %437 = arith.mulf %435, %436 : vector<16x1xf32>
    %438 = vector.broadcast %437 : vector<16x1xf32> to vector<16x4xf32>
    %439 = arith.mulf %438, %397 : vector<16x4xf32>
    %440 = arith.addf %374, %439 : vector<16x4xf32>
    %441 = vector.extract_strided_slice %440 {offsets = [0, 0], sizes = [16, 3], strides = [1, 1]} : vector<16x4xf32> to vector<16x3xf32>
    %442 = arith.negf %441 : vector<16x3xf32>
    %443 = math.exp %442 : vector<16x3xf32>
    %cst_46 = arith.constant 1.000000e+00 : f32
    %444 = vector.broadcast %cst_46 : f32 to vector<16x3xf32>
    %445 = arith.addf %444, %443 : vector<16x3xf32>
    %446 = arith.divf %444, %445 : vector<16x3xf32>
    %447 = vector.extract_strided_slice %440 {offsets = [0, 3], sizes = [16, 1], strides = [1, 1]} : vector<16x4xf32> to vector<16x1xf32>
    %448 = math.tanh %447 : vector<16x1xf32>
    %449 = vector.extract_strided_slice %446 {offsets = [0, 1], sizes = [16, 1], strides = [1, 1]} : vector<16x3xf32> to vector<16x1xf32>
    %450 = arith.mulf %449, %434 : vector<16x1xf32>
    %451 = vector.extract_strided_slice %446 {offsets = [0, 0], sizes = [16, 1], strides = [1, 1]} : vector<16x3xf32> to vector<16x1xf32>
    %452 = arith.mulf %451, %448 : vector<16x1xf32>
    %453 = arith.addf %450, %452 : vector<16x1xf32>
    %454 = vector.extract_strided_slice %446 {offsets = [0, 2], sizes = [16, 1], strides = [1, 1]} : vector<16x3xf32> to vector<16x1xf32>
    %455 = math.tanh %453 : vector<16x1xf32>
    %456 = arith.mulf %454, %455 : vector<16x1xf32>
    %457 = vector.broadcast %456 : vector<16x1xf32> to vector<16x4xf32>
    %458 = arith.mulf %457, %397 : vector<16x4xf32>
    %459 = arith.addf %377, %458 : vector<16x4xf32>
    %460 = vector.extract_strided_slice %459 {offsets = [0, 0], sizes = [16, 3], strides = [1, 1]} : vector<16x4xf32> to vector<16x3xf32>
    %461 = arith.negf %460 : vector<16x3xf32>
    %462 = math.exp %461 : vector<16x3xf32>
    %cst_47 = arith.constant 1.000000e+00 : f32
    %463 = vector.broadcast %cst_47 : f32 to vector<16x3xf32>
    %464 = arith.addf %463, %462 : vector<16x3xf32>
    %465 = arith.divf %463, %464 : vector<16x3xf32>
    %466 = vector.extract_strided_slice %459 {offsets = [0, 3], sizes = [16, 1], strides = [1, 1]} : vector<16x4xf32> to vector<16x1xf32>
    %467 = math.tanh %466 : vector<16x1xf32>
    %468 = vector.extract_strided_slice %465 {offsets = [0, 1], sizes = [16, 1], strides = [1, 1]} : vector<16x3xf32> to vector<16x1xf32>
    %469 = arith.mulf %468, %453 : vector<16x1xf32>
    %470 = vector.extract_strided_slice %465 {offsets = [0, 0], sizes = [16, 1], strides = [1, 1]} : vector<16x3xf32> to vector<16x1xf32>
    %471 = arith.mulf %470, %467 : vector<16x1xf32>
    %472 = arith.addf %469, %471 : vector<16x1xf32>
    %473 = vector.extract_strided_slice %465 {offsets = [0, 2], sizes = [16, 1], strides = [1, 1]} : vector<16x3xf32> to vector<16x1xf32>
    %474 = math.tanh %472 : vector<16x1xf32>
    %475 = arith.mulf %473, %474 : vector<16x1xf32>
    %476 = vector.broadcast %475 : vector<16x1xf32> to vector<16x4xf32>
    %477 = arith.mulf %476, %397 : vector<16x4xf32>
    %478 = arith.addf %380, %477 : vector<16x4xf32>
    %479 = vector.extract_strided_slice %478 {offsets = [0, 0], sizes = [16, 3], strides = [1, 1]} : vector<16x4xf32> to vector<16x3xf32>
    %480 = arith.negf %479 : vector<16x3xf32>
    %481 = math.exp %480 : vector<16x3xf32>
    %cst_48 = arith.constant 1.000000e+00 : f32
    %482 = vector.broadcast %cst_48 : f32 to vector<16x3xf32>
    %483 = arith.addf %482, %481 : vector<16x3xf32>
    %484 = arith.divf %482, %483 : vector<16x3xf32>
    %485 = vector.extract_strided_slice %478 {offsets = [0, 3], sizes = [16, 1], strides = [1, 1]} : vector<16x4xf32> to vector<16x1xf32>
    %486 = math.tanh %485 : vector<16x1xf32>
    %487 = vector.extract_strided_slice %484 {offsets = [0, 1], sizes = [16, 1], strides = [1, 1]} : vector<16x3xf32> to vector<16x1xf32>
    %488 = arith.mulf %487, %472 : vector<16x1xf32>
    %489 = vector.extract_strided_slice %484 {offsets = [0, 0], sizes = [16, 1], strides = [1, 1]} : vector<16x3xf32> to vector<16x1xf32>
    %490 = arith.mulf %489, %486 : vector<16x1xf32>
    %491 = arith.addf %488, %490 : vector<16x1xf32>
    %492 = vector.extract_strided_slice %484 {offsets = [0, 2], sizes = [16, 1], strides = [1, 1]} : vector<16x3xf32> to vector<16x1xf32>
    %493 = math.tanh %491 : vector<16x1xf32>
    %494 = arith.mulf %492, %493 : vector<16x1xf32>
    %495 = vector.broadcast %494 : vector<16x1xf32> to vector<16x4xf32>
    %496 = arith.mulf %495, %397 : vector<16x4xf32>
    %497 = arith.addf %383, %496 : vector<16x4xf32>
    %498 = vector.extract_strided_slice %497 {offsets = [0, 0], sizes = [16, 3], strides = [1, 1]} : vector<16x4xf32> to vector<16x3xf32>
    %499 = arith.negf %498 : vector<16x3xf32>
    %500 = math.exp %499 : vector<16x3xf32>
    %cst_49 = arith.constant 1.000000e+00 : f32
    %501 = vector.broadcast %cst_49 : f32 to vector<16x3xf32>
    %502 = arith.addf %501, %500 : vector<16x3xf32>
    %503 = arith.divf %501, %502 : vector<16x3xf32>
    %504 = vector.extract_strided_slice %497 {offsets = [0, 3], sizes = [16, 1], strides = [1, 1]} : vector<16x4xf32> to vector<16x1xf32>
    %505 = math.tanh %504 : vector<16x1xf32>
    %506 = vector.extract_strided_slice %503 {offsets = [0, 1], sizes = [16, 1], strides = [1, 1]} : vector<16x3xf32> to vector<16x1xf32>
    %507 = arith.mulf %506, %491 : vector<16x1xf32>
    %508 = vector.extract_strided_slice %503 {offsets = [0, 0], sizes = [16, 1], strides = [1, 1]} : vector<16x3xf32> to vector<16x1xf32>
    %509 = arith.mulf %508, %505 : vector<16x1xf32>
    %510 = arith.addf %507, %509 : vector<16x1xf32>
    %511 = vector.extract_strided_slice %503 {offsets = [0, 2], sizes = [16, 1], strides = [1, 1]} : vector<16x3xf32> to vector<16x1xf32>
    %512 = math.tanh %510 : vector<16x1xf32>
    %513 = arith.mulf %511, %512 : vector<16x1xf32>
    %514 = vector.broadcast %513 : vector<16x1xf32> to vector<16x4xf32>
    %515 = arith.mulf %514, %397 : vector<16x4xf32>
    %516 = arith.addf %386, %515 : vector<16x4xf32>
    %517 = vector.extract_strided_slice %516 {offsets = [0, 0], sizes = [16, 3], strides = [1, 1]} : vector<16x4xf32> to vector<16x3xf32>
    %518 = arith.negf %517 : vector<16x3xf32>
    %519 = math.exp %518 : vector<16x3xf32>
    %cst_50 = arith.constant 1.000000e+00 : f32
    %520 = vector.broadcast %cst_50 : f32 to vector<16x3xf32>
    %521 = arith.addf %520, %519 : vector<16x3xf32>
    %522 = arith.divf %520, %521 : vector<16x3xf32>
    %523 = vector.extract_strided_slice %516 {offsets = [0, 3], sizes = [16, 1], strides = [1, 1]} : vector<16x4xf32> to vector<16x1xf32>
    %524 = math.tanh %523 : vector<16x1xf32>
    %525 = vector.extract_strided_slice %522 {offsets = [0, 1], sizes = [16, 1], strides = [1, 1]} : vector<16x3xf32> to vector<16x1xf32>
    %526 = arith.mulf %525, %510 : vector<16x1xf32>
    %527 = vector.extract_strided_slice %522 {offsets = [0, 0], sizes = [16, 1], strides = [1, 1]} : vector<16x3xf32> to vector<16x1xf32>
    %528 = arith.mulf %527, %524 : vector<16x1xf32>
    %529 = arith.addf %526, %528 : vector<16x1xf32>
    %530 = vector.extract_strided_slice %522 {offsets = [0, 2], sizes = [16, 1], strides = [1, 1]} : vector<16x3xf32> to vector<16x1xf32>
    %531 = math.tanh %529 : vector<16x1xf32>
    %532 = arith.mulf %530, %531 : vector<16x1xf32>
    %533 = vector.broadcast %532 : vector<16x1xf32> to vector<16x4xf32>
    %534 = arith.mulf %533, %397 : vector<16x4xf32>
    %535 = arith.addf %389, %534 : vector<16x4xf32>
    %536 = vector.extract_strided_slice %535 {offsets = [0, 0], sizes = [16, 3], strides = [1, 1]} : vector<16x4xf32> to vector<16x3xf32>
    %537 = arith.negf %536 : vector<16x3xf32>
    %538 = math.exp %537 : vector<16x3xf32>
    %cst_51 = arith.constant 1.000000e+00 : f32
    %539 = vector.broadcast %cst_51 : f32 to vector<16x3xf32>
    %540 = arith.addf %539, %538 : vector<16x3xf32>
    %541 = arith.divf %539, %540 : vector<16x3xf32>
    %542 = vector.extract_strided_slice %535 {offsets = [0, 3], sizes = [16, 1], strides = [1, 1]} : vector<16x4xf32> to vector<16x1xf32>
    %543 = math.tanh %542 : vector<16x1xf32>
    %544 = vector.extract_strided_slice %541 {offsets = [0, 1], sizes = [16, 1], strides = [1, 1]} : vector<16x3xf32> to vector<16x1xf32>
    %545 = arith.mulf %544, %529 : vector<16x1xf32>
    %546 = vector.extract_strided_slice %541 {offsets = [0, 0], sizes = [16, 1], strides = [1, 1]} : vector<16x3xf32> to vector<16x1xf32>
    %547 = arith.mulf %546, %543 : vector<16x1xf32>
    %548 = arith.addf %545, %547 : vector<16x1xf32>
    %549 = vector.extract_strided_slice %541 {offsets = [0, 2], sizes = [16, 1], strides = [1, 1]} : vector<16x3xf32> to vector<16x1xf32>
    %550 = math.tanh %548 : vector<16x1xf32>
    %551 = arith.mulf %549, %550 : vector<16x1xf32>
    %552 = vector.extract_strided_slice %418 {offsets = [0, 0], sizes = [8, 1], strides = [1, 1]} : vector<16x1xf32> to vector<8x1xf32>
    %553 = vector.extract_strided_slice %551 {offsets = [8, 0], sizes = [8, 1], strides = [1, 1]} : vector<16x1xf32> to vector<8x1xf32>
    %554 = arith.addf %552, %553 : vector<8x1xf32>
    %555 = vector.extract_strided_slice %437 {offsets = [0, 0], sizes = [8, 1], strides = [1, 1]} : vector<16x1xf32> to vector<8x1xf32>
    %556 = vector.extract_strided_slice %532 {offsets = [8, 0], sizes = [8, 1], strides = [1, 1]} : vector<16x1xf32> to vector<8x1xf32>
    %557 = arith.addf %555, %556 : vector<8x1xf32>
    %558 = vector.extract_strided_slice %456 {offsets = [0, 0], sizes = [8, 1], strides = [1, 1]} : vector<16x1xf32> to vector<8x1xf32>
    %559 = vector.extract_strided_slice %513 {offsets = [8, 0], sizes = [8, 1], strides = [1, 1]} : vector<16x1xf32> to vector<8x1xf32>
    %560 = arith.addf %558, %559 : vector<8x1xf32>
    %561 = vector.extract_strided_slice %475 {offsets = [0, 0], sizes = [8, 1], strides = [1, 1]} : vector<16x1xf32> to vector<8x1xf32>
    %562 = vector.extract_strided_slice %494 {offsets = [8, 0], sizes = [8, 1], strides = [1, 1]} : vector<16x1xf32> to vector<8x1xf32>
    %563 = arith.addf %561, %562 : vector<8x1xf32>
    %564 = vector.extract_strided_slice %494 {offsets = [0, 0], sizes = [8, 1], strides = [1, 1]} : vector<16x1xf32> to vector<8x1xf32>
    %565 = vector.extract_strided_slice %475 {offsets = [8, 0], sizes = [8, 1], strides = [1, 1]} : vector<16x1xf32> to vector<8x1xf32>
    %566 = arith.addf %564, %565 : vector<8x1xf32>
    %567 = vector.extract_strided_slice %513 {offsets = [0, 0], sizes = [8, 1], strides = [1, 1]} : vector<16x1xf32> to vector<8x1xf32>
    %568 = vector.extract_strided_slice %456 {offsets = [8, 0], sizes = [8, 1], strides = [1, 1]} : vector<16x1xf32> to vector<8x1xf32>
    %569 = arith.addf %567, %568 : vector<8x1xf32>
    %570 = vector.extract_strided_slice %532 {offsets = [0, 0], sizes = [8, 1], strides = [1, 1]} : vector<16x1xf32> to vector<8x1xf32>
    %571 = vector.extract_strided_slice %437 {offsets = [8, 0], sizes = [8, 1], strides = [1, 1]} : vector<16x1xf32> to vector<8x1xf32>
    %572 = arith.addf %570, %571 : vector<8x1xf32>
    %573 = vector.extract_strided_slice %551 {offsets = [0, 0], sizes = [8, 1], strides = [1, 1]} : vector<16x1xf32> to vector<8x1xf32>
    %574 = vector.extract_strided_slice %418 {offsets = [8, 0], sizes = [8, 1], strides = [1, 1]} : vector<16x1xf32> to vector<8x1xf32>
    %575 = arith.addf %573, %574 : vector<8x1xf32>
    %cst_52 = arith.constant 0.000000e+00 : f32
    %576 = vector.broadcast %cst_52 : f32 to vector<8x120xf32>
    %577 = tpu.concatenate %554, %557, %560, %563, %566, %569, %572, %575, %576 in 1 : vector<8x1xf32>, vector<8x1xf32>, vector<8x1xf32>, vector<8x1xf32>, vector<8x1xf32>, vector<8x1xf32>, vector<8x1xf32>, vector<8x1xf32>, vector<8x120xf32> -> vector<8x128xf32>
    %c0_53 = arith.constant 0 : index
    %c0_54 = arith.constant 0 : index
    %578 = vector.load %arg11[%c0_53, %c0_54] : memref<8x128xf32, #tpu.memory_space<vmem>>, vector<8x128xf32>
    tpu.vector_store %arg11[%c0_53, %c0_54], %577 {strides = array<i32>} : memref<8x128xf32, #tpu.memory_space<vmem>>, vector<8x128xf32>,
    %c0_55 = arith.constant 0 : index
    %c0_56 = arith.constant 0 : index
    %579 = vector.load %arg9[%c0_55, %c0_56] : memref<128x128xf32, #tpu.memory_space<vmem>>, vector<128x128xf32>
    %cst_57 = arith.constant dense<0.000000e+00> : vector<8x128xf32>
    %580 = tpu.matmul %577, %579, %cst_57 {dimension_numbers = #tpu.dot_dimension_numbers<[1], [0], [0], [1], [0, 0, 1, 1], [], []>} : vector<8x128xf32>, vector<128x128xf32>, vector<8x128xf32> -> vector<8x128xf32>
    %c0_58 = arith.constant 0 : index
    %c0_59 = arith.constant 0 : index
    %581 = vector.load %arg10[%c0_58, %c0_59] : memref<1x128xf32, #tpu.memory_space<vmem>>, vector<1x128xf32>
    %582 = vector.broadcast %581 : vector<1x128xf32> to vector<8x128xf32>
    %583 = arith.addf %580, %582 : vector<8x128xf32>
    %c0_60 = arith.constant 0 : index
    %c0_61 = arith.constant 0 : index
    %584 = vector.load %arg12[%c0_60, %c0_61] : memref<8x128xf32, #tpu.memory_space<vmem>>, vector<8x128xf32>
    tpu.vector_store %arg12[%c0_60, %c0_61], %583 {strides = array<i32>} : memref<8x128xf32, #tpu.memory_space<vmem>>, vector<8x128xf32>,
    return
  }
}

</mosaic_0001>

<llo_original>
// kernel: tae_forward.1
$region0: #{tae_forward.1}
  #allocation0 [shape = 'u32[]', space=smem, size = 0x4, offset = 0x4, fixed_abs, tag = 'smem constant byte address 0x4 - core index']
  #allocation1 [shape = 'u32[72,128]{1,0:T(1,128)}', space=vmem, size = 0x9000, scoped, tag = 'internal scratch']
  %s0 = inlined_call_operand.vmem [shape: f32[512,10], index: 0, kind: input, shape index: {}]
  %s1 = inlined_call_operand.vmem [shape: f32[10,50], index: 1, kind: input, shape index: {}]
  %s2 = inlined_call_operand.vmem [shape: f32[1,50], index: 2, kind: input, shape index: {}]
  %s3 = inlined_call_operand.vmem [shape: bf16[50,512], index: 3, kind: input, shape index: {}]
  %s4 = inlined_call_operand.vmem [shape: f32[1,512], index: 4, kind: input, shape index: {}]
  %s5 = inlined_call_operand.vmem [shape: bf16[128,512], index: 5, kind: input, shape index: {}]
  %s6 = inlined_call_operand.vmem [shape: f32[64,8], index: 6, kind: input, shape index: {}]
  %s7 = inlined_call_operand.vmem [shape: f32[1,8], index: 7, kind: input, shape index: {}]
  %s8 = inlined_call_operand.vmem [shape: f32[2,4], index: 8, kind: input, shape index: {}]
  %s9 = inlined_call_operand.vmem [shape: f32[128,128], index: 9, kind: input, shape index: {}]
  %s10 = inlined_call_operand.vmem [shape: f32[1,128], index: 10, kind: input, shape index: {}]
  %s11 = inlined_call_operand.vmem [shape: f32[8,128], index: 11, kind: output, shape index: {0}]
  %s12 = inlined_call_operand.vmem [shape: f32[8,128], index: 12, kind: output, shape index: {1}]
  %13 = xla_tuple %s11, %s12
  %s14 = sld [smem:[#allocation0]]
  $region62: #{tae_forward.1} parent=0
    _
  %s16 = ssub.s32 1, %s14
  %s17 = scalar_select 0, %s16, %s14
  // Predicated region
  $region2: #{tae_forward.1} parent=0 // pred_check
    _
  $region3: #{tae_forward.1} parent=0 // pred_check_branch
    %19 = sbr.rel (0) target = $region5
  $region4: #{tae_forward.1} parent=0 // pred_region
    _
  $region5: #{tae_forward.1} parent=0 // pred_fallthru
    _
  // Predicated region
  $region6: #{tae_forward.1} parent=0 // pred_check
    _
  $region7: #{tae_forward.1} parent=0 // pred_check_branch
    %21 = sbr.rel (0) target = $region9
  $region8: #{tae_forward.1} parent=0 // pred_region
    _
  $region9: #{tae_forward.1} parent=0 // pred_fallthru
    _
  // Predicated region
  $region10: #{tae_forward.1} parent=0 // pred_check
    _
  $region11: #{tae_forward.1} parent=0 // pred_check_branch
    %23 = sbr.rel (0) target = $region13
  $region12: #{tae_forward.1} parent=0 // pred_region
    _
  $region13: #{tae_forward.1} parent=0 // pred_fallthru
    _
  // Predicated region
  $region14: #{tae_forward.1} parent=0 // pred_check
    _
  $region15: #{tae_forward.1} parent=0 // pred_check_branch
    %25 = sbr.rel (0) target = $region17
  $region16: #{tae_forward.1} parent=0 // pred_region
    _
  $region17: #{tae_forward.1} parent=0 // pred_fallthru
    _
  // Predicated region
  $region18: #{tae_forward.1} parent=0 // pred_check
    _
  $region19: #{tae_forward.1} parent=0 // pred_check_branch
    %27 = sbr.rel (0) target = $region21
  $region20: #{tae_forward.1} parent=0 // pred_region
    _
  $region21: #{tae_forward.1} parent=0 // pred_fallthru
    _
  // Predicated region
  $region22: #{tae_forward.1} parent=0 // pred_check
    _
  $region23: #{tae_forward.1} parent=0 // pred_check_branch
    %29 = sbr.rel (0) target = $region25
  $region24: #{tae_forward.1} parent=0 // pred_region
    _
  $region25: #{tae_forward.1} parent=0 // pred_fallthru
    _
  // Predicated region
  $region26: #{tae_forward.1} parent=0 // pred_check
    _
  $region27: #{tae_forward.1} parent=0 // pred_check_branch
    %31 = sbr.rel (0) target = $region29
  $region28: #{tae_forward.1} parent=0 // pred_region
    _
  $region29: #{tae_forward.1} parent=0 // pred_fallthru
    _
  // Predicated region
  $region30: #{tae_forward.1} parent=0 // pred_check
    _
  $region31: #{tae_forward.1} parent=0 // pred_check_branch
    %33 = sbr.rel (0) target = $region33
  $region32: #{tae_forward.1} parent=0 // pred_region
    _
  $region33: #{tae_forward.1} parent=0 // pred_fallthru
    _
  // Predicated region
  $region34: #{tae_forward.1} parent=0 // pred_check
    _
  $region35: #{tae_forward.1} parent=0 // pred_check_branch
    %35 = sbr.rel (0) target = $region37
  $region36: #{tae_forward.1} parent=0 // pred_region
    _
  $region37: #{tae_forward.1} parent=0 // pred_fallthru
    _
  // Predicated region
  $region38: #{tae_forward.1} parent=0 // pred_check
    _
  $region39: #{tae_forward.1} parent=0 // pred_check_branch
    %37 = sbr.rel (0) target = $region41
  $region40: #{tae_forward.1} parent=0 // pred_region
    _
  $region41: #{tae_forward.1} parent=0 // pred_fallthru
    _
  // Predicated region
  $region42: #{tae_forward.1} parent=0 // pred_check
    _
  $region43: #{tae_forward.1} parent=0 // pred_check_branch
    %39 = sbr.rel (0) target = $region45
  $region44: #{tae_forward.1} parent=0 // pred_region
    _
  $region45: #{tae_forward.1} parent=0 // pred_fallthru
    _
  %v41 = vld [vmem:[%s0] sm:$0xff]
  %v42 = vld [vmem:[%s0 + $0x8] sm:$0xff]
  %v43 = vld [vmem:[%s0 + $0x10] sm:$0xff]
  %v44 = vld [vmem:[%s0 + $0x18] sm:$0xff]
  %v45 = vld [vmem:[%s0 + $0x20] sm:$0xff]
  %v46 = vld [vmem:[%s0 + $0x28] sm:$0xff]
  %v47 = vld [vmem:[%s0 + $0x30] sm:$0xff]
  %v48 = vld [vmem:[%s0 + $0x38] sm:$0xff]
  %v49 = vld [vmem:[%s0 + $0x40] sm:$0xff]
  %v50 = vld [vmem:[%s0 + $0x48] sm:$0xff]
  %v51 = vld [vmem:[%s0 + $0x50] sm:$0xff]
  %v52 = vld [vmem:[%s0 + $0x58] sm:$0xff]
  %v53 = vld [vmem:[%s0 + $0x60] sm:$0xff]
  %v54 = vld [vmem:[%s0 + $0x68] sm:$0xff]
  %v55 = vld [vmem:[%s0 + $0x70] sm:$0xff]
  %v56 = vld [vmem:[%s0 + $0x78] sm:$0xff]
  %v57 = vld [vmem:[%s0 + $0x80] sm:$0xff]
  %v58 = vld [vmem:[%s0 + $0x88] sm:$0xff]
  %v59 = vld [vmem:[%s0 + $0x90] sm:$0xff]
  %v60 = vld [vmem:[%s0 + $0x98] sm:$0xff]
  %v61 = vld [vmem:[%s0 + $0xa0] sm:$0xff]
  %v62 = vld [vmem:[%s0 + $0xa8] sm:$0xff]
  %v63 = vld [vmem:[%s0 + $0xb0] sm:$0xff]
  %v64 = vld [vmem:[%s0 + $0xb8] sm:$0xff]
  %v65 = vld [vmem:[%s0 + $0xc0] sm:$0xff]
  %v66 = vld [vmem:[%s0 + $0xc8] sm:$0xff]
  %v67 = vld [vmem:[%s0 + $0xd0] sm:$0xff]
  %v68 = vld [vmem:[%s0 + $0xd8] sm:$0xff]
  %v69 = vld [vmem:[%s0 + $0xe0] sm:$0xff]
  %v70 = vld [vmem:[%s0 + $0xe8] sm:$0xff]
  %v71 = vld [vmem:[%s0 + $0xf0] sm:$0xff]
  %v72 = vld [vmem:[%s0 + $0xf8] sm:$0xff]
  %v73 = vld [vmem:[%s0 + $0x100] sm:$0xff]
  %v74 = vld [vmem:[%s0 + $0x108] sm:$0xff]
  %v75 = vld [vmem:[%s0 + $0x110] sm:$0xff]
  %v76 = vld [vmem:[%s0 + $0x118] sm:$0xff]
  %v77 = vld [vmem:[%s0 + $0x120] sm:$0xff]
  %v78 = vld [vmem:[%s0 + $0x128] sm:$0xff]
  %v79 = vld [vmem:[%s0 + $0x130] sm:$0xff]
  %v80 = vld [vmem:[%s0 + $0x138] sm:$0xff]
  %v81 = vld [vmem:[%s0 + $0x140] sm:$0xff]
  %v82 = vld [vmem:[%s0 + $0x148] sm:$0xff]
  %v83 = vld [vmem:[%s0 + $0x150] sm:$0xff]
  %v84 = vld [vmem:[%s0 + $0x158] sm:$0xff]
  %v85 = vld [vmem:[%s0 + $0x160] sm:$0xff]
  %v86 = vld [vmem:[%s0 + $0x168] sm:$0xff]
  %v87 = vld [vmem:[%s0 + $0x170] sm:$0xff]
  %v88 = vld [vmem:[%s0 + $0x178] sm:$0xff]
  %v89 = vld [vmem:[%s0 + $0x180] sm:$0xff]
  %v90 = vld [vmem:[%s0 + $0x188] sm:$0xff]
  %v91 = vld [vmem:[%s0 + $0x190] sm:$0xff]
  %v92 = vld [vmem:[%s0 + $0x198] sm:$0xff]
  %v93 = vld [vmem:[%s0 + $0x1a0] sm:$0xff]
  %v94 = vld [vmem:[%s0 + $0x1a8] sm:$0xff]
  %v95 = vld [vmem:[%s0 + $0x1b0] sm:$0xff]
  %v96 = vld [vmem:[%s0 + $0x1b8] sm:$0xff]
  %v97 = vld [vmem:[%s0 + $0x1c0] sm:$0xff]
  %v98 = vld [vmem:[%s0 + $0x1c8] sm:$0xff]
  %v99 = vld [vmem:[%s0 + $0x1d0] sm:$0xff]
  %v100 = vld [vmem:[%s0 + $0x1d8] sm:$0xff]
  %v101 = vld [vmem:[%s0 + $0x1e0] sm:$0xff]
  %v102 = vld [vmem:[%s0 + $0x1e8] sm:$0xff]
  %v103 = vld [vmem:[%s0 + $0x1f0] sm:$0xff]
  %v104 = vld [vmem:[%s0 + $0x1f8] sm:$0xff]
  %v105 = vld [vmem:[%s1] sm:$0xff]
  %v106 = vld [vmem:[%s1 + $0x8] sm:$0x3]
  %v107 = vld [vmem:[%s2] sm:$0x1]
  %v109 = vperm.slane %v107, 0
  %vm111 = vcmask 80896
  %v113 = vsel %vm111, %v41, 0
  %v116 = vsel %vm111, %v42, 0
  %v119 = vsel %vm111, %v43, 0
  %v122 = vsel %vm111, %v44, 0
  %v125 = vsel %vm111, %v45, 0
  %v128 = vsel %vm111, %v46, 0
  %v131 = vsel %vm111, %v47, 0
  %v134 = vsel %vm111, %v48, 0
  %v137 = vsel %vm111, %v49, 0
  %v140 = vsel %vm111, %v50, 0
  %v143 = vsel %vm111, %v51, 0
  %v146 = vsel %vm111, %v52, 0
  %v149 = vsel %vm111, %v53, 0
  %v152 = vsel %vm111, %v54, 0
  %v155 = vsel %vm111, %v55, 0
  %v158 = vsel %vm111, %v56, 0
  %v161 = vsel %vm111, %v57, 0
  %v164 = vsel %vm111, %v58, 0
  %v167 = vsel %vm111, %v59, 0
  %v170 = vsel %vm111, %v60, 0
  %v173 = vsel %vm111, %v61, 0
  %v176 = vsel %vm111, %v62, 0
  %v179 = vsel %vm111, %v63, 0
  %v182 = vsel %vm111, %v64, 0
  %v185 = vsel %vm111, %v65, 0
  %v188 = vsel %vm111, %v66, 0
  %v191 = vsel %vm111, %v67, 0
  %v194 = vsel %vm111, %v68, 0
  %v197 = vsel %vm111, %v69, 0
  %v200 = vsel %vm111, %v70, 0
  %v203 = vsel %vm111, %v71, 0
  %v206 = vsel %vm111, %v72, 0
  %v209 = vsel %vm111, %v73, 0
  %v212 = vsel %vm111, %v74, 0
  %v215 = vsel %vm111, %v75, 0
  %v218 = vsel %vm111, %v76, 0
  %v221 = vsel %vm111, %v77, 0
  %v224 = vsel %vm111, %v78, 0
  %v227 = vsel %vm111, %v79, 0
  %v230 = vsel %vm111, %v80, 0
  %v233 = vsel %vm111, %v81, 0
  %v236 = vsel %vm111, %v82, 0
  %v239 = vsel %vm111, %v83, 0
  %v242 = vsel %vm111, %v84, 0
  %v245 = vsel %vm111, %v85, 0
  %v248 = vsel %vm111, %v86, 0
  %v251 = vsel %vm111, %v87, 0
  %v254 = vsel %vm111, %v88, 0
  %v257 = vsel %vm111, %v89, 0
  %v260 = vsel %vm111, %v90, 0
  %v263 = vsel %vm111, %v91, 0
  %v266 = vsel %vm111, %v92, 0
  %v269 = vsel %vm111, %v93, 0
  %v272 = vsel %vm111, %v94, 0
  %v275 = vsel %vm111, %v95, 0
  %v278 = vsel %vm111, %v96, 0
  %v281 = vsel %vm111, %v97, 0
  %v284 = vsel %vm111, %v98, 0
  %v287 = vsel %vm111, %v99, 0
  %v290 = vsel %vm111, %v100, 0
  %v293 = vsel %vm111, %v101, 0
  %v296 = vsel %vm111, %v102, 0
  %v299 = vsel %vm111, %v103, 0
  %v302 = vsel %vm111, %v104, 0
  %vm304 = vcmask 1041408
  %v306 = vsel %vm304, %v106, 0
  %308 = vmatpush.msra.mxu0 0.0
  %309 = vmatpush.msra.mxu0 0.0
  %310 = vmatpush.msra.mxu0 0.0
  %311 = vmatpush.msra.mxu0 0.0
  %312 = vmatpush.msra.mxu0 0.0
  %313 = vmatpush.msra.mxu0 0.0
  %314 = vmatpush.msra.mxu0 0.0
  %315 = vmatpush.msra.mxu0 0.0
  %316 = vmatpush.msra.mxu0 0.0
  %317 = vmatpush.msra.mxu0 0.0
  %318 = vmatpush.msra.mxu0 0.0
  %319 = vmatpush.msra.mxu0 0.0
  %320 = vmatpush.msra.mxu0 0.0
  %321 = vmatpush.msra.mxu0 0.0
  %322 = vmatpush.msra.mxu0 %v306
  %323 = vmatpush.msra.mxu0 %v105
  %324 = vmatmul.f32.gmra.mxu0 %v113
  %v325 = vpop.f32.mrf.mxu0
  %v326 = vadd.f32 %v109, %v325
  %327 = vmatmul.f32.gmra.mxu0 %v116
  %v328 = vpop.f32.mrf.mxu0
  %v329 = vadd.f32 %v109, %v328
  %330 = vmatmul.f32.gmra.mxu0 %v119
  %v331 = vpop.f32.mrf.mxu0
  %v332 = vadd.f32 %v109, %v331
  %333 = vmatmul.f32.gmra.mxu0 %v122
  %v334 = vpop.f32.mrf.mxu0
  %v335 = vadd.f32 %v109, %v334
  %336 = vmatmul.f32.gmra.mxu0 %v125
  %v337 = vpop.f32.mrf.mxu0
  %v338 = vadd.f32 %v109, %v337
  %339 = vmatmul.f32.gmra.mxu0 %v128
  %v340 = vpop.f32.mrf.mxu0
  %v341 = vadd.f32 %v109, %v340
  %342 = vmatmul.f32.gmra.mxu0 %v131
  %v343 = vpop.f32.mrf.mxu0
  %v344 = vadd.f32 %v109, %v343
  %345 = vmatmul.f32.gmra.mxu0 %v134
  %v346 = vpop.f32.mrf.mxu0
  %v347 = vadd.f32 %v109, %v346
  %348 = vmatmul.f32.gmra.mxu0 %v137
  %v349 = vpop.f32.mrf.mxu0
  %v350 = vadd.f32 %v109, %v349
  %351 = vmatmul.f32.gmra.mxu0 %v140
  %v352 = vpop.f32.mrf.mxu0
  %v353 = vadd.f32 %v109, %v352
  %354 = vmatmul.f32.gmra.mxu0 %v143
  %v355 = vpop.f32.mrf.mxu0
  %v356 = vadd.f32 %v109, %v355
  %357 = vmatmul.f32.gmra.mxu0 %v146
  %v358 = vpop.f32.mrf.mxu0
  %v359 = vadd.f32 %v109, %v358
  %360 = vmatmul.f32.gmra.mxu0 %v149
  %v361 = vpop.f32.mrf.mxu0
  %v362 = vadd.f32 %v109, %v361
  %363 = vmatmul.f32.gmra.mxu0 %v152
  %v364 = vpop.f32.mrf.mxu0
  %v365 = vadd.f32 %v109, %v364
  %366 = vmatmul.f32.gmra.mxu0 %v155
  %v367 = vpop.f32.mrf.mxu0
  %v368 = vadd.f32 %v109, %v367
  %369 = vmatmul.f32.gmra.mxu0 %v158
  %v370 = vpop.f32.mrf.mxu0
  %v371 = vadd.f32 %v109, %v370
  %372 = vmatmul.f32.gmra.mxu0 %v161
  %v373 = vpop.f32.mrf.mxu0
  %v374 = vadd.f32 %v109, %v373
  %375 = vmatmul.f32.gmra.mxu0 %v164
  %v376 = vpop.f32.mrf.mxu0
  %v377 = vadd.f32 %v109, %v376
  %378 = vmatmul.f32.gmra.mxu0 %v167
  %v379 = vpop.f32.mrf.mxu0
  %v380 = vadd.f32 %v109, %v379
  %381 = vmatmul.f32.gmra.mxu0 %v170
  %v382 = vpop.f32.mrf.mxu0
  %v383 = vadd.f32 %v109, %v382
  %384 = vmatmul.f32.gmra.mxu0 %v173
  %v385 = vpop.f32.mrf.mxu0
  %v386 = vadd.f32 %v109, %v385
  %387 = vmatmul.f32.gmra.mxu0 %v176
  %v388 = vpop.f32.mrf.mxu0
  %v389 = vadd.f32 %v109, %v388
  %390 = vmatmul.f32.gmra.mxu0 %v179
  %v391 = vpop.f32.mrf.mxu0
  %v392 = vadd.f32 %v109, %v391
  %393 = vmatmul.f32.gmra.mxu0 %v182
  %v394 = vpop.f32.mrf.mxu0
  %v395 = vadd.f32 %v109, %v394
  %396 = vmatmul.f32.gmra.mxu0 %v185
  %v397 = vpop.f32.mrf.mxu0
  %v398 = vadd.f32 %v109, %v397
  %399 = vmatmul.f32.gmra.mxu0 %v188
  %v400 = vpop.f32.mrf.mxu0
  %v401 = vadd.f32 %v109, %v400
  %402 = vmatmul.f32.gmra.mxu0 %v191
  %v403 = vpop.f32.mrf.mxu0
  %v404 = vadd.f32 %v109, %v403
  %405 = vmatmul.f32.gmra.mxu0 %v194
  %v406 = vpop.f32.mrf.mxu0
  %v407 = vadd.f32 %v109, %v406
  %408 = vmatmul.f32.gmra.mxu0 %v197
  %v409 = vpop.f32.mrf.mxu0
  %v410 = vadd.f32 %v109, %v409
  %411 = vmatmul.f32.gmra.mxu0 %v200
  %v412 = vpop.f32.mrf.mxu0
  %v413 = vadd.f32 %v109, %v412
  %414 = vmatmul.f32.gmra.mxu0 %v203
  %v415 = vpop.f32.mrf.mxu0
  %v416 = vadd.f32 %v109, %v415
  %417 = vmatmul.f32.gmra.mxu0 %v206
  %v418 = vpop.f32.mrf.mxu0
  %v419 = vadd.f32 %v109, %v418
  %420 = vmatmul.f32.gmra.mxu0 %v209
  %v421 = vpop.f32.mrf.mxu0
  %v422 = vadd.f32 %v109, %v421
  %423 = vmatmul.f32.gmra.mxu0 %v212
  %v424 = vpop.f32.mrf.mxu0
  %v425 = vadd.f32 %v109, %v424
  %426 = vmatmul.f32.gmra.mxu0 %v215
  %v427 = vpop.f32.mrf.mxu0
  %v428 = vadd.f32 %v109, %v427
  %429 = vmatmul.f32.gmra.mxu0 %v218
  %v430 = vpop.f32.mrf.mxu0
  %v431 = vadd.f32 %v109, %v430
  %432 = vmatmul.f32.gmra.mxu0 %v221
  %v433 = vpop.f32.mrf.mxu0
  %v434 = vadd.f32 %v109, %v433
  %435 = vmatmul.f32.gmra.mxu0 %v224
  %v436 = vpop.f32.mrf.mxu0
  %v437 = vadd.f32 %v109, %v436
  %438 = vmatmul.f32.gmra.mxu0 %v227
  %v439 = vpop.f32.mrf.mxu0
  %v440 = vadd.f32 %v109, %v439
  %441 = vmatmul.f32.gmra.mxu0 %v230
  %v442 = vpop.f32.mrf.mxu0
  %v443 = vadd.f32 %v109, %v442
  %444 = vmatmul.f32.gmra.mxu0 %v233
  %v445 = vpop.f32.mrf.mxu0
  %v446 = vadd.f32 %v109, %v445
  %447 = vmatmul.f32.gmra.mxu0 %v236
  %v448 = vpop.f32.mrf.mxu0
  %v449 = vadd.f32 %v109, %v448
  %450 = vmatmul.f32.gmra.mxu0 %v239
  %v451 = vpop.f32.mrf.mxu0
  %v452 = vadd.f32 %v109, %v451
  %453 = vmatmul.f32.gmra.mxu0 %v242
  %v454 = vpop.f32.mrf.mxu0
  %v455 = vadd.f32 %v109, %v454
  %456 = vmatmul.f32.gmra.mxu0 %v245
  %v457 = vpop.f32.mrf.mxu0
  %v458 = vadd.f32 %v109, %v457
  %459 = vmatmul.f32.gmra.mxu0 %v248
  %v460 = vpop.f32.mrf.mxu0
  %v461 = vadd.f32 %v109, %v460
  %462 = vmatmul.f32.gmra.mxu0 %v251
  %v463 = vpop.f32.mrf.mxu0
  %v464 = vadd.f32 %v109, %v463
  %465 = vmatmul.f32.gmra.mxu0 %v254
  %v466 = vpop.f32.mrf.mxu0
  %v467 = vadd.f32 %v109, %v466
  %468 = vmatmul.f32.gmra.mxu0 %v257
  %v469 = vpop.f32.mrf.mxu0
  %v470 = vadd.f32 %v109, %v469
  %471 = vmatmul.f32.gmra.mxu0 %v260
  %v472 = vpop.f32.mrf.mxu0
  %v473 = vadd.f32 %v109, %v472
  %474 = vmatmul.f32.gmra.mxu0 %v263
  %v475 = vpop.f32.mrf.mxu0
  %v476 = vadd.f32 %v109, %v475
  %477 = vmatmul.f32.gmra.mxu0 %v266
  %v478 = vpop.f32.mrf.mxu0
  %v479 = vadd.f32 %v109, %v478
  %480 = vmatmul.f32.gmra.mxu0 %v269
  %v481 = vpop.f32.mrf.mxu0
  %v482 = vadd.f32 %v109, %v481
  %483 = vmatmul.f32.gmra.mxu0 %v272
  %v484 = vpop.f32.mrf.mxu0
  %v485 = vadd.f32 %v109, %v484
  %486 = vmatmul.f32.gmra.mxu0 %v275
  %v487 = vpop.f32.mrf.mxu0
  %v488 = vadd.f32 %v109, %v487
  %489 = vmatmul.f32.gmra.mxu0 %v278
  %v490 = vpop.f32.mrf.mxu0
  %v491 = vadd.f32 %v109, %v490
  %492 = vmatmul.f32.gmra.mxu0 %v281
  %v493 = vpop.f32.mrf.mxu0
  %v494 = vadd.f32 %v109, %v493
  %495 = vmatmul.f32.gmra.mxu0 %v284
  %v496 = vpop.f32.mrf.mxu0
  %v497 = vadd.f32 %v109, %v496
  %498 = vmatmul.f32.gmra.mxu0 %v287
  %v499 = vpop.f32.mrf.mxu0
  %v500 = vadd.f32 %v109, %v499
  %501 = vmatmul.f32.gmra.mxu0 %v290
  %v502 = vpop.f32.mrf.mxu0
  %v503 = vadd.f32 %v109, %v502
  %504 = vmatmul.f32.gmra.mxu0 %v293
  %v505 = vpop.f32.mrf.mxu0
  %v506 = vadd.f32 %v109, %v505
  %507 = vmatmul.f32.gmra.mxu0 %v296
  %v508 = vpop.f32.mrf.mxu0
  %v509 = vadd.f32 %v109, %v508
  %510 = vmatmul.f32.gmra.mxu0 %v299
  %v511 = vpop.f32.mrf.mxu0
  %v512 = vadd.f32 %v109, %v511
  %513 = vmatmul.f32.gmra.mxu0 %v302
  %v514 = vpop.f32.mrf.mxu0
  %v515 = vadd.f32 %v109, %v514
  %516 = vdwg.mxu0
  %vm517 = vcmp.gt.f32.partialorder %v326, 0.0
  %vm518 = vcmp.gt.f32.partialorder %v329, 0.0
  %vm519 = vcmp.gt.f32.partialorder %v332, 0.0
  %vm520 = vcmp.gt.f32.partialorder %v335, 0.0
  %vm521 = vcmp.gt.f32.partialorder %v338, 0.0
  %vm522 = vcmp.gt.f32.partialorder %v341, 0.0
  %vm523 = vcmp.gt.f32.partialorder %v344, 0.0
  %vm524 = vcmp.gt.f32.partialorder %v347, 0.0
  %vm525 = vcmp.gt.f32.partialorder %v350, 0.0
  %vm526 = vcmp.gt.f32.partialorder %v353, 0.0
  %vm527 = vcmp.gt.f32.partialorder %v356, 0.0
  %vm528 = vcmp.gt.f32.partialorder %v359, 0.0
  %vm529 = vcmp.gt.f32.partialorder %v362, 0.0
  %vm530 = vcmp.gt.f32.partialorder %v365, 0.0
  %vm531 = vcmp.gt.f32.partialorder %v368, 0.0
  %vm532 = vcmp.gt.f32.partialorder %v371, 0.0
  %vm533 = vcmp.gt.f32.partialorder %v374, 0.0
  %vm534 = vcmp.gt.f32.partialorder %v377, 0.0
  %vm535 = vcmp.gt.f32.partialorder %v380, 0.0
  %vm536 = vcmp.gt.f32.partialorder %v383, 0.0
  %vm537 = vcmp.gt.f32.partialorder %v386, 0.0
  %vm538 = vcmp.gt.f32.partialorder %v389, 0.0
  %vm539 = vcmp.gt.f32.partialorder %v392, 0.0
  %vm540 = vcmp.gt.f32.partialorder %v395, 0.0
  %vm541 = vcmp.gt.f32.partialorder %v398, 0.0
  %vm542 = vcmp.gt.f32.partialorder %v401, 0.0
  %vm543 = vcmp.gt.f32.partialorder %v404, 0.0
  %vm544 = vcmp.gt.f32.partialorder %v407, 0.0
  %vm545 = vcmp.gt.f32.partialorder %v410, 0.0
  %vm546 = vcmp.gt.f32.partialorder %v413, 0.0
  %vm547 = vcmp.gt.f32.partialorder %v416, 0.0
  %vm548 = vcmp.gt.f32.partialorder %v419, 0.0
  %vm549 = vcmp.gt.f32.partialorder %v422, 0.0
  %vm550 = vcmp.gt.f32.partialorder %v425, 0.0
  %vm551 = vcmp.gt.f32.partialorder %v428, 0.0
  %vm552 = vcmp.gt.f32.partialorder %v431, 0.0
  %vm553 = vcmp.gt.f32.partialorder %v434, 0.0
  %vm554 = vcmp.gt.f32.partialorder %v437, 0.0
  %vm555 = vcmp.gt.f32.partialorder %v440, 0.0
  %vm556 = vcmp.gt.f32.partialorder %v443, 0.0
  %vm557 = vcmp.gt.f32.partialorder %v446, 0.0
  %vm558 = vcmp.gt.f32.partialorder %v449, 0.0
  %vm559 = vcmp.gt.f32.partialorder %v452, 0.0
  %vm560 = vcmp.gt.f32.partialorder %v455, 0.0
  %vm561 = vcmp.gt.f32.partialorder %v458, 0.0
  %vm562 = vcmp.gt.f32.partialorder %v461, 0.0
  %vm563 = vcmp.gt.f32.partialorder %v464, 0.0
  %vm564 = vcmp.gt.f32.partialorder %v467, 0.0
  %vm565 = vcmp.gt.f32.partialorder %v470, 0.0
  %vm566 = vcmp.gt.f32.partialorder %v473, 0.0
  %vm567 = vcmp.gt.f32.partialorder %v476, 0.0
  %vm568 = vcmp.gt.f32.partialorder %v479, 0.0
  %vm569 = vcmp.gt.f32.partialorder %v482, 0.0
  %vm570 = vcmp.gt.f32.partialorder %v485, 0.0
  %vm571 = vcmp.gt.f32.partialorder %v488, 0.0
  %vm572 = vcmp.gt.f32.partialorder %v491, 0.0
  %vm573 = vcmp.gt.f32.partialorder %v494, 0.0
  %vm574 = vcmp.gt.f32.partialorder %v497, 0.0
  %vm575 = vcmp.gt.f32.partialorder %v500, 0.0
  %vm576 = vcmp.gt.f32.partialorder %v503, 0.0
  %vm577 = vcmp.gt.f32.partialorder %v506, 0.0
  %vm578 = vcmp.gt.f32.partialorder %v509, 0.0
  %vm579 = vcmp.gt.f32.partialorder %v512, 0.0
  %vm580 = vcmp.gt.f32.partialorder %v515, 0.0
  %v581 = vmul.f32 %v326, 0.01
  %v582 = vmul.f32 %v329, 0.01
  %v583 = vmul.f32 %v332, 0.01
  %v584 = vmul.f32 %v335, 0.01
  %v585 = vmul.f32 %v338, 0.01
  %v586 = vmul.f32 %v341, 0.01
  %v587 = vmul.f32 %v344, 0.01
  %v588 = vmul.f32 %v347, 0.01
  %v589 = vmul.f32 %v350, 0.01
  %v590 = vmul.f32 %v353, 0.01
  %v591 = vmul.f32 %v356, 0.01
  %v592 = vmul.f32 %v359, 0.01
  %v593 = vmul.f32 %v362, 0.01
  %v594 = vmul.f32 %v365, 0.01
  %v595 = vmul.f32 %v368, 0.01
  %v596 = vmul.f32 %v371, 0.01
  %v597 = vmul.f32 %v374, 0.01
  %v598 = vmul.f32 %v377, 0.01
  %v599 = vmul.f32 %v380, 0.01
  %v600 = vmul.f32 %v383, 0.01
  %v601 = vmul.f32 %v386, 0.01
  %v602 = vmul.f32 %v389, 0.01
  %v603 = vmul.f32 %v392, 0.01
  %v604 = vmul.f32 %v395, 0.01
  %v605 = vmul.f32 %v398, 0.01
  %v606 = vmul.f32 %v401, 0.01
  %v607 = vmul.f32 %v404, 0.01
  %v608 = vmul.f32 %v407, 0.01
  %v609 = vmul.f32 %v410, 0.01
  %v610 = vmul.f32 %v413, 0.01
  %v611 = vmul.f32 %v416, 0.01
  %v612 = vmul.f32 %v419, 0.01
  %v613 = vmul.f32 %v422, 0.01
  %v614 = vmul.f32 %v425, 0.01
  %v615 = vmul.f32 %v428, 0.01
  %v616 = vmul.f32 %v431, 0.01
  %v617 = vmul.f32 %v434, 0.01
  %v618 = vmul.f32 %v437, 0.01
  %v619 = vmul.f32 %v440, 0.01
  %v620 = vmul.f32 %v443, 0.01
  %v621 = vmul.f32 %v446, 0.01
  %v622 = vmul.f32 %v449, 0.01
  %v623 = vmul.f32 %v452, 0.01
  %v624 = vmul.f32 %v455, 0.01
  %v625 = vmul.f32 %v458, 0.01
  %v626 = vmul.f32 %v461, 0.01
  %v627 = vmul.f32 %v464, 0.01
  %v628 = vmul.f32 %v467, 0.01
  %v629 = vmul.f32 %v470, 0.01
  %v630 = vmul.f32 %v473, 0.01
  %v631 = vmul.f32 %v476, 0.01
  %v632 = vmul.f32 %v479, 0.01
  %v633 = vmul.f32 %v482, 0.01
  %v634 = vmul.f32 %v485, 0.01
  %v635 = vmul.f32 %v488, 0.01
  %v636 = vmul.f32 %v491, 0.01
  %v637 = vmul.f32 %v494, 0.01
  %v638 = vmul.f32 %v497, 0.01
  %v639 = vmul.f32 %v500, 0.01
  %v640 = vmul.f32 %v503, 0.01
  %v641 = vmul.f32 %v506, 0.01
  %v642 = vmul.f32 %v509, 0.01
  %v643 = vmul.f32 %v512, 0.01
  %v644 = vmul.f32 %v515, 0.01
  %v645 = vsel %vm517, %v326, %v581
  %v646 = vsel %vm518, %v329, %v582
  %v647 = vsel %vm519, %v332, %v583
  %v648 = vsel %vm520, %v335, %v584
  %v649 = vsel %vm521, %v338, %v585
  %v650 = vsel %vm522, %v341, %v586
  %v651 = vsel %vm523, %v344, %v587
  %v652 = vsel %vm524, %v347, %v588
  %v653 = vsel %vm525, %v350, %v589
  %v654 = vsel %vm526, %v353, %v590
  %v655 = vsel %vm527, %v356, %v591
  %v656 = vsel %vm528, %v359, %v592
  %v657 = vsel %vm529, %v362, %v593
  %v658 = vsel %vm530, %v365, %v594
  %v659 = vsel %vm531, %v368, %v595
  %v660 = vsel %vm532, %v371, %v596
  %v661 = vsel %vm533, %v374, %v597
  %v662 = vsel %vm534, %v377, %v598
  %v663 = vsel %vm535, %v380, %v599
  %v664 = vsel %vm536, %v383, %v600
  %v665 = vsel %vm537, %v386, %v601
  %v666 = vsel %vm538, %v389, %v602
  %v667 = vsel %vm539, %v392, %v603
  %v668 = vsel %vm540, %v395, %v604
  %v669 = vsel %vm541, %v398, %v605
  %v670 = vsel %vm542, %v401, %v606
  %v671 = vsel %vm543, %v404, %v607
  %v672 = vsel %vm544, %v407, %v608
  %v673 = vsel %vm545, %v410, %v609
  %v674 = vsel %vm546, %v413, %v610
  %v675 = vsel %vm547, %v416, %v611
  %v676 = vsel %vm548, %v419, %v612
  %v677 = vsel %vm549, %v422, %v613
  %v678 = vsel %vm550, %v425, %v614
  %v679 = vsel %vm551, %v428, %v615
  %v680 = vsel %vm552, %v431, %v616
  %v681 = vsel %vm553, %v434, %v617
  %v682 = vsel %vm554, %v437, %v618
  %v683 = vsel %vm555, %v440, %v619
  %v684 = vsel %vm556, %v443, %v620
  %v685 = vsel %vm557, %v446, %v621
  %v686 = vsel %vm558, %v449, %v622
  %v687 = vsel %vm559, %v452, %v623
  %v688 = vsel %vm560, %v455, %v624
  %v689 = vsel %vm561, %v458, %v625
  %v690 = vsel %vm562, %v461, %v626
  %v691 = vsel %vm563, %v464, %v627
  %v692 = vsel %vm564, %v467, %v628
  %v693 = vsel %vm565, %v470, %v629
  %v694 = vsel %vm566, %v473, %v630
  %v695 = vsel %vm567, %v476, %v631
  %v696 = vsel %vm568, %v479, %v632
  %v697 = vsel %vm569, %v482, %v633
  %v698 = vsel %vm570, %v485, %v634
  %v699 = vsel %vm571, %v488, %v635
  %v700 = vsel %vm572, %v491, %v636
  %v701 = vsel %vm573, %v494, %v637
  %v702 = vsel %vm574, %v497, %v638
  %v703 = vsel %vm575, %v500, %v639
  %v704 = vsel %vm576, %v503, %v640
  %v705 = vsel %vm577, %v506, %v641
  %v706 = vsel %vm578, %v509, %v642
  %v707 = vsel %vm579, %v512, %v643
  %v708 = vsel %vm580, %v515, %v644
  %v709 = vmax.f32 %v645, %v646
  %v710 = vmax.f32 %v709, %v647
  %v711 = vmax.f32 %v710, %v648
  %v712 = vmax.f32 %v711, %v649
  %v713 = vmax.f32 %v712, %v650
  %v714 = vmax.f32 %v713, %v651
  %v715 = vmax.f32 %v714, %v652
  %v716 = vmax.f32 %v653, %v654
  %v717 = vmax.f32 %v716, %v655
  %v718 = vmax.f32 %v717, %v656
  %v719 = vmax.f32 %v718, %v657
  %v720 = vmax.f32 %v719, %v658
  %v721 = vmax.f32 %v720, %v659
  %v722 = vmax.f32 %v721, %v660
  %v723 = vmax.f32 %v661, %v662
  %v724 = vmax.f32 %v723, %v663
  %v725 = vmax.f32 %v724, %v664
  %v726 = vmax.f32 %v725, %v665
  %v727 = vmax.f32 %v726, %v666
  %v728 = vmax.f32 %v727, %v667
  %v729 = vmax.f32 %v728, %v668
  %v730 = vmax.f32 %v669, %v670
  %v731 = vmax.f32 %v730, %v671
  %v732 = vmax.f32 %v731, %v672
  %v733 = vmax.f32 %v732, %v673
  %v734 = vmax.f32 %v733, %v674
  %v735 = vmax.f32 %v734, %v675
  %v736 = vmax.f32 %v735, %v676
  %v737 = vmax.f32 %v677, %v678
  %v738 = vmax.f32 %v737, %v679
  %v739 = vmax.f32 %v738, %v680
  %v740 = vmax.f32 %v739, %v681
  %v741 = vmax.f32 %v740, %v682
  %v742 = vmax.f32 %v741, %v683
  %v743 = vmax.f32 %v742, %v684
  %v744 = vmax.f32 %v685, %v686
  %v745 = vmax.f32 %v744, %v687
  %v746 = vmax.f32 %v745, %v688
  %v747 = vmax.f32 %v746, %v689
  %v748 = vmax.f32 %v747, %v690
  %v749 = vmax.f32 %v748, %v691
  %v750 = vmax.f32 %v749, %v692
  %v751 = vmax.f32 %v693, %v694
  %v752 = vmax.f32 %v751, %v695
  %v753 = vmax.f32 %v752, %v696
  %v754 = vmax.f32 %v753, %v697
  %v755 = vmax.f32 %v754, %v698
  %v756 = vmax.f32 %v755, %v699
  %v757 = vmax.f32 %v756, %v700
  %v758 = vmax.f32 %v701, %v702
  %v759 = vmax.f32 %v758, %v703
  %v760 = vmax.f32 %v759, %v704
  %v761 = vmax.f32 %v760, %v705
  %v762 = vmax.f32 %v761, %v706
  %v763 = vmax.f32 %v762, %v707
  %v764 = vmax.f32 %v763, %v708
  %v765 = vpack.c.bf16 %v722, %v715
  %v766 = vpack.c.bf16 %v736, %v729
  %v767 = vpack.c.bf16 %v750, %v743
  %v768 = vpack.c.bf16 %v764, %v757
  %v769 = vld [vmem:[%s3] sm:$0xff]
  %v770 = vld [vmem:[%s3 + $0x8] sm:$0xff]
  %v771 = vld [vmem:[%s3 + $0x10] sm:$0xff]
  %v772 = vld [vmem:[%s3 + $0x18] sm:$0xff]
  %v773 = vld [vmem:[%s3 + $0x20] sm:$0xff]
  %v774 = vld [vmem:[%s3 + $0x28] sm:$0xff]
  %v775 = vld [vmem:[%s3 + $0x30] sm:$0xff]
  %v776 = vld [vmem:[%s3 + $0x38] sm:$0xff]
  %v777 = vld [vmem:[%s3 + $0x40] sm:$0xff]
  %v778 = vld [vmem:[%s3 + $0x48] sm:$0xff]
  %v779 = vld [vmem:[%s3 + $0x50] sm:$0xff]
  %v780 = vld [vmem:[%s3 + $0x58] sm:$0xff]
  %v781 = vld [vmem:[%s3 + $0x60] sm:$0x11]
  %v782 = vld [vmem:[%s3 + $0x68] sm:$0x11]
  %v783 = vld [vmem:[%s4] sm:$0xf]
  %v785 = vperm.slane %v783, 0
  %v786 = vperm.slane %v783, 1
  %v787 = vperm.slane %v783, 2
  %v788 = vperm.slane %v783, 3
  %v807 = vunpack.c.l.b16 %v769
  %v808 = vunpack.c.h.b16 %v769
  %v809 = vunpack.c.l.b16 %v770
  %v810 = vunpack.c.h.b16 %v770
  %v811 = vunpack.c.l.b16 %v771
  %v812 = vunpack.c.h.b16 %v771
  %v813 = vunpack.c.l.b16 %v772
  %v814 = vunpack.c.h.b16 %v772
  %v815 = vunpack.c.l.b16 %v773
  %v816 = vunpack.c.h.b16 %v773
  %v817 = vunpack.c.l.b16 %v774
  %v818 = vunpack.c.h.b16 %v774
  %v819 = vunpack.c.l.b16 %v775
  %v820 = vunpack.c.h.b16 %v775
  %v821 = vunpack.c.l.b16 %v776
  %v822 = vunpack.c.h.b16 %v776
  %v823 = vunpack.c.l.b16 %v777
  %v824 = vunpack.c.h.b16 %v777
  %v825 = vunpack.c.l.b16 %v778
  %v826 = vunpack.c.h.b16 %v778
  %v827 = vunpack.c.l.b16 %v779
  %v828 = vunpack.c.h.b16 %v779
  %v829 = vunpack.c.l.b16 %v780
  %v830 = vunpack.c.h.b16 %v780
  %v831 = vunpack.c.l.b16 %v781
  %v832 = vunpack.c.h.b16 %v781
  %v833 = vunpack.c.l.b16 %v782
  %v834 = vunpack.c.h.b16 %v782
  %v835 = vpack.c.b16 %v811, %v807
  %v836 = vpack.c.b16 %v812, %v808
  %v837 = vpack.c.b16 %v813, %v809
  %v838 = vpack.c.b16 %v814, %v810
  %v839 = vpack.c.b16 %v819, %v815
  %v840 = vpack.c.b16 %v820, %v816
  %v841 = vpack.c.b16 %v821, %v817
  %v842 = vpack.c.b16 %v822, %v818
  %v843 = vpack.c.b16 %v827, %v823
  %v844 = vpack.c.b16 %v828, %v824
  %v845 = vpack.c.b16 %v829, %v825
  %v846 = vpack.c.b16 %v830, %v826
  %v847 = vpack.c.b16 %v831, %v831
  %v848 = vpack.c.b16 %v832, %v832
  %v849 = vpack.c.b16 %v833, %v833
  %v850 = vpack.c.b16 %v834, %v834
  %vm863 = vcmask 408576
  %v865 = vsel %vm863, %v765, 0
  %v868 = vsel %vm863, %v766, 0
  %v871 = vsel %vm863, %v767, 0
  %v874 = vsel %vm863, %v768, 0
  %vm876 = vcmask 1040384
  %v878 = vsel %vm876, %v847, 0
  %v881 = vsel %vm876, %v848, 0
  %v884 = vsel %vm876, %v849, 0
  %v887 = vsel %vm876, %v850, 0
  %889 = vmatpush.bf16.msra.mxu0 0
  %890 = vmatpush.bf16.msra.mxu0 0
  %891 = vmatpush.bf16.msra.mxu0 0
  %892 = vmatpush.bf16.msra.mxu0 0
  %893 = vmatpush.bf16.msra.mxu0 %v878
  %894 = vmatpush.bf16.msra.mxu0 %v843
  %895 = vmatpush.bf16.msra.mxu0 %v839
  %896 = vmatpush.bf16.msra.mxu0 %v835
  %897 = vmatmul.bf16.gmra.mxu0 %v865
  %v898 = vpop.f32.mrf.mxu0
  %v899 = vadd.f32 %v785, %v898
  %v900 = vpop.f32.mrf.mxu0
  %v901 = vadd.f32 %v785, %v900
  %902 = vmatmul.bf16.gmra.mxu0 %v868
  %v903 = vpop.f32.mrf.mxu0
  %v904 = vadd.f32 %v785, %v903
  %v905 = vpop.f32.mrf.mxu0
  %v906 = vadd.f32 %v785, %v905
  %907 = vmatmul.bf16.gmra.mxu0 %v871
  %v908 = vpop.f32.mrf.mxu0
  %v909 = vadd.f32 %v785, %v908
  %v910 = vpop.f32.mrf.mxu0
  %v911 = vadd.f32 %v785, %v910
  %912 = vmatmul.bf16.gmra.mxu0 %v874
  %v913 = vpop.f32.mrf.mxu0
  %v914 = vadd.f32 %v785, %v913
  %v915 = vpop.f32.mrf.mxu0
  %v916 = vadd.f32 %v785, %v915
  %917 = vdwg.mxu0
  %918 = vmatpush.bf16.msra.mxu0 0
  %919 = vmatpush.bf16.msra.mxu0 0
  %920 = vmatpush.bf16.msra.mxu0 0
  %921 = vmatpush.bf16.msra.mxu0 0
  %922 = vmatpush.bf16.msra.mxu0 %v881
  %923 = vmatpush.bf16.msra.mxu0 %v844
  %924 = vmatpush.bf16.msra.mxu0 %v840
  %925 = vmatpush.bf16.msra.mxu0 %v836
  %926 = vmatmul.bf16.gmra.mxu0 %v865
  %v927 = vpop.f32.mrf.mxu0
  %v928 = vadd.f32 %v786, %v927
  %v929 = vpop.f32.mrf.mxu0
  %v930 = vadd.f32 %v786, %v929
  %931 = vmatmul.bf16.gmra.mxu0 %v868
  %v932 = vpop.f32.mrf.mxu0
  %v933 = vadd.f32 %v786, %v932
  %v934 = vpop.f32.mrf.mxu0
  %v935 = vadd.f32 %v786, %v934
  %936 = vmatmul.bf16.gmra.mxu0 %v871
  %v937 = vpop.f32.mrf.mxu0
  %v938 = vadd.f32 %v786, %v937
  %v939 = vpop.f32.mrf.mxu0
  %v940 = vadd.f32 %v786, %v939
  %941 = vmatmul.bf16.gmra.mxu0 %v874
  %v942 = vpop.f32.mrf.mxu0
  %v943 = vadd.f32 %v786, %v942
  %v944 = vpop.f32.mrf.mxu0
  %v945 = vadd.f32 %v786, %v944
  %946 = vdwg.mxu0
  %947 = vmatpush.bf16.msra.mxu0 0
  %948 = vmatpush.bf16.msra.mxu0 0
  %949 = vmatpush.bf16.msra.mxu0 0
  %950 = vmatpush.bf16.msra.mxu0 0
  %951 = vmatpush.bf16.msra.mxu0 %v884
  %952 = vmatpush.bf16.msra.mxu0 %v845
  %953 = vmatpush.bf16.msra.mxu0 %v841
  %954 = vmatpush.bf16.msra.mxu0 %v837
  %955 = vmatmul.bf16.gmra.mxu0 %v865
  %v956 = vpop.f32.mrf.mxu0
  %v957 = vadd.f32 %v787, %v956
  %v958 = vpop.f32.mrf.mxu0
  %v959 = vadd.f32 %v787, %v958
  %960 = vmatmul.bf16.gmra.mxu0 %v868
  %v961 = vpop.f32.mrf.mxu0
  %v962 = vadd.f32 %v787, %v961
  %v963 = vpop.f32.mrf.mxu0
  %v964 = vadd.f32 %v787, %v963
  %965 = vmatmul.bf16.gmra.mxu0 %v871
  %v966 = vpop.f32.mrf.mxu0
  %v967 = vadd.f32 %v787, %v966
  %v968 = vpop.f32.mrf.mxu0
  %v969 = vadd.f32 %v787, %v968
  %970 = vmatmul.bf16.gmra.mxu0 %v874
  %v971 = vpop.f32.mrf.mxu0
  %v972 = vadd.f32 %v787, %v971
  %v973 = vpop.f32.mrf.mxu0
  %v974 = vadd.f32 %v787, %v973
  %975 = vdwg.mxu0
  %976 = vmatpush.bf16.msra.mxu0 0
  %977 = vmatpush.bf16.msra.mxu0 0
  %978 = vmatpush.bf16.msra.mxu0 0
  %979 = vmatpush.bf16.msra.mxu0 0
  %980 = vmatpush.bf16.msra.mxu0 %v887
  %981 = vmatpush.bf16.msra.mxu0 %v846
  %982 = vmatpush.bf16.msra.mxu0 %v842
  %983 = vmatpush.bf16.msra.mxu0 %v838
  %984 = vmatmul.bf16.gmra.mxu0 %v865
  %v985 = vpop.f32.mrf.mxu0
  %v986 = vadd.f32 %v788, %v985
  %v987 = vpop.f32.mrf.mxu0
  %v988 = vadd.f32 %v788, %v987
  %989 = vmatmul.bf16.gmra.mxu0 %v868
  %v990 = vpop.f32.mrf.mxu0
  %v991 = vadd.f32 %v788, %v990
  %v992 = vpop.f32.mrf.mxu0
  %v993 = vadd.f32 %v788, %v992
  %994 = vmatmul.bf16.gmra.mxu0 %v871
  %v995 = vpop.f32.mrf.mxu0
  %v996 = vadd.f32 %v788, %v995
  %v997 = vpop.f32.mrf.mxu0
  %v998 = vadd.f32 %v788, %v997
  %999 = vmatmul.bf16.gmra.mxu0 %v874
  %v1000 = vpop.f32.mrf.mxu0
  %v1001 = vadd.f32 %v788, %v1000
  %v1002 = vpop.f32.mrf.mxu0
  %v1003 = vadd.f32 %v788, %v1002
  %1004 = vdwg.mxu0
  %v1005 = vlaneseq
  %v1006 = vand.u32 %v1005, 127
  %v1007 = vadd.s32 %v1006, 128
  %v1008 = vadd.s32 %v1006, 256
  %v1009 = vadd.s32 %v1006, 384
  %vm1010 = vcmp.lt.s32.totalorder %v1006, 0
  %v1011 = vsub.s32 0, %v1006
  %v1012 = vsel %vm1010, %v1011, %v1006
  %v1013 = vshrl.u32 %v1012, 7
  %v1014 = vand.u32 %v1012, 127
  %v1015 = vsub.s32 0, %v1014
  %v1016 = vsel %vm1010, %v1015, %v1014
  %vm1017 = vcmp.lt.s32.totalorder %v1007, 0
  %v1018 = vsub.s32 0, %v1007
  %v1019 = vsel %vm1017, %v1018, %v1007
  %v1020 = vshrl.u32 %v1019, 7
  %v1021 = vand.u32 %v1019, 127
  %v1022 = vsub.s32 0, %v1021
  %v1023 = vsel %vm1017, %v1022, %v1021
  %vm1024 = vcmp.lt.s32.totalorder %v1008, 0
  %v1025 = vsub.s32 0, %v1008
  %v1026 = vsel %vm1024, %v1025, %v1008
  %v1027 = vshrl.u32 %v1026, 7
  %v1028 = vand.u32 %v1026, 127
  %v1029 = vsub.s32 0, %v1028
  %v1030 = vsel %vm1024, %v1029, %v1028
  %vm1031 = vcmp.lt.s32.totalorder %v1009, 0
  %v1032 = vsub.s32 0, %v1009
  %v1033 = vsel %vm1031, %v1032, %v1009
  %v1034 = vshrl.u32 %v1033, 7
  %v1035 = vand.u32 %v1033, 127
  %v1036 = vsub.s32 0, %v1035
  %v1037 = vsel %vm1031, %v1036, %v1035
  %vm1038 = vcmp.ne.s32.totalorder %v1016, 0
  %vm1039 = vcmp.ne.s32.totalorder %v1023, 0
  %vm1040 = vcmp.ne.s32.totalorder %v1030, 0
  %vm1041 = vcmp.ne.s32.totalorder %v1037, 0
  %vm1042 = vcmp.lt.s32.totalorder %v1016, 0
  %vm1043 = vcmp.lt.s32.totalorder %v1023, 0
  %vm1044 = vcmp.lt.s32.totalorder %v1030, 0
  %vm1045 = vcmp.lt.s32.totalorder %v1037, 0
  %vm1046 = vmand %vm1042, %vm1038
  %vm1047 = vmand %vm1043, %vm1039
  %vm1048 = vmand %vm1044, %vm1040
  %vm1049 = vmand %vm1045, %vm1041
  %v1050 = vadd.s32 %v1016, 128
  %v1051 = vadd.s32 %v1023, 128
  %v1052 = vadd.s32 %v1030, 128
  %v1053 = vadd.s32 %v1037, 128
  %v1054 = vsel %vm1046, %v1050, %v1016
  %v1055 = vsel %vm1047, %v1051, %v1023
  %v1056 = vsel %vm1048, %v1052, %v1030
  %v1057 = vsel %vm1049, %v1053, %v1037
  %vm1058 = vcmp.lt.s32.totalorder %v1054, 64
  %vm1059 = vcmp.lt.s32.totalorder %v1055, 64
  %vm1060 = vcmp.lt.s32.totalorder %v1056, 64
  %vm1061 = vcmp.lt.s32.totalorder %v1057, 64
  %v1062 = vsel %vm1058, %v899, %v916
  %v1063 = vsel %vm1059, %v928, %v945
  %v1064 = vsel %vm1060, %v957, %v974
  %v1065 = vsel %vm1061, %v986, %v1003
  %v1066 = vsel %vm1058, %v901, %v914
  %v1067 = vsel %vm1059, %v930, %v943
  %v1068 = vsel %vm1060, %v959, %v972
  %v1069 = vsel %vm1061, %v988, %v1001
  %v1070 = vsel %vm1058, %v904, %v911
  %v1071 = vsel %vm1059, %v933, %v940
  %v1072 = vsel %vm1060, %v962, %v969
  %v1073 = vsel %vm1061, %v991, %v998
  %v1074 = vsel %vm1058, %v906, %v909
  %v1075 = vsel %vm1059, %v935, %v938
  %v1076 = vsel %vm1060, %v964, %v967
  %v1077 = vsel %vm1061, %v993, %v996
  %v1078 = vsel %vm1058, %v909, %v906
  %v1079 = vsel %vm1059, %v938, %v935
  %v1080 = vsel %vm1060, %v967, %v964
  %v1081 = vsel %vm1061, %v996, %v993
  %v1082 = vsel %vm1058, %v911, %v904
  %v1083 = vsel %vm1059, %v940, %v933
  %v1084 = vsel %vm1060, %v969, %v962
  %v1085 = vsel %vm1061, %v998, %v991
  %v1086 = vsel %vm1058, %v914, %v901
  %v1087 = vsel %vm1059, %v943, %v930
  %v1088 = vsel %vm1060, %v972, %v959
  %v1089 = vsel %vm1061, %v1001, %v988
  %v1090 = vsel %vm1058, %v916, %v899
  %v1091 = vsel %vm1059, %v945, %v928
  %v1092 = vsel %vm1060, %v974, %v957
  %v1093 = vsel %vm1061, %v1003, %v986
  %v1094 = vld [vmem:[%s5] sm:$0xff]
  %v1095 = vld [vmem:[%s5 + $0x8] sm:$0xff]
  %v1096 = vld [vmem:[%s5 + $0x10] sm:$0xff]
  %v1097 = vld [vmem:[%s5 + $0x18] sm:$0xff]
  %v1098 = vld [vmem:[%s5 + $0x20] sm:$0xff]
  %v1099 = vld [vmem:[%s5 + $0x28] sm:$0xff]
  %v1100 = vld [vmem:[%s5 + $0x30] sm:$0xff]
  %v1101 = vld [vmem:[%s5 + $0x38] sm:$0xff]
  %v1102 = vld [vmem:[%s5 + $0x40] sm:$0xff]
  %v1103 = vld [vmem:[%s5 + $0x48] sm:$0xff]
  %v1104 = vld [vmem:[%s5 + $0x50] sm:$0xff]
  %v1105 = vld [vmem:[%s5 + $0x58] sm:$0xff]
  %v1106 = vld [vmem:[%s5 + $0x60] sm:$0xff]
  %v1107 = vld [vmem:[%s5 + $0x68] sm:$0xff]
  %v1108 = vld [vmem:[%s5 + $0x70] sm:$0xff]
  %v1109 = vld [vmem:[%s5 + $0x78] sm:$0xff]
  %v1110 = vld [vmem:[%s5 + $0x80] sm:$0xff]
  %v1111 = vld [vmem:[%s5 + $0x88] sm:$0xff]
  %v1112 = vld [vmem:[%s5 + $0x90] sm:$0xff]
  %v1113 = vld [vmem:[%s5 + $0x98] sm:$0xff]
  %v1114 = vld [vmem:[%s5 + $0xa0] sm:$0xff]
  %v1115 = vld [vmem:[%s5 + $0xa8] sm:$0xff]
  %v1116 = vld [vmem:[%s5 + $0xb0] sm:$0xff]
  %v1117 = vld [vmem:[%s5 + $0xb8] sm:$0xff]
  %v1118 = vld [vmem:[%s5 + $0xc0] sm:$0xff]
  %v1119 = vld [vmem:[%s5 + $0xc8] sm:$0xff]
  %v1120 = vld [vmem:[%s5 + $0xd0] sm:$0xff]
  %v1121 = vld [vmem:[%s5 + $0xd8] sm:$0xff]
  %v1122 = vld [vmem:[%s5 + $0xe0] sm:$0xff]
  %v1123 = vld [vmem:[%s5 + $0xe8] sm:$0xff]
  %v1124 = vld [vmem:[%s5 + $0xf0] sm:$0xff]
  %v1125 = vld [vmem:[%s5 + $0xf8] sm:$0xff]
  %v1158 = vunpack.c.l.b16 %v1094
  %v1159 = vunpack.c.h.b16 %v1094
  %v1160 = vunpack.c.l.b16 %v1095
  %v1161 = vunpack.c.h.b16 %v1095
  %v1162 = vunpack.c.l.b16 %v1096
  %v1163 = vunpack.c.h.b16 %v1096
  %v1164 = vunpack.c.l.b16 %v1097
  %v1165 = vunpack.c.h.b16 %v1097
  %v1166 = vunpack.c.l.b16 %v1098
  %v1167 = vunpack.c.h.b16 %v1098
  %v1168 = vunpack.c.l.b16 %v1099
  %v1169 = vunpack.c.h.b16 %v1099
  %v1170 = vunpack.c.l.b16 %v1100
  %v1171 = vunpack.c.h.b16 %v1100
  %v1172 = vunpack.c.l.b16 %v1101
  %v1173 = vunpack.c.h.b16 %v1101
  %v1174 = vunpack.c.l.b16 %v1102
  %v1175 = vunpack.c.h.b16 %v1102
  %v1176 = vunpack.c.l.b16 %v1103
  %v1177 = vunpack.c.h.b16 %v1103
  %v1178 = vunpack.c.l.b16 %v1104
  %v1179 = vunpack.c.h.b16 %v1104
  %v1180 = vunpack.c.l.b16 %v1105
  %v1181 = vunpack.c.h.b16 %v1105
  %v1182 = vunpack.c.l.b16 %v1106
  %v1183 = vunpack.c.h.b16 %v1106
  %v1184 = vunpack.c.l.b16 %v1107
  %v1185 = vunpack.c.h.b16 %v1107
  %v1186 = vunpack.c.l.b16 %v1108
  %v1187 = vunpack.c.h.b16 %v1108
  %v1188 = vunpack.c.l.b16 %v1109
  %v1189 = vunpack.c.h.b16 %v1109
  %v1190 = vunpack.c.l.b16 %v1110
  %v1191 = vunpack.c.h.b16 %v1110
  %v1192 = vunpack.c.l.b16 %v1111
  %v1193 = vunpack.c.h.b16 %v1111
  %v1194 = vunpack.c.l.b16 %v1112
  %v1195 = vunpack.c.h.b16 %v1112
  %v1196 = vunpack.c.l.b16 %v1113
  %v1197 = vunpack.c.h.b16 %v1113
  %v1198 = vunpack.c.l.b16 %v1114
  %v1199 = vunpack.c.h.b16 %v1114
  %v1200 = vunpack.c.l.b16 %v1115
  %v1201 = vunpack.c.h.b16 %v1115
  %v1202 = vunpack.c.l.b16 %v1116
  %v1203 = vunpack.c.h.b16 %v1116
  %v1204 = vunpack.c.l.b16 %v1117
  %v1205 = vunpack.c.h.b16 %v1117
  %v1206 = vunpack.c.l.b16 %v1118
  %v1207 = vunpack.c.h.b16 %v1118
  %v1208 = vunpack.c.l.b16 %v1119
  %v1209 = vunpack.c.h.b16 %v1119
  %v1210 = vunpack.c.l.b16 %v1120
  %v1211 = vunpack.c.h.b16 %v1120
  %v1212 = vunpack.c.l.b16 %v1121
  %v1213 = vunpack.c.h.b16 %v1121
  %v1214 = vunpack.c.l.b16 %v1122
  %v1215 = vunpack.c.h.b16 %v1122
  %v1216 = vunpack.c.l.b16 %v1123
  %v1217 = vunpack.c.h.b16 %v1123
  %v1218 = vunpack.c.l.b16 %v1124
  %v1219 = vunpack.c.h.b16 %v1124
  %v1220 = vunpack.c.l.b16 %v1125
  %v1221 = vunpack.c.h.b16 %v1125
  %v1222 = vpack.c.b16 %v1162, %v1158
  %v1223 = vpack.c.b16 %v1163, %v1159
  %v1224 = vpack.c.b16 %v1164, %v1160
  %v1225 = vpack.c.b16 %v1165, %v1161
  %v1226 = vpack.c.b16 %v1170, %v1166
  %v1227 = vpack.c.b16 %v1171, %v1167
  %v1228 = vpack.c.b16 %v1172, %v1168
  %v1229 = vpack.c.b16 %v1173, %v1169
  %v1230 = vpack.c.b16 %v1178, %v1174
  %v1231 = vpack.c.b16 %v1179, %v1175
  %v1232 = vpack.c.b16 %v1180, %v1176
  %v1233 = vpack.c.b16 %v1181, %v1177
  %v1234 = vpack.c.b16 %v1186, %v1182
  %v1235 = vpack.c.b16 %v1187, %v1183
  %v1236 = vpack.c.b16 %v1188, %v1184
  %v1237 = vpack.c.b16 %v1189, %v1185
  %v1238 = vpack.c.b16 %v1194, %v1190
  %v1239 = vpack.c.b16 %v1195, %v1191
  %v1240 = vpack.c.b16 %v1196, %v1192
  %v1241 = vpack.c.b16 %v1197, %v1193
  %v1242 = vpack.c.b16 %v1202, %v1198
  %v1243 = vpack.c.b16 %v1203, %v1199
  %v1244 = vpack.c.b16 %v1204, %v1200
  %v1245 = vpack.c.b16 %v1205, %v1201
  %v1246 = vpack.c.b16 %v1210, %v1206
  %v1247 = vpack.c.b16 %v1211, %v1207
  %v1248 = vpack.c.b16 %v1212, %v1208
  %v1249 = vpack.c.b16 %v1213, %v1209
  %v1250 = vpack.c.b16 %v1218, %v1214
  %v1251 = vpack.c.b16 %v1219, %v1215
  %v1252 = vpack.c.b16 %v1220, %v1216
  %v1253 = vpack.c.b16 %v1221, %v1217
  %1286 = vmatpush.bf16.msra.mxu0 %v1250
  %1287 = vmatpush.bf16.msra.mxu0 %v1246
  %1288 = vmatpush.bf16.msra.mxu0 %v1242
  %1289 = vmatpush.bf16.msra.mxu0 %v1238
  %1290 = vmatpush.bf16.msra.mxu0 %v1234
  %1291 = vmatpush.bf16.msra.mxu0 %v1230
  %1292 = vmatpush.bf16.msra.mxu0 %v1226
  %1293 = vmatpush.bf16.msra.mxu0 %v1222
  %1294 = vmatmul.bf16.gmra.mxu0 0
  %v1295 = vpop.f32.mrf.mxu0
  %v1296 = vadd.f32 0.0, %v1295
  %v1297 = vpop.f32.mrf.mxu0
  %1298 = vdwg.mxu0
  %1299 = vmatpush.bf16.msra.mxu0 %v1251
  %1300 = vmatpush.bf16.msra.mxu0 %v1247
  %1301 = vmatpush.bf16.msra.mxu0 %v1243
  %1302 = vmatpush.bf16.msra.mxu0 %v1239
  %1303 = vmatpush.bf16.msra.mxu0 %v1235
  %1304 = vmatpush.bf16.msra.mxu0 %v1231
  %1305 = vmatpush.bf16.msra.mxu0 %v1227
  %1306 = vmatpush.bf16.msra.mxu0 %v1223
  %1307 = vmatmul.bf16.gmra.mxu0 0
  %v1308 = vpop.f32.mrf.mxu0
  %v1309 = vadd.f32 0.0, %v1308
  %v1310 = vpop.f32.mrf.mxu0
  %1311 = vdwg.mxu0
  %1312 = vmatpush.bf16.msra.mxu0 %v1252
  %1313 = vmatpush.bf16.msra.mxu0 %v1248
  %1314 = vmatpush.bf16.msra.mxu0 %v1244
  %1315 = vmatpush.bf16.msra.mxu0 %v1240
  %1316 = vmatpush.bf16.msra.mxu0 %v1236
  %1317 = vmatpush.bf16.msra.mxu0 %v1232
  %1318 = vmatpush.bf16.msra.mxu0 %v1228
  %1319 = vmatpush.bf16.msra.mxu0 %v1224
  %1320 = vmatmul.bf16.gmra.mxu0 0
  %v1321 = vpop.f32.mrf.mxu0
  %v1322 = vadd.f32 0.0, %v1321
  %v1323 = vpop.f32.mrf.mxu0
  %1324 = vdwg.mxu0
  %1325 = vmatpush.bf16.msra.mxu0 %v1253
  %1326 = vmatpush.bf16.msra.mxu0 %v1249
  %1327 = vmatpush.bf16.msra.mxu0 %v1245
  %1328 = vmatpush.bf16.msra.mxu0 %v1241
  %1329 = vmatpush.bf16.msra.mxu0 %v1237
  %1330 = vmatpush.bf16.msra.mxu0 %v1233
  %1331 = vmatpush.bf16.msra.mxu0 %v1229
  %1332 = vmatpush.bf16.msra.mxu0 %v1225
  %1333 = vmatmul.bf16.gmra.mxu0 0
  %v1334 = vpop.f32.mrf.mxu0
  %v1335 = vadd.f32 0.0, %v1334
  %v1336 = vpop.f32.mrf.mxu0
  %1337 = vdwg.mxu0
  %v1338 = vadd.f32 %v1062, %v1296
  %v1339 = vadd.f32 %v1063, %v1309
  %v1340 = vadd.f32 %v1064, %v1322
  %v1341 = vadd.f32 %v1065, %v1335
  %v1342 = vxor.u32 %v1338, 2147483648
  %v1343 = vxor.u32 %v1339, 2147483648
  %v1344 = vxor.u32 %v1340, 2147483648
  %v1345 = vmul.f32 %v1342, 1.442695
  %v1346 = vpow.pop %v1345
  %v1347 = vmul.f32 %v1343, 1.442695
  %v1348 = vpow.pop %v1347
  %v1349 = vmul.f32 %v1344, 1.442695
  %v1350 = vpow.pop %v1349
  %v1351 = vadd.f32 %v1346, 1.0
  %v1352 = vadd.f32 %v1348, 1.0
  %v1353 = vadd.f32 %v1350, 1.0
  %v1354 = vrcp.pop %v1351
  %v1355 = vmul.f32 %v1351, %v1354
  %v1356 = vsub.f32 1.0, %v1355
  %v1357 = vmul.f32 %v1354, %v1356
  %v1358 = vadd.f32 %v1354, %v1357
  %vm1359 = vweird.f32 %v1351
  %vm1360 = vweird.f32 %v1354
  %vm1361 = vmor %vm1359, %vm1360
  %v1362 = vsel %vm1361, %v1354, %v1358
  %v1363 = vand.u32 2147483647, %v1351
  %vm1364 = vcmp.eq.f32.partialorder %v1363, 8.507059e+37
  %v1365 = vand.u32 %v1351, 2147483648
  %v1366 = vor.u32 1.1754944e-38, %v1365
  %v1367 = vsel %vm1364, %v1366, %v1362
  %v1368 = vmul.f32 1.0, %v1367
  %v1369 = vrcp.pop %v1352
  %v1370 = vmul.f32 %v1352, %v1369
  %v1371 = vsub.f32 1.0, %v1370
  %v1372 = vmul.f32 %v1369, %v1371
  %v1373 = vadd.f32 %v1369, %v1372
  %vm1374 = vweird.f32 %v1352
  %vm1375 = vweird.f32 %v1369
  %vm1376 = vmor %vm1374, %vm1375
  %v1377 = vsel %vm1376, %v1369, %v1373
  %v1378 = vand.u32 2147483647, %v1352
  %vm1379 = vcmp.eq.f32.partialorder %v1378, 8.507059e+37
  %v1380 = vand.u32 %v1352, 2147483648
  %v1381 = vor.u32 1.1754944e-38, %v1380
  %v1382 = vsel %vm1379, %v1381, %v1377
  %v1383 = vmul.f32 1.0, %v1382
  %v1384 = vrcp.pop %v1353
  %v1385 = vmul.f32 %v1353, %v1384
  %v1386 = vsub.f32 1.0, %v1385
  %v1387 = vmul.f32 %v1384, %v1386
  %v1388 = vadd.f32 %v1384, %v1387
  %vm1389 = vweird.f32 %v1353
  %vm1390 = vweird.f32 %v1384
  %vm1391 = vmor %vm1389, %vm1390
  %v1392 = vsel %vm1391, %v1384, %v1388
  %v1393 = vand.u32 2147483647, %v1353
  %vm1394 = vcmp.eq.f32.partialorder %v1393, 8.507059e+37
  %v1395 = vand.u32 %v1353, 2147483648
  %v1396 = vor.u32 1.1754944e-38, %v1395
  %v1397 = vsel %vm1394, %v1396, %v1392
  %v1398 = vmul.f32 1.0, %v1397
  %v1399 = vtanh.pop %v1341
  %v1400 = vmul.f32 %v1383, 0.0
  %v1401 = vmul.f32 %v1368, %v1399
  %v1402 = vadd.f32 %v1400, %v1401
  %v1403 = vtanh.pop %v1402
  %v1404 = vmul.f32 %v1398, %v1403
  %v1405 = vpack.c.bf16 %v1404, %v1404
  %1406 = vmatpush.bf16.msra.mxu0 %v1250
  %1407 = vmatpush.bf16.msra.mxu0 %v1246
  %1408 = vmatpush.bf16.msra.mxu0 %v1242
  %1409 = vmatpush.bf16.msra.mxu0 %v1238
  %1410 = vmatpush.bf16.msra.mxu0 %v1234
  %1411 = vmatpush.bf16.msra.mxu0 %v1230
  %1412 = vmatpush.bf16.msra.mxu0 %v1226
  %1413 = vmatpush.bf16.msra.mxu0 %v1222
  %1414 = vmatmul.bf16.gmra.mxu0 %v1405
  %v1415 = vpop.f32.mrf.mxu0
  %v1416 = vadd.f32 0.0, %v1415
  %v1417 = vpop.f32.mrf.mxu0
  %1418 = vdwg.mxu0
  %1419 = vmatpush.bf16.msra.mxu0 %v1251
  %1420 = vmatpush.bf16.msra.mxu0 %v1247
  %1421 = vmatpush.bf16.msra.mxu0 %v1243
  %1422 = vmatpush.bf16.msra.mxu0 %v1239
  %1423 = vmatpush.bf16.msra.mxu0 %v1235
  %1424 = vmatpush.bf16.msra.mxu0 %v1231
  %1425 = vmatpush.bf16.msra.mxu0 %v1227
  %1426 = vmatpush.bf16.msra.mxu0 %v1223
  %1427 = vmatmul.bf16.gmra.mxu0 %v1405
  %v1428 = vpop.f32.mrf.mxu0
  %v1429 = vadd.f32 0.0, %v1428
  %v1430 = vpop.f32.mrf.mxu0
  %1431 = vdwg.mxu0
  %1432 = vmatpush.bf16.msra.mxu0 %v1252
  %1433 = vmatpush.bf16.msra.mxu0 %v1248
  %1434 = vmatpush.bf16.msra.mxu0 %v1244
  %1435 = vmatpush.bf16.msra.mxu0 %v1240
  %1436 = vmatpush.bf16.msra.mxu0 %v1236
  %1437 = vmatpush.bf16.msra.mxu0 %v1232
  %1438 = vmatpush.bf16.msra.mxu0 %v1228
  %1439 = vmatpush.bf16.msra.mxu0 %v1224
  %1440 = vmatmul.bf16.gmra.mxu0 %v1405
  %v1441 = vpop.f32.mrf.mxu0
  %v1442 = vadd.f32 0.0, %v1441
  %v1443 = vpop.f32.mrf.mxu0
  %1444 = vdwg.mxu0
  %1445 = vmatpush.bf16.msra.mxu0 %v1253
  %1446 = vmatpush.bf16.msra.mxu0 %v1249
  %1447 = vmatpush.bf16.msra.mxu0 %v1245
  %1448 = vmatpush.bf16.msra.mxu0 %v1241
  %1449 = vmatpush.bf16.msra.mxu0 %v1237
  %1450 = vmatpush.bf16.msra.mxu0 %v1233
  %1451 = vmatpush.bf16.msra.mxu0 %v1229
  %1452 = vmatpush.bf16.msra.mxu0 %v1225
  %1453 = vmatmul.bf16.gmra.mxu0 %v1405
  %v1454 = vpop.f32.mrf.mxu0
  %v1455 = vadd.f32 0.0, %v1454
  %v1456 = vpop.f32.mrf.mxu0
  %1457 = vdwg.mxu0
  %v1458 = vadd.f32 %v1066, %v1416
  %v1459 = vadd.f32 %v1067, %v1429
  %v1460 = vadd.f32 %v1068, %v1442
  %v1461 = vadd.f32 %v1069, %v1455
  %v1462 = vxor.u32 %v1458, 2147483648
  %v1463 = vxor.u32 %v1459, 2147483648
  %v1464 = vxor.u32 %v1460, 2147483648
  %v1465 = vmul.f32 %v1462, 1.442695
  %v1466 = vpow.pop %v1465
  %v1467 = vmul.f32 %v1463, 1.442695
  %v1468 = vpow.pop %v1467
  %v1469 = vmul.f32 %v1464, 1.442695
  %v1470 = vpow.pop %v1469
  %v1471 = vadd.f32 %v1466, 1.0
  %v1472 = vadd.f32 %v1468, 1.0
  %v1473 = vadd.f32 %v1470, 1.0
  %v1474 = vrcp.pop %v1471
  %v1475 = vmul.f32 %v1471, %v1474
  %v1476 = vsub.f32 1.0, %v1475
  %v1477 = vmul.f32 %v1474, %v1476
  %v1478 = vadd.f32 %v1474, %v1477
  %vm1479 = vweird.f32 %v1471
  %vm1480 = vweird.f32 %v1474
  %vm1481 = vmor %vm1479, %vm1480
  %v1482 = vsel %vm1481, %v1474, %v1478
  %v1483 = vand.u32 2147483647, %v1471
  %vm1484 = vcmp.eq.f32.partialorder %v1483, 8.507059e+37
  %v1485 = vand.u32 %v1471, 2147483648
  %v1486 = vor.u32 1.1754944e-38, %v1485
  %v1487 = vsel %vm1484, %v1486, %v1482
  %v1488 = vmul.f32 1.0, %v1487
  %v1489 = vrcp.pop %v1472
  %v1490 = vmul.f32 %v1472, %v1489
  %v1491 = vsub.f32 1.0, %v1490
  %v1492 = vmul.f32 %v1489, %v1491
  %v1493 = vadd.f32 %v1489, %v1492
  %vm1494 = vweird.f32 %v1472
  %vm1495 = vweird.f32 %v1489
  %vm1496 = vmor %vm1494, %vm1495
  %v1497 = vsel %vm1496, %v1489, %v1493
  %v1498 = vand.u32 2147483647, %v1472
  %vm1499 = vcmp.eq.f32.partialorder %v1498, 8.507059e+37
  %v1500 = vand.u32 %v1472, 2147483648
  %v1501 = vor.u32 1.1754944e-38, %v1500
  %v1502 = vsel %vm1499, %v1501, %v1497
  %v1503 = vmul.f32 1.0, %v1502
  %v1504 = vrcp.pop %v1473
  %v1505 = vmul.f32 %v1473, %v1504
  %v1506 = vsub.f32 1.0, %v1505
  %v1507 = vmul.f32 %v1504, %v1506
  %v1508 = vadd.f32 %v1504, %v1507
  %vm1509 = vweird.f32 %v1473
  %vm1510 = vweird.f32 %v1504
  %vm1511 = vmor %vm1509, %vm1510
  %v1512 = vsel %vm1511, %v1504, %v1508
  %v1513 = vand.u32 2147483647, %v1473
  %vm1514 = vcmp.eq.f32.partialorder %v1513, 8.507059e+37
  %v1515 = vand.u32 %v1473, 2147483648
  %v1516 = vor.u32 1.1754944e-38, %v1515
  %v1517 = vsel %vm1514, %v1516, %v1512
  %v1518 = vmul.f32 1.0, %v1517
  %v1519 = vtanh.pop %v1461
  %v1520 = vmul.f32 %v1503, %v1402
  %v1521 = vmul.f32 %v1488, %v1519
  %v1522 = vadd.f32 %v1520, %v1521
  %v1523 = vtanh.pop %v1522
  %v1524 = vmul.f32 %v1518, %v1523
  %v1525 = vpack.c.bf16 %v1524, %v1524
  %1526 = vmatpush.bf16.msra.mxu0 %v1250
  %1527 = vmatpush.bf16.msra.mxu0 %v1246
  %1528 = vmatpush.bf16.msra.mxu0 %v1242
  %1529 = vmatpush.bf16.msra.mxu0 %v1238
  %1530 = vmatpush.bf16.msra.mxu0 %v1234
  %1531 = vmatpush.bf16.msra.mxu0 %v1230
  %1532 = vmatpush.bf16.msra.mxu0 %v1226
  %1533 = vmatpush.bf16.msra.mxu0 %v1222
  %1534 = vmatmul.bf16.gmra.mxu0 %v1525
  %v1535 = vpop.f32.mrf.mxu0
  %v1536 = vadd.f32 0.0, %v1535
  %v1537 = vpop.f32.mrf.mxu0
  %1538 = vdwg.mxu0
  %1539 = vmatpush.bf16.msra.mxu0 %v1251
  %1540 = vmatpush.bf16.msra.mxu0 %v1247
  %1541 = vmatpush.bf16.msra.mxu0 %v1243
  %1542 = vmatpush.bf16.msra.mxu0 %v1239
  %1543 = vmatpush.bf16.msra.mxu0 %v1235
  %1544 = vmatpush.bf16.msra.mxu0 %v1231
  %1545 = vmatpush.bf16.msra.mxu0 %v1227
  %1546 = vmatpush.bf16.msra.mxu0 %v1223
  %1547 = vmatmul.bf16.gmra.mxu0 %v1525
  %v1548 = vpop.f32.mrf.mxu0
  %v1549 = vadd.f32 0.0, %v1548
  %v1550 = vpop.f32.mrf.mxu0
  %1551 = vdwg.mxu0
  %1552 = vmatpush.bf16.msra.mxu0 %v1252
  %1553 = vmatpush.bf16.msra.mxu0 %v1248
  %1554 = vmatpush.bf16.msra.mxu0 %v1244
  %1555 = vmatpush.bf16.msra.mxu0 %v1240
  %1556 = vmatpush.bf16.msra.mxu0 %v1236
  %1557 = vmatpush.bf16.msra.mxu0 %v1232
  %1558 = vmatpush.bf16.msra.mxu0 %v1228
  %1559 = vmatpush.bf16.msra.mxu0 %v1224
  %1560 = vmatmul.bf16.gmra.mxu0 %v1525
  %v1561 = vpop.f32.mrf.mxu0
  %v1562 = vadd.f32 0.0, %v1561
  %v1563 = vpop.f32.mrf.mxu0
  %1564 = vdwg.mxu0
  %1565 = vmatpush.bf16.msra.mxu0 %v1253
  %1566 = vmatpush.bf16.msra.mxu0 %v1249
  %1567 = vmatpush.bf16.msra.mxu0 %v1245
  %1568 = vmatpush.bf16.msra.mxu0 %v1241
  %1569 = vmatpush.bf16.msra.mxu0 %v1237
  %1570 = vmatpush.bf16.msra.mxu0 %v1233
  %1571 = vmatpush.bf16.msra.mxu0 %v1229
  %1572 = vmatpush.bf16.msra.mxu0 %v1225
  %1573 = vmatmul.bf16.gmra.mxu0 %v1525
  %v1574 = vpop.f32.mrf.mxu0
  %v1575 = vadd.f32 0.0, %v1574
  %v1576 = vpop.f32.mrf.mxu0
  %1577 = vdwg.mxu0
  %v1578 = vadd.f32 %v1070, %v1536
  %v1579 = vadd.f32 %v1071, %v1549
  %v1580 = vadd.f32 %v1072, %v1562
  %v1581 = vadd.f32 %v1073, %v1575
  %v1582 = vxor.u32 %v1578, 2147483648
  %v1583 = vxor.u32 %v1579, 2147483648
  %v1584 = vxor.u32 %v1580, 2147483648
  %v1585 = vmul.f32 %v1582, 1.442695
  %v1586 = vpow.pop %v1585
  %v1587 = vmul.f32 %v1583, 1.442695
  %v1588 = vpow.pop %v1587
  %v1589 = vmul.f32 %v1584, 1.442695
  %v1590 = vpow.pop %v1589
  %v1591 = vadd.f32 %v1586, 1.0
  %v1592 = vadd.f32 %v1588, 1.0
  %v1593 = vadd.f32 %v1590, 1.0
  %v1594 = vrcp.pop %v1591
  %v1595 = vmul.f32 %v1591, %v1594
  %v1596 = vsub.f32 1.0, %v1595
  %v1597 = vmul.f32 %v1594, %v1596
  %v1598 = vadd.f32 %v1594, %v1597
  %vm1599 = vweird.f32 %v1591
  %vm1600 = vweird.f32 %v1594
  %vm1601 = vmor %vm1599, %vm1600
  %v1602 = vsel %vm1601, %v1594, %v1598
  %v1603 = vand.u32 2147483647, %v1591
  %vm1604 = vcmp.eq.f32.partialorder %v1603, 8.507059e+37
  %v1605 = vand.u32 %v1591, 2147483648
  %v1606 = vor.u32 1.1754944e-38, %v1605
  %v1607 = vsel %vm1604, %v1606, %v1602
  %v1608 = vmul.f32 1.0, %v1607
  %v1609 = vrcp.pop %v1592
  %v1610 = vmul.f32 %v1592, %v1609
  %v1611 = vsub.f32 1.0, %v1610
  %v1612 = vmul.f32 %v1609, %v1611
  %v1613 = vadd.f32 %v1609, %v1612
  %vm1614 = vweird.f32 %v1592
  %vm1615 = vweird.f32 %v1609
  %vm1616 = vmor %vm1614, %vm1615
  %v1617 = vsel %vm1616, %v1609, %v1613
  %v1618 = vand.u32 2147483647, %v1592
  %vm1619 = vcmp.eq.f32.partialorder %v1618, 8.507059e+37
  %v1620 = vand.u32 %v1592, 2147483648
  %v1621 = vor.u32 1.1754944e-38, %v1620
  %v1622 = vsel %vm1619, %v1621, %v1617
  %v1623 = vmul.f32 1.0, %v1622
  %v1624 = vrcp.pop %v1593
  %v1625 = vmul.f32 %v1593, %v1624
  %v1626 = vsub.f32 1.0, %v1625
  %v1627 = vmul.f32 %v1624, %v1626
  %v1628 = vadd.f32 %v1624, %v1627
  %vm1629 = vweird.f32 %v1593
  %vm1630 = vweird.f32 %v1624
  %vm1631 = vmor %vm1629, %vm1630
  %v1632 = vsel %vm1631, %v1624, %v1628
  %v1633 = vand.u32 2147483647, %v1593
  %vm1634 = vcmp.eq.f32.partialorder %v1633, 8.507059e+37
  %v1635 = vand.u32 %v1593, 2147483648
  %v1636 = vor.u32 1.1754944e-38, %v1635
  %v1637 = vsel %vm1634, %v1636, %v1632
  %v1638 = vmul.f32 1.0, %v1637
  %v1639 = vtanh.pop %v1581
  %v1640 = vmul.f32 %v1623, %v1522
  %v1641 = vmul.f32 %v1608, %v1639
  %v1642 = vadd.f32 %v1640, %v1641
  %v1643 = vtanh.pop %v1642
  %v1644 = vmul.f32 %v1638, %v1643
  %v1645 = vpack.c.bf16 %v1644, %v1644
  %1646 = vmatpush.bf16.msra.mxu0 %v1250
  %1647 = vmatpush.bf16.msra.mxu0 %v1246
  %1648 = vmatpush.bf16.msra.mxu0 %v1242
  %1649 = vmatpush.bf16.msra.mxu0 %v1238
  %1650 = vmatpush.bf16.msra.mxu0 %v1234
  %1651 = vmatpush.bf16.msra.mxu0 %v1230
  %1652 = vmatpush.bf16.msra.mxu0 %v1226
  %1653 = vmatpush.bf16.msra.mxu0 %v1222
  %1654 = vmatmul.bf16.gmra.mxu0 %v1645
  %v1655 = vpop.f32.mrf.mxu0
  %v1656 = vadd.f32 0.0, %v1655
  %v1657 = vpop.f32.mrf.mxu0
  %1658 = vdwg.mxu0
  %1659 = vmatpush.bf16.msra.mxu0 %v1251
  %1660 = vmatpush.bf16.msra.mxu0 %v1247
  %1661 = vmatpush.bf16.msra.mxu0 %v1243
  %1662 = vmatpush.bf16.msra.mxu0 %v1239
  %1663 = vmatpush.bf16.msra.mxu0 %v1235
  %1664 = vmatpush.bf16.msra.mxu0 %v1231
  %1665 = vmatpush.bf16.msra.mxu0 %v1227
  %1666 = vmatpush.bf16.msra.mxu0 %v1223
  %1667 = vmatmul.bf16.gmra.mxu0 %v1645
  %v1668 = vpop.f32.mrf.mxu0
  %v1669 = vadd.f32 0.0, %v1668
  %v1670 = vpop.f32.mrf.mxu0
  %1671 = vdwg.mxu0
  %1672 = vmatpush.bf16.msra.mxu0 %v1252
  %1673 = vmatpush.bf16.msra.mxu0 %v1248
  %1674 = vmatpush.bf16.msra.mxu0 %v1244
  %1675 = vmatpush.bf16.msra.mxu0 %v1240
  %1676 = vmatpush.bf16.msra.mxu0 %v1236
  %1677 = vmatpush.bf16.msra.mxu0 %v1232
  %1678 = vmatpush.bf16.msra.mxu0 %v1228
  %1679 = vmatpush.bf16.msra.mxu0 %v1224
  %1680 = vmatmul.bf16.gmra.mxu0 %v1645
  %v1681 = vpop.f32.mrf.mxu0
  %v1682 = vadd.f32 0.0, %v1681
  %v1683 = vpop.f32.mrf.mxu0
  %1684 = vdwg.mxu0
  %1685 = vmatpush.bf16.msra.mxu0 %v1253
  %1686 = vmatpush.bf16.msra.mxu0 %v1249
  %1687 = vmatpush.bf16.msra.mxu0 %v1245
  %1688 = vmatpush.bf16.msra.mxu0 %v1241
  %1689 = vmatpush.bf16.msra.mxu0 %v1237
  %1690 = vmatpush.bf16.msra.mxu0 %v1233
  %1691 = vmatpush.bf16.msra.mxu0 %v1229
  %1692 = vmatpush.bf16.msra.mxu0 %v1225
  %1693 = vmatmul.bf16.gmra.mxu0 %v1645
  %v1694 = vpop.f32.mrf.mxu0
  %v1695 = vadd.f32 0.0, %v1694
  %v1696 = vpop.f32.mrf.mxu0
  %1697 = vdwg.mxu0
  %v1698 = vadd.f32 %v1074, %v1656
  %v1699 = vadd.f32 %v1075, %v1669
  %v1700 = vadd.f32 %v1076, %v1682
  %v1701 = vadd.f32 %v1077, %v1695
  %v1702 = vxor.u32 %v1698, 2147483648
  %v1703 = vxor.u32 %v1699, 2147483648
  %v1704 = vxor.u32 %v1700, 2147483648
  %v1705 = vmul.f32 %v1702, 1.442695
  %v1706 = vpow.pop %v1705
  %v1707 = vmul.f32 %v1703, 1.442695
  %v1708 = vpow.pop %v1707
  %v1709 = vmul.f32 %v1704, 1.442695
  %v1710 = vpow.pop %v1709
  %v1711 = vadd.f32 %v1706, 1.0
  %v1712 = vadd.f32 %v1708, 1.0
  %v1713 = vadd.f32 %v1710, 1.0
  %v1714 = vrcp.pop %v1711
  %v1715 = vmul.f32 %v1711, %v1714
  %v1716 = vsub.f32 1.0, %v1715
  %v1717 = vmul.f32 %v1714, %v1716
  %v1718 = vadd.f32 %v1714, %v1717
  %vm1719 = vweird.f32 %v1711
  %vm1720 = vweird.f32 %v1714
  %vm1721 = vmor %vm1719, %vm1720
  %v1722 = vsel %vm1721, %v1714, %v1718
  %v1723 = vand.u32 2147483647, %v1711
  %vm1724 = vcmp.eq.f32.partialorder %v1723, 8.507059e+37
  %v1725 = vand.u32 %v1711, 2147483648
  %v1726 = vor.u32 1.1754944e-38, %v1725
  %v1727 = vsel %vm1724, %v1726, %v1722
  %v1728 = vmul.f32 1.0, %v1727
  %v1729 = vrcp.pop %v1712
  %v1730 = vmul.f32 %v1712, %v1729
  %v1731 = vsub.f32 1.0, %v1730
  %v1732 = vmul.f32 %v1729, %v1731
  %v1733 = vadd.f32 %v1729, %v1732
  %vm1734 = vweird.f32 %v1712
  %vm1735 = vweird.f32 %v1729
  %vm1736 = vmor %vm1734, %vm1735
  %v1737 = vsel %vm1736, %v1729, %v1733
  %v1738 = vand.u32 2147483647, %v1712
  %vm1739 = vcmp.eq.f32.partialorder %v1738, 8.507059e+37
  %v1740 = vand.u32 %v1712, 2147483648
  %v1741 = vor.u32 1.1754944e-38, %v1740
  %v1742 = vsel %vm1739, %v1741, %v1737
  %v1743 = vmul.f32 1.0, %v1742
  %v1744 = vrcp.pop %v1713
  %v1745 = vmul.f32 %v1713, %v1744
  %v1746 = vsub.f32 1.0, %v1745
  %v1747 = vmul.f32 %v1744, %v1746
  %v1748 = vadd.f32 %v1744, %v1747
  %vm1749 = vweird.f32 %v1713
  %vm1750 = vweird.f32 %v1744
  %vm1751 = vmor %vm1749, %vm1750
  %v1752 = vsel %vm1751, %v1744, %v1748
  %v1753 = vand.u32 2147483647, %v1713
  %vm1754 = vcmp.eq.f32.partialorder %v1753, 8.507059e+37
  %v1755 = vand.u32 %v1713, 2147483648
  %v1756 = vor.u32 1.1754944e-38, %v1755
  %v1757 = vsel %vm1754, %v1756, %v1752
  %v1758 = vmul.f32 1.0, %v1757
  %v1759 = vtanh.pop %v1701
  %v1760 = vmul.f32 %v1743, %v1642
  %v1761 = vmul.f32 %v1728, %v1759
  %v1762 = vadd.f32 %v1760, %v1761
  %v1763 = vtanh.pop %v1762
  %v1764 = vmul.f32 %v1758, %v1763
  %v1765 = vpack.c.bf16 %v1764, %v1764
  %1766 = vmatpush.bf16.msra.mxu0 %v1250
  %1767 = vmatpush.bf16.msra.mxu0 %v1246
  %1768 = vmatpush.bf16.msra.mxu0 %v1242
  %1769 = vmatpush.bf16.msra.mxu0 %v1238
  %1770 = vmatpush.bf16.msra.mxu0 %v1234
  %1771 = vmatpush.bf16.msra.mxu0 %v1230
  %1772 = vmatpush.bf16.msra.mxu0 %v1226
  %1773 = vmatpush.bf16.msra.mxu0 %v1222
  %1774 = vmatmul.bf16.gmra.mxu0 %v1765
  %v1775 = vpop.f32.mrf.mxu0
  %v1776 = vadd.f32 0.0, %v1775
  %v1777 = vpop.f32.mrf.mxu0
  %1778 = vdwg.mxu0
  %1779 = vmatpush.bf16.msra.mxu0 %v1251
  %1780 = vmatpush.bf16.msra.mxu0 %v1247
  %1781 = vmatpush.bf16.msra.mxu0 %v1243
  %1782 = vmatpush.bf16.msra.mxu0 %v1239
  %1783 = vmatpush.bf16.msra.mxu0 %v1235
  %1784 = vmatpush.bf16.msra.mxu0 %v1231
  %1785 = vmatpush.bf16.msra.mxu0 %v1227
  %1786 = vmatpush.bf16.msra.mxu0 %v1223
  %1787 = vmatmul.bf16.gmra.mxu0 %v1765
  %v1788 = vpop.f32.mrf.mxu0
  %v1789 = vadd.f32 0.0, %v1788
  %v1790 = vpop.f32.mrf.mxu0
  %1791 = vdwg.mxu0
  %1792 = vmatpush.bf16.msra.mxu0 %v1252
  %1793 = vmatpush.bf16.msra.mxu0 %v1248
  %1794 = vmatpush.bf16.msra.mxu0 %v1244
  %1795 = vmatpush.bf16.msra.mxu0 %v1240
  %1796 = vmatpush.bf16.msra.mxu0 %v1236
  %1797 = vmatpush.bf16.msra.mxu0 %v1232
  %1798 = vmatpush.bf16.msra.mxu0 %v1228
  %1799 = vmatpush.bf16.msra.mxu0 %v1224
  %1800 = vmatmul.bf16.gmra.mxu0 %v1765
  %v1801 = vpop.f32.mrf.mxu0
  %v1802 = vadd.f32 0.0, %v1801
  %v1803 = vpop.f32.mrf.mxu0
  %1804 = vdwg.mxu0
  %1805 = vmatpush.bf16.msra.mxu0 %v1253
  %1806 = vmatpush.bf16.msra.mxu0 %v1249
  %1807 = vmatpush.bf16.msra.mxu0 %v1245
  %1808 = vmatpush.bf16.msra.mxu0 %v1241
  %1809 = vmatpush.bf16.msra.mxu0 %v1237
  %1810 = vmatpush.bf16.msra.mxu0 %v1233
  %1811 = vmatpush.bf16.msra.mxu0 %v1229
  %1812 = vmatpush.bf16.msra.mxu0 %v1225
  %1813 = vmatmul.bf16.gmra.mxu0 %v1765
  %v1814 = vpop.f32.mrf.mxu0
  %v1815 = vadd.f32 0.0, %v1814
  %v1816 = vpop.f32.mrf.mxu0
  %1817 = vdwg.mxu0
  %v1818 = vadd.f32 %v1078, %v1776
  %v1819 = vadd.f32 %v1079, %v1789
  %v1820 = vadd.f32 %v1080, %v1802
  %v1821 = vadd.f32 %v1081, %v1815
  %v1822 = vxor.u32 %v1818, 2147483648
  %v1823 = vxor.u32 %v1819, 2147483648
  %v1824 = vxor.u32 %v1820, 2147483648
  %v1825 = vmul.f32 %v1822, 1.442695
  %v1826 = vpow.pop %v1825
  %v1827 = vmul.f32 %v1823, 1.442695
  %v1828 = vpow.pop %v1827
  %v1829 = vmul.f32 %v1824, 1.442695
  %v1830 = vpow.pop %v1829
  %v1831 = vadd.f32 %v1826, 1.0
  %v1832 = vadd.f32 %v1828, 1.0
  %v1833 = vadd.f32 %v1830, 1.0
  %v1834 = vrcp.pop %v1831
  %v1835 = vmul.f32 %v1831, %v1834
  %v1836 = vsub.f32 1.0, %v1835
  %v1837 = vmul.f32 %v1834, %v1836
  %v1838 = vadd.f32 %v1834, %v1837
  %vm1839 = vweird.f32 %v1831
  %vm1840 = vweird.f32 %v1834
  %vm1841 = vmor %vm1839, %vm1840
  %v1842 = vsel %vm1841, %v1834, %v1838
  %v1843 = vand.u32 2147483647, %v1831
  %vm1844 = vcmp.eq.f32.partialorder %v1843, 8.507059e+37
  %v1845 = vand.u32 %v1831, 2147483648
  %v1846 = vor.u32 1.1754944e-38, %v1845
  %v1847 = vsel %vm1844, %v1846, %v1842
  %v1848 = vmul.f32 1.0, %v1847
  %v1849 = vrcp.pop %v1832
  %v1850 = vmul.f32 %v1832, %v1849
  %v1851 = vsub.f32 1.0, %v1850
  %v1852 = vmul.f32 %v1849, %v1851
  %v1853 = vadd.f32 %v1849, %v1852
  %vm1854 = vweird.f32 %v1832
  %vm1855 = vweird.f32 %v1849
  %vm1856 = vmor %vm1854, %vm1855
  %v1857 = vsel %vm1856, %v1849, %v1853
  %v1858 = vand.u32 2147483647, %v1832
  %vm1859 = vcmp.eq.f32.partialorder %v1858, 8.507059e+37
  %v1860 = vand.u32 %v1832, 2147483648
  %v1861 = vor.u32 1.1754944e-38, %v1860
  %v1862 = vsel %vm1859, %v1861, %v1857
  %v1863 = vmul.f32 1.0, %v1862
  %v1864 = vrcp.pop %v1833
  %v1865 = vmul.f32 %v1833, %v1864
  %v1866 = vsub.f32 1.0, %v1865
  %v1867 = vmul.f32 %v1864, %v1866
  %v1868 = vadd.f32 %v1864, %v1867
  %vm1869 = vweird.f32 %v1833
  %vm1870 = vweird.f32 %v1864
  %vm1871 = vmor %vm1869, %vm1870
  %v1872 = vsel %vm1871, %v1864, %v1868
  %v1873 = vand.u32 2147483647, %v1833
  %vm1874 = vcmp.eq.f32.partialorder %v1873, 8.507059e+37
  %v1875 = vand.u32 %v1833, 2147483648
  %v1876 = vor.u32 1.1754944e-38, %v1875
  %v1877 = vsel %vm1874, %v1876, %v1872
  %v1878 = vmul.f32 1.0, %v1877
  %v1879 = vtanh.pop %v1821
  %v1880 = vmul.f32 %v1863, %v1762
  %v1881 = vmul.f32 %v1848, %v1879
  %v1882 = vadd.f32 %v1880, %v1881
  %v1883 = vtanh.pop %v1882
  %v1884 = vmul.f32 %v1878, %v1883
  %v1885 = vpack.c.bf16 %v1884, %v1884
  %1886 = vmatpush.bf16.msra.mxu0 %v1250
  %1887 = vmatpush.bf16.msra.mxu0 %v1246
  %1888 = vmatpush.bf16.msra.mxu0 %v1242
  %1889 = vmatpush.bf16.msra.mxu0 %v1238
  %1890 = vmatpush.bf16.msra.mxu0 %v1234
  %1891 = vmatpush.bf16.msra.mxu0 %v1230
  %1892 = vmatpush.bf16.msra.mxu0 %v1226
  %1893 = vmatpush.bf16.msra.mxu0 %v1222
  %1894 = vmatmul.bf16.gmra.mxu0 %v1885
  %v1895 = vpop.f32.mrf.mxu0
  %v1896 = vadd.f32 0.0, %v1895
  %v1897 = vpop.f32.mrf.mxu0
  %1898 = vdwg.mxu0
  %1899 = vmatpush.bf16.msra.mxu0 %v1251
  %1900 = vmatpush.bf16.msra.mxu0 %v1247
  %1901 = vmatpush.bf16.msra.mxu0 %v1243
  %1902 = vmatpush.bf16.msra.mxu0 %v1239
  %1903 = vmatpush.bf16.msra.mxu0 %v1235
  %1904 = vmatpush.bf16.msra.mxu0 %v1231
  %1905 = vmatpush.bf16.msra.mxu0 %v1227
  %1906 = vmatpush.bf16.msra.mxu0 %v1223
  %1907 = vmatmul.bf16.gmra.mxu0 %v1885
  %v1908 = vpop.f32.mrf.mxu0
  %v1909 = vadd.f32 0.0, %v1908
  %v1910 = vpop.f32.mrf.mxu0
  %1911 = vdwg.mxu0
  %1912 = vmatpush.bf16.msra.mxu0 %v1252
  %1913 = vmatpush.bf16.msra.mxu0 %v1248
  %1914 = vmatpush.bf16.msra.mxu0 %v1244
  %1915 = vmatpush.bf16.msra.mxu0 %v1240
  %1916 = vmatpush.bf16.msra.mxu0 %v1236
  %1917 = vmatpush.bf16.msra.mxu0 %v1232
  %1918 = vmatpush.bf16.msra.mxu0 %v1228
  %1919 = vmatpush.bf16.msra.mxu0 %v1224
  %1920 = vmatmul.bf16.gmra.mxu0 %v1885
  %v1921 = vpop.f32.mrf.mxu0
  %v1922 = vadd.f32 0.0, %v1921
  %v1923 = vpop.f32.mrf.mxu0
  %1924 = vdwg.mxu0
  %1925 = vmatpush.bf16.msra.mxu0 %v1253
  %1926 = vmatpush.bf16.msra.mxu0 %v1249
  %1927 = vmatpush.bf16.msra.mxu0 %v1245
  %1928 = vmatpush.bf16.msra.mxu0 %v1241
  %1929 = vmatpush.bf16.msra.mxu0 %v1237
  %1930 = vmatpush.bf16.msra.mxu0 %v1233
  %1931 = vmatpush.bf16.msra.mxu0 %v1229
  %1932 = vmatpush.bf16.msra.mxu0 %v1225
  %1933 = vmatmul.bf16.gmra.mxu0 %v1885
  %v1934 = vpop.f32.mrf.mxu0
  %v1935 = vadd.f32 0.0, %v1934
  %v1936 = vpop.f32.mrf.mxu0
  %1937 = vdwg.mxu0
  %v1938 = vadd.f32 %v1082, %v1896
  %v1939 = vadd.f32 %v1083, %v1909
  %v1940 = vadd.f32 %v1084, %v1922
  %v1941 = vadd.f32 %v1085, %v1935
  %v1942 = vxor.u32 %v1938, 2147483648
  %v1943 = vxor.u32 %v1939, 2147483648
  %v1944 = vxor.u32 %v1940, 2147483648
  %v1945 = vmul.f32 %v1942, 1.442695
  %v1946 = vpow.pop %v1945
  %v1947 = vmul.f32 %v1943, 1.442695
  %v1948 = vpow.pop %v1947
  %v1949 = vmul.f32 %v1944, 1.442695
  %v1950 = vpow.pop %v1949
  %v1951 = vadd.f32 %v1946, 1.0
  %v1952 = vadd.f32 %v1948, 1.0
  %v1953 = vadd.f32 %v1950, 1.0
  %v1954 = vrcp.pop %v1951
  %v1955 = vmul.f32 %v1951, %v1954
  %v1956 = vsub.f32 1.0, %v1955
  %v1957 = vmul.f32 %v1954, %v1956
  %v1958 = vadd.f32 %v1954, %v1957
  %vm1959 = vweird.f32 %v1951
  %vm1960 = vweird.f32 %v1954
  %vm1961 = vmor %vm1959, %vm1960
  %v1962 = vsel %vm1961, %v1954, %v1958
  %v1963 = vand.u32 2147483647, %v1951
  %vm1964 = vcmp.eq.f32.partialorder %v1963, 8.507059e+37
  %v1965 = vand.u32 %v1951, 2147483648
  %v1966 = vor.u32 1.1754944e-38, %v1965
  %v1967 = vsel %vm1964, %v1966, %v1962
  %v1968 = vmul.f32 1.0, %v1967
  %v1969 = vrcp.pop %v1952
  %v1970 = vmul.f32 %v1952, %v1969
  %v1971 = vsub.f32 1.0, %v1970
  %v1972 = vmul.f32 %v1969, %v1971
  %v1973 = vadd.f32 %v1969, %v1972
  %vm1974 = vweird.f32 %v1952
  %vm1975 = vweird.f32 %v1969
  %vm1976 = vmor %vm1974, %vm1975
  %v1977 = vsel %vm1976, %v1969, %v1973
  %v1978 = vand.u32 2147483647, %v1952
  %vm1979 = vcmp.eq.f32.partialorder %v1978, 8.507059e+37
  %v1980 = vand.u32 %v1952, 2147483648
  %v1981 = vor.u32 1.1754944e-38, %v1980
  %v1982 = vsel %vm1979, %v1981, %v1977
  %v1983 = vmul.f32 1.0, %v1982
  %v1984 = vrcp.pop %v1953
  %v1985 = vmul.f32 %v1953, %v1984
  %v1986 = vsub.f32 1.0, %v1985
  %v1987 = vmul.f32 %v1984, %v1986
  %v1988 = vadd.f32 %v1984, %v1987
  %vm1989 = vweird.f32 %v1953
  %vm1990 = vweird.f32 %v1984
  %vm1991 = vmor %vm1989, %vm1990
  %v1992 = vsel %vm1991, %v1984, %v1988
  %v1993 = vand.u32 2147483647, %v1953
  %vm1994 = vcmp.eq.f32.partialorder %v1993, 8.507059e+37
  %v1995 = vand.u32 %v1953, 2147483648
  %v1996 = vor.u32 1.1754944e-38, %v1995
  %v1997 = vsel %vm1994, %v1996, %v1992
  %v1998 = vmul.f32 1.0, %v1997
  %v1999 = vtanh.pop %v1941
  %v2000 = vmul.f32 %v1983, %v1882
  %v2001 = vmul.f32 %v1968, %v1999
  %v2002 = vadd.f32 %v2000, %v2001
  %v2003 = vtanh.pop %v2002
  %v2004 = vmul.f32 %v1998, %v2003
  %v2005 = vpack.c.bf16 %v2004, %v2004
  %2006 = vmatpush.bf16.msra.mxu0 %v1250
  %2007 = vmatpush.bf16.msra.mxu0 %v1246
  %2008 = vmatpush.bf16.msra.mxu0 %v1242
  %2009 = vmatpush.bf16.msra.mxu0 %v1238
  %2010 = vmatpush.bf16.msra.mxu0 %v1234
  %2011 = vmatpush.bf16.msra.mxu0 %v1230
  %2012 = vmatpush.bf16.msra.mxu0 %v1226
  %2013 = vmatpush.bf16.msra.mxu0 %v1222
  %2014 = vmatmul.bf16.gmra.mxu0 %v2005
  %v2015 = vpop.f32.mrf.mxu0
  %v2016 = vadd.f32 0.0, %v2015
  %v2017 = vpop.f32.mrf.mxu0
  %2018 = vdwg.mxu0
  %2019 = vmatpush.bf16.msra.mxu0 %v1251
  %2020 = vmatpush.bf16.msra.mxu0 %v1247
  %2021 = vmatpush.bf16.msra.mxu0 %v1243
  %2022 = vmatpush.bf16.msra.mxu0 %v1239
  %2023 = vmatpush.bf16.msra.mxu0 %v1235
  %2024 = vmatpush.bf16.msra.mxu0 %v1231
  %2025 = vmatpush.bf16.msra.mxu0 %v1227
  %2026 = vmatpush.bf16.msra.mxu0 %v1223
  %2027 = vmatmul.bf16.gmra.mxu0 %v2005
  %v2028 = vpop.f32.mrf.mxu0
  %v2029 = vadd.f32 0.0, %v2028
  %v2030 = vpop.f32.mrf.mxu0
  %2031 = vdwg.mxu0
  %2032 = vmatpush.bf16.msra.mxu0 %v1252
  %2033 = vmatpush.bf16.msra.mxu0 %v1248
  %2034 = vmatpush.bf16.msra.mxu0 %v1244
  %2035 = vmatpush.bf16.msra.mxu0 %v1240
  %2036 = vmatpush.bf16.msra.mxu0 %v1236
  %2037 = vmatpush.bf16.msra.mxu0 %v1232
  %2038 = vmatpush.bf16.msra.mxu0 %v1228
  %2039 = vmatpush.bf16.msra.mxu0 %v1224
  %2040 = vmatmul.bf16.gmra.mxu0 %v2005
  %v2041 = vpop.f32.mrf.mxu0
  %v2042 = vadd.f32 0.0, %v2041
  %v2043 = vpop.f32.mrf.mxu0
  %2044 = vdwg.mxu0
  %2045 = vmatpush.bf16.msra.mxu0 %v1253
  %2046 = vmatpush.bf16.msra.mxu0 %v1249
  %2047 = vmatpush.bf16.msra.mxu0 %v1245
  %2048 = vmatpush.bf16.msra.mxu0 %v1241
  %2049 = vmatpush.bf16.msra.mxu0 %v1237
  %2050 = vmatpush.bf16.msra.mxu0 %v1233
  %2051 = vmatpush.bf16.msra.mxu0 %v1229
  %2052 = vmatpush.bf16.msra.mxu0 %v1225
  %2053 = vmatmul.bf16.gmra.mxu0 %v2005
  %v2054 = vpop.f32.mrf.mxu0
  %v2055 = vadd.f32 0.0, %v2054
  %v2056 = vpop.f32.mrf.mxu0
  %2057 = vdwg.mxu0
  %v2058 = vadd.f32 %v1086, %v2016
  %v2059 = vadd.f32 %v1087, %v2029
  %v2060 = vadd.f32 %v1088, %v2042
  %v2061 = vadd.f32 %v1089, %v2055
  %v2062 = vxor.u32 %v2058, 2147483648
  %v2063 = vxor.u32 %v2059, 2147483648
  %v2064 = vxor.u32 %v2060, 2147483648
  %v2065 = vmul.f32 %v2062, 1.442695
  %v2066 = vpow.pop %v2065
  %v2067 = vmul.f32 %v2063, 1.442695
  %v2068 = vpow.pop %v2067
  %v2069 = vmul.f32 %v2064, 1.442695
  %v2070 = vpow.pop %v2069
  %v2071 = vadd.f32 %v2066, 1.0
  %v2072 = vadd.f32 %v2068, 1.0
  %v2073 = vadd.f32 %v2070, 1.0
  %v2074 = vrcp.pop %v2071
  %v2075 = vmul.f32 %v2071, %v2074
  %v2076 = vsub.f32 1.0, %v2075
  %v2077 = vmul.f32 %v2074, %v2076
  %v2078 = vadd.f32 %v2074, %v2077
  %vm2079 = vweird.f32 %v2071
  %vm2080 = vweird.f32 %v2074
  %vm2081 = vmor %vm2079, %vm2080
  %v2082 = vsel %vm2081, %v2074, %v2078
  %v2083 = vand.u32 2147483647, %v2071
  %vm2084 = vcmp.eq.f32.partialorder %v2083, 8.507059e+37
  %v2085 = vand.u32 %v2071, 2147483648
  %v2086 = vor.u32 1.1754944e-38, %v2085
  %v2087 = vsel %vm2084, %v2086, %v2082
  %v2088 = vmul.f32 1.0, %v2087
  %v2089 = vrcp.pop %v2072
  %v2090 = vmul.f32 %v2072, %v2089
  %v2091 = vsub.f32 1.0, %v2090
  %v2092 = vmul.f32 %v2089, %v2091
  %v2093 = vadd.f32 %v2089, %v2092
  %vm2094 = vweird.f32 %v2072
  %vm2095 = vweird.f32 %v2089
  %vm2096 = vmor %vm2094, %vm2095
  %v2097 = vsel %vm2096, %v2089, %v2093
  %v2098 = vand.u32 2147483647, %v2072
  %vm2099 = vcmp.eq.f32.partialorder %v2098, 8.507059e+37
  %v2100 = vand.u32 %v2072, 2147483648
  %v2101 = vor.u32 1.1754944e-38, %v2100
  %v2102 = vsel %vm2099, %v2101, %v2097
  %v2103 = vmul.f32 1.0, %v2102
  %v2104 = vrcp.pop %v2073
  %v2105 = vmul.f32 %v2073, %v2104
  %v2106 = vsub.f32 1.0, %v2105
  %v2107 = vmul.f32 %v2104, %v2106
  %v2108 = vadd.f32 %v2104, %v2107
  %vm2109 = vweird.f32 %v2073
  %vm2110 = vweird.f32 %v2104
  %vm2111 = vmor %vm2109, %vm2110
  %v2112 = vsel %vm2111, %v2104, %v2108
  %v2113 = vand.u32 2147483647, %v2073
  %vm2114 = vcmp.eq.f32.partialorder %v2113, 8.507059e+37
  %v2115 = vand.u32 %v2073, 2147483648
  %v2116 = vor.u32 1.1754944e-38, %v2115
  %v2117 = vsel %vm2114, %v2116, %v2112
  %v2118 = vmul.f32 1.0, %v2117
  %v2119 = vtanh.pop %v2061
  %v2120 = vmul.f32 %v2103, %v2002
  %v2121 = vmul.f32 %v2088, %v2119
  %v2122 = vadd.f32 %v2120, %v2121
  %v2123 = vtanh.pop %v2122
  %v2124 = vmul.f32 %v2118, %v2123
  %v2125 = vpack.c.bf16 %v2124, %v2124
  %2126 = vmatpush.bf16.msra.mxu0 %v1250
  %2127 = vmatpush.bf16.msra.mxu0 %v1246
  %2128 = vmatpush.bf16.msra.mxu0 %v1242
  %2129 = vmatpush.bf16.msra.mxu0 %v1238
  %2130 = vmatpush.bf16.msra.mxu0 %v1234
  %2131 = vmatpush.bf16.msra.mxu0 %v1230
  %2132 = vmatpush.bf16.msra.mxu0 %v1226
  %2133 = vmatpush.bf16.msra.mxu0 %v1222
  %2134 = vmatmul.bf16.gmra.mxu0 %v2125
  %v2135 = vpop.f32.mrf.mxu0
  %v2136 = vadd.f32 0.0, %v2135
  %v2137 = vpop.f32.mrf.mxu0
  %2138 = vdwg.mxu0
  %2139 = vmatpush.bf16.msra.mxu0 %v1251
  %2140 = vmatpush.bf16.msra.mxu0 %v1247
  %2141 = vmatpush.bf16.msra.mxu0 %v1243
  %2142 = vmatpush.bf16.msra.mxu0 %v1239
  %2143 = vmatpush.bf16.msra.mxu0 %v1235
  %2144 = vmatpush.bf16.msra.mxu0 %v1231
  %2145 = vmatpush.bf16.msra.mxu0 %v1227
  %2146 = vmatpush.bf16.msra.mxu0 %v1223
  %2147 = vmatmul.bf16.gmra.mxu0 %v2125
  %v2148 = vpop.f32.mrf.mxu0
  %v2149 = vadd.f32 0.0, %v2148
  %v2150 = vpop.f32.mrf.mxu0
  %2151 = vdwg.mxu0
  %2152 = vmatpush.bf16.msra.mxu0 %v1252
  %2153 = vmatpush.bf16.msra.mxu0 %v1248
  %2154 = vmatpush.bf16.msra.mxu0 %v1244
  %2155 = vmatpush.bf16.msra.mxu0 %v1240
  %2156 = vmatpush.bf16.msra.mxu0 %v1236
  %2157 = vmatpush.bf16.msra.mxu0 %v1232
  %2158 = vmatpush.bf16.msra.mxu0 %v1228
  %2159 = vmatpush.bf16.msra.mxu0 %v1224
  %2160 = vmatmul.bf16.gmra.mxu0 %v2125
  %v2161 = vpop.f32.mrf.mxu0
  %v2162 = vadd.f32 0.0, %v2161
  %v2163 = vpop.f32.mrf.mxu0
  %2164 = vdwg.mxu0
  %2165 = vmatpush.bf16.msra.mxu0 %v1253
  %2166 = vmatpush.bf16.msra.mxu0 %v1249
  %2167 = vmatpush.bf16.msra.mxu0 %v1245
  %2168 = vmatpush.bf16.msra.mxu0 %v1241
  %2169 = vmatpush.bf16.msra.mxu0 %v1237
  %2170 = vmatpush.bf16.msra.mxu0 %v1233
  %2171 = vmatpush.bf16.msra.mxu0 %v1229
  %2172 = vmatpush.bf16.msra.mxu0 %v1225
  %2173 = vmatmul.bf16.gmra.mxu0 %v2125
  %v2174 = vpop.f32.mrf.mxu0
  %v2175 = vadd.f32 0.0, %v2174
  %v2176 = vpop.f32.mrf.mxu0
  %2177 = vdwg.mxu0
  %v2178 = vadd.f32 %v1090, %v2136
  %v2179 = vadd.f32 %v1091, %v2149
  %v2180 = vadd.f32 %v1092, %v2162
  %v2181 = vadd.f32 %v1093, %v2175
  %v2182 = vxor.u32 %v2178, 2147483648
  %v2183 = vxor.u32 %v2179, 2147483648
  %v2184 = vxor.u32 %v2180, 2147483648
  %v2185 = vmul.f32 %v2182, 1.442695
  %v2186 = vpow.pop %v2185
  %v2187 = vmul.f32 %v2183, 1.442695
  %v2188 = vpow.pop %v2187
  %v2189 = vmul.f32 %v2184, 1.442695
  %v2190 = vpow.pop %v2189
  %v2191 = vadd.f32 %v2186, 1.0
  %v2192 = vadd.f32 %v2188, 1.0
  %v2193 = vadd.f32 %v2190, 1.0
  %v2194 = vrcp.pop %v2191
  %v2195 = vmul.f32 %v2191, %v2194
  %v2196 = vsub.f32 1.0, %v2195
  %v2197 = vmul.f32 %v2194, %v2196
  %v2198 = vadd.f32 %v2194, %v2197
  %vm2199 = vweird.f32 %v2191
  %vm2200 = vweird.f32 %v2194
  %vm2201 = vmor %vm2199, %vm2200
  %v2202 = vsel %vm2201, %v2194, %v2198
  %v2203 = vand.u32 2147483647, %v2191
  %vm2204 = vcmp.eq.f32.partialorder %v2203, 8.507059e+37
  %v2205 = vand.u32 %v2191, 2147483648
  %v2206 = vor.u32 1.1754944e-38, %v2205
  %v2207 = vsel %vm2204, %v2206, %v2202
  %v2208 = vmul.f32 1.0, %v2207
  %v2209 = vrcp.pop %v2192
  %v2210 = vmul.f32 %v2192, %v2209
  %v2211 = vsub.f32 1.0, %v2210
  %v2212 = vmul.f32 %v2209, %v2211
  %v2213 = vadd.f32 %v2209, %v2212
  %vm2214 = vweird.f32 %v2192
  %vm2215 = vweird.f32 %v2209
  %vm2216 = vmor %vm2214, %vm2215
  %v2217 = vsel %vm2216, %v2209, %v2213
  %v2218 = vand.u32 2147483647, %v2192
  %vm2219 = vcmp.eq.f32.partialorder %v2218, 8.507059e+37
  %v2220 = vand.u32 %v2192, 2147483648
  %v2221 = vor.u32 1.1754944e-38, %v2220
  %v2222 = vsel %vm2219, %v2221, %v2217
  %v2223 = vmul.f32 1.0, %v2222
  %v2224 = vrcp.pop %v2193
  %v2225 = vmul.f32 %v2193, %v2224
  %v2226 = vsub.f32 1.0, %v2225
  %v2227 = vmul.f32 %v2224, %v2226
  %v2228 = vadd.f32 %v2224, %v2227
  %vm2229 = vweird.f32 %v2193
  %vm2230 = vweird.f32 %v2224
  %vm2231 = vmor %vm2229, %vm2230
  %v2232 = vsel %vm2231, %v2224, %v2228
  %v2233 = vand.u32 2147483647, %v2193
  %vm2234 = vcmp.eq.f32.partialorder %v2233, 8.507059e+37
  %v2235 = vand.u32 %v2193, 2147483648
  %v2236 = vor.u32 1.1754944e-38, %v2235
  %v2237 = vsel %vm2234, %v2236, %v2232
  %v2238 = vmul.f32 1.0, %v2237
  %v2239 = vtanh.pop %v2181
  %v2240 = vmul.f32 %v2223, %v2122
  %v2241 = vmul.f32 %v2208, %v2239
  %v2242 = vadd.f32 %v2240, %v2241
  %v2243 = vtanh.pop %v2242
  %v2244 = vmul.f32 %v2238, %v2243
  %2246 = vrot.lane.b32.xlu0 %v2244, 64
  %v2247 = vpop.permute.xlu0 %2246
  %v2249 = vadd.f32 %v1404, %v2247
  %2251 = vrot.lane.b32.xlu0 %v2124, 64
  %v2252 = vpop.permute.xlu0 %2251
  %v2254 = vadd.f32 %v1524, %v2252
  %2256 = vrot.lane.b32.xlu0 %v2004, 64
  %v2257 = vpop.permute.xlu0 %2256
  %v2259 = vadd.f32 %v1644, %v2257
  %2261 = vrot.lane.b32.xlu0 %v1884, 64
  %v2262 = vpop.permute.xlu0 %2261
  %v2264 = vadd.f32 %v1764, %v2262
  %2266 = vrot.lane.b32.xlu0 %v1764, 64
  %v2267 = vpop.permute.xlu0 %2266
  %v2269 = vadd.f32 %v1884, %v2267
  %2271 = vrot.lane.b32.xlu0 %v1644, 64
  %v2272 = vpop.permute.xlu0 %2271
  %v2274 = vadd.f32 %v2004, %v2272
  %2276 = vrot.lane.b32.xlu0 %v1524, 64
  %v2277 = vpop.permute.xlu0 %2276
  %v2279 = vadd.f32 %v2124, %v2277
  %2281 = vrot.lane.b32.xlu0 %v1404, 64
  %v2282 = vpop.permute.xlu0 %2281
  %v2284 = vadd.f32 %v2244, %v2282
  %v2285 = vld [vmem:[%s6] sm:$0xff]
  %v2286 = vld [vmem:[%s6 + $0x8] sm:$0xff]
  %v2287 = vld [vmem:[%s6 + $0x10] sm:$0xff]
  %v2288 = vld [vmem:[%s6 + $0x18] sm:$0xff]
  %v2289 = vld [vmem:[%s6 + $0x20] sm:$0xff]
  %v2290 = vld [vmem:[%s6 + $0x28] sm:$0xff]
  %v2291 = vld [vmem:[%s6 + $0x30] sm:$0xff]
  %v2292 = vld [vmem:[%s6 + $0x38] sm:$0xff]
  %v2293 = vld [vmem:[%s7] sm:$0x1]
  %v2295 = vperm.slane %v2293, 0
  %vm2297 = vcmask 523264
  %v2299 = vsel %vm2297, %v2249, 0
  %v2302 = vsel %vm2297, %v2254, 0
  %v2305 = vsel %vm2297, %v2259, 0
  %v2308 = vsel %vm2297, %v2264, 0
  %v2311 = vsel %vm2297, %v2269, 0
  %v2314 = vsel %vm2297, %v2274, 0
  %v2317 = vsel %vm2297, %v2279, 0
  %v2320 = vsel %vm2297, %v2284, 0
  %2322 = vmatpush.msra.mxu0 0.0
  %2323 = vmatpush.msra.mxu0 0.0
  %2324 = vmatpush.msra.mxu0 0.0
  %2325 = vmatpush.msra.mxu0 0.0
  %2326 = vmatpush.msra.mxu0 0.0
  %2327 = vmatpush.msra.mxu0 0.0
  %2328 = vmatpush.msra.mxu0 0.0
  %2329 = vmatpush.msra.mxu0 0.0
  %2330 = vmatpush.msra.mxu0 %v2292
  %2331 = vmatpush.msra.mxu0 %v2291
  %2332 = vmatpush.msra.mxu0 %v2290
  %2333 = vmatpush.msra.mxu0 %v2289
  %2334 = vmatpush.msra.mxu0 %v2288
  %2335 = vmatpush.msra.mxu0 %v2287
  %2336 = vmatpush.msra.mxu0 %v2286
  %2337 = vmatpush.msra.mxu0 %v2285
  %2338 = vmatmul.f32.gmra.mxu0 %v2299
  %v2339 = vpop.f32.mrf.mxu0
  %v2340 = vadd.f32 %v2295, %v2339
  %2341 = vmatmul.f32.gmra.mxu0 %v2302
  %v2342 = vpop.f32.mrf.mxu0
  %v2343 = vadd.f32 %v2295, %v2342
  %2344 = vmatmul.f32.gmra.mxu0 %v2305
  %v2345 = vpop.f32.mrf.mxu0
  %v2346 = vadd.f32 %v2295, %v2345
  %2347 = vmatmul.f32.gmra.mxu0 %v2308
  %v2348 = vpop.f32.mrf.mxu0
  %v2349 = vadd.f32 %v2295, %v2348
  %2350 = vmatmul.f32.gmra.mxu0 %v2311
  %v2351 = vpop.f32.mrf.mxu0
  %v2352 = vadd.f32 %v2295, %v2351
  %2353 = vmatmul.f32.gmra.mxu0 %v2314
  %v2354 = vpop.f32.mrf.mxu0
  %v2355 = vadd.f32 %v2295, %v2354
  %2356 = vmatmul.f32.gmra.mxu0 %v2317
  %v2357 = vpop.f32.mrf.mxu0
  %v2358 = vadd.f32 %v2295, %v2357
  %2359 = vmatmul.f32.gmra.mxu0 %v2320
  %v2360 = vpop.f32.mrf.mxu0
  %v2361 = vadd.f32 %v2295, %v2360
  %2362 = vdwg.mxu0
  %2364 = vrot.lane.b32.xlu0 %v2361, 124
  %v2365 = vpop.permute.xlu0 %2364
  %2368 = vrot.lane.b32.xlu0 %v2358, 124
  %v2369 = vpop.permute.xlu0 %2368
  %2372 = vrot.lane.b32.xlu0 %v2355, 124
  %v2373 = vpop.permute.xlu0 %2372
  %2376 = vrot.lane.b32.xlu0 %v2352, 124
  %v2377 = vpop.permute.xlu0 %2376
  %2380 = vrot.lane.b32.xlu0 %v2349, 124
  %v2381 = vpop.permute.xlu0 %2380
  %2384 = vrot.lane.b32.xlu0 %v2346, 124
  %v2385 = vpop.permute.xlu0 %2384
  %2388 = vrot.lane.b32.xlu0 %v2343, 124
  %v2389 = vpop.permute.xlu0 %2388
  %2392 = vrot.lane.b32.xlu0 %v2340, 124
  %v2393 = vpop.permute.xlu0 %2392
  %v2395 = vld [vmem:[%s8] sm:$0x3]
  %v2396 = vperm.slane %v2395, 0
  %v2397 = vperm.slane %v2395, 1
  %v2398 = vmul.f32 %v2396, 0.0
  %v2399 = vmul.f32 %v2397, 0.0
  %v2400 = vadd.f32 %v2340, %v2398
  %v2401 = vadd.f32 %v2365, %v2399
  %v2402 = vxor.u32 %v2400, 2147483648
  %v2403 = vxor.u32 %v2401, 2147483648
  %v2404 = vmul.f32 %v2402, 1.442695
  %v2405 = vpow.pop %v2404
  %v2406 = vmul.f32 %v2403, 1.442695
  %v2407 = vpow.pop %v2406
  %v2408 = vadd.f32 %v2405, 1.0
  %v2409 = vadd.f32 %v2407, 1.0
  %v2410 = vrcp.pop %v2408
  %v2411 = vmul.f32 %v2408, %v2410
  %v2412 = vsub.f32 1.0, %v2411
  %v2413 = vmul.f32 %v2410, %v2412
  %v2414 = vadd.f32 %v2410, %v2413
  %vm2415 = vweird.f32 %v2408
  %vm2416 = vweird.f32 %v2410
  %vm2417 = vmor %vm2415, %vm2416
  %v2418 = vsel %vm2417, %v2410, %v2414
  %v2419 = vand.u32 2147483647, %v2408
  %vm2420 = vcmp.eq.f32.partialorder %v2419, 8.507059e+37
  %v2421 = vand.u32 %v2408, 2147483648
  %v2422 = vor.u32 1.1754944e-38, %v2421
  %v2423 = vsel %vm2420, %v2422, %v2418
  %v2424 = vmul.f32 1.0, %v2423
  %v2425 = vrcp.pop %v2409
  %v2426 = vmul.f32 %v2409, %v2425
  %v2427 = vsub.f32 1.0, %v2426
  %v2428 = vmul.f32 %v2425, %v2427
  %v2429 = vadd.f32 %v2425, %v2428
  %vm2430 = vweird.f32 %v2409
  %vm2431 = vweird.f32 %v2425
  %vm2432 = vmor %vm2430, %vm2431
  %v2433 = vsel %vm2432, %v2425, %v2429
  %v2434 = vand.u32 2147483647, %v2409
  %vm2435 = vcmp.eq.f32.partialorder %v2434, 8.507059e+37
  %v2436 = vand.u32 %v2409, 2147483648
  %v2437 = vor.u32 1.1754944e-38, %v2436
  %v2438 = vsel %vm2435, %v2437, %v2433
  %v2439 = vmul.f32 1.0, %v2438
  %v2440 = vtanh.pop %v2400
  %v2441 = vtanh.pop %v2401
  %v2442 = vmul.f32 %v2424, 0.0
  %v2443 = vmul.f32 %v2439, 0.0
  %2446 = vrot.lane.b32.xlu0 %v2440, 125
  %v2447 = vpop.permute.xlu0 %2446
  %2448 = vrot.lane.b32.xlu0 %v2441, 125
  %v2449 = vpop.permute.xlu0 %2448
  %v2452 = vmul.f32 %v2424, %v2447
  %v2453 = vmul.f32 %v2439, %v2449
  %2456 = vrot.lane.b32.xlu0 %v2452, 1
  %v2457 = vpop.permute.xlu0 %2456
  %2458 = vrot.lane.b32.xlu0 %v2453, 1
  %v2459 = vpop.permute.xlu0 %2458
  %v2462 = vadd.f32 %v2442, %v2457
  %v2463 = vadd.f32 %v2443, %v2459
  %v2464 = vtanh.pop %v2462
  %v2465 = vtanh.pop %v2463
  %2468 = vrot.lane.b32.xlu0 %v2464, 1
  %v2469 = vpop.permute.xlu0 %2468
  %2470 = vrot.lane.b32.xlu0 %v2465, 1
  %v2471 = vpop.permute.xlu0 %2470
  %v2474 = vmul.f32 %v2424, %v2469
  %v2475 = vmul.f32 %v2439, %v2471
  %2477 = vset.pattern.permute.xlu0 2
  %2478 = vperm.xlu0 %2477, %v2474
  %v2479 = vpop.permute.xlu0 %2478
  %2482 = vset.pattern.permute.xlu0 2
  %2483 = vperm.xlu0 %2482, %v2475
  %v2484 = vpop.permute.xlu0 %2483
  %v2486 = vmul.f32 %v2479, %v2396
  %v2487 = vmul.f32 %v2484, %v2397
  %v2488 = vadd.f32 %v2343, %v2486
  %v2489 = vadd.f32 %v2369, %v2487
  %v2490 = vxor.u32 %v2488, 2147483648
  %v2491 = vxor.u32 %v2489, 2147483648
  %v2492 = vmul.f32 %v2490, 1.442695
  %v2493 = vpow.pop %v2492
  %v2494 = vmul.f32 %v2491, 1.442695
  %v2495 = vpow.pop %v2494
  %v2496 = vadd.f32 %v2493, 1.0
  %v2497 = vadd.f32 %v2495, 1.0
  %v2498 = vrcp.pop %v2496
  %v2499 = vmul.f32 %v2496, %v2498
  %v2500 = vsub.f32 1.0, %v2499
  %v2501 = vmul.f32 %v2498, %v2500
  %v2502 = vadd.f32 %v2498, %v2501
  %vm2503 = vweird.f32 %v2496
  %vm2504 = vweird.f32 %v2498
  %vm2505 = vmor %vm2503, %vm2504
  %v2506 = vsel %vm2505, %v2498, %v2502
  %v2507 = vand.u32 2147483647, %v2496
  %vm2508 = vcmp.eq.f32.partialorder %v2507, 8.507059e+37
  %v2509 = vand.u32 %v2496, 2147483648
  %v2510 = vor.u32 1.1754944e-38, %v2509
  %v2511 = vsel %vm2508, %v2510, %v2506
  %v2512 = vmul.f32 1.0, %v2511
  %v2513 = vrcp.pop %v2497
  %v2514 = vmul.f32 %v2497, %v2513
  %v2515 = vsub.f32 1.0, %v2514
  %v2516 = vmul.f32 %v2513, %v2515
  %v2517 = vadd.f32 %v2513, %v2516
  %vm2518 = vweird.f32 %v2497
  %vm2519 = vweird.f32 %v2513
  %vm2520 = vmor %vm2518, %vm2519
  %v2521 = vsel %vm2520, %v2513, %v2517
  %v2522 = vand.u32 2147483647, %v2497
  %vm2523 = vcmp.eq.f32.partialorder %v2522, 8.507059e+37
  %v2524 = vand.u32 %v2497, 2147483648
  %v2525 = vor.u32 1.1754944e-38, %v2524
  %v2526 = vsel %vm2523, %v2525, %v2521
  %v2527 = vmul.f32 1.0, %v2526
  %v2528 = vtanh.pop %v2488
  %v2529 = vtanh.pop %v2489
  %v2530 = vmul.f32 %v2512, %v2462
  %v2531 = vmul.f32 %v2527, %v2463
  %2534 = vrot.lane.b32.xlu0 %v2528, 125
  %v2535 = vpop.permute.xlu0 %2534
  %2536 = vrot.lane.b32.xlu0 %v2529, 125
  %v2537 = vpop.permute.xlu0 %2536
  %v2540 = vmul.f32 %v2512, %v2535
  %v2541 = vmul.f32 %v2527, %v2537
  %2544 = vrot.lane.b32.xlu0 %v2540, 1
  %v2545 = vpop.permute.xlu0 %2544
  %2546 = vrot.lane.b32.xlu0 %v2541, 1
  %v2547 = vpop.permute.xlu0 %2546
  %v2550 = vadd.f32 %v2530, %v2545
  %v2551 = vadd.f32 %v2531, %v2547
  %v2552 = vtanh.pop %v2550
  %v2553 = vtanh.pop %v2551
  %2556 = vrot.lane.b32.xlu0 %v2552, 1
  %v2557 = vpop.permute.xlu0 %2556
  %2558 = vrot.lane.b32.xlu0 %v2553, 1
  %v2559 = vpop.permute.xlu0 %2558
  %v2562 = vmul.f32 %v2512, %v2557
  %v2563 = vmul.f32 %v2527, %v2559
  %2565 = vset.pattern.permute.xlu0 2
  %2566 = vperm.xlu0 %2565, %v2562
  %v2567 = vpop.permute.xlu0 %2566
  %2570 = vset.pattern.permute.xlu0 2
  %2571 = vperm.xlu0 %2570, %v2563
  %v2572 = vpop.permute.xlu0 %2571
  %v2574 = vmul.f32 %v2567, %v2396
  %v2575 = vmul.f32 %v2572, %v2397
  %v2576 = vadd.f32 %v2346, %v2574
  %v2577 = vadd.f32 %v2373, %v2575
  %v2578 = vxor.u32 %v2576, 2147483648
  %v2579 = vxor.u32 %v2577, 2147483648
  %v2580 = vmul.f32 %v2578, 1.442695
  %v2581 = vpow.pop %v2580
  %v2582 = vmul.f32 %v2579, 1.442695
  %v2583 = vpow.pop %v2582
  %v2584 = vadd.f32 %v2581, 1.0
  %v2585 = vadd.f32 %v2583, 1.0
  %v2586 = vrcp.pop %v2584
  %v2587 = vmul.f32 %v2584, %v2586
  %v2588 = vsub.f32 1.0, %v2587
  %v2589 = vmul.f32 %v2586, %v2588
  %v2590 = vadd.f32 %v2586, %v2589
  %vm2591 = vweird.f32 %v2584
  %vm2592 = vweird.f32 %v2586
  %vm2593 = vmor %vm2591, %vm2592
  %v2594 = vsel %vm2593, %v2586, %v2590
  %v2595 = vand.u32 2147483647, %v2584
  %vm2596 = vcmp.eq.f32.partialorder %v2595, 8.507059e+37
  %v2597 = vand.u32 %v2584, 2147483648
  %v2598 = vor.u32 1.1754944e-38, %v2597
  %v2599 = vsel %vm2596, %v2598, %v2594
  %v2600 = vmul.f32 1.0, %v2599
  %v2601 = vrcp.pop %v2585
  %v2602 = vmul.f32 %v2585, %v2601
  %v2603 = vsub.f32 1.0, %v2602
  %v2604 = vmul.f32 %v2601, %v2603
  %v2605 = vadd.f32 %v2601, %v2604
  %vm2606 = vweird.f32 %v2585
  %vm2607 = vweird.f32 %v2601
  %vm2608 = vmor %vm2606, %vm2607
  %v2609 = vsel %vm2608, %v2601, %v2605
  %v2610 = vand.u32 2147483647, %v2585
  %vm2611 = vcmp.eq.f32.partialorder %v2610, 8.507059e+37
  %v2612 = vand.u32 %v2585, 2147483648
  %v2613 = vor.u32 1.1754944e-38, %v2612
  %v2614 = vsel %vm2611, %v2613, %v2609
  %v2615 = vmul.f32 1.0, %v2614
  %v2616 = vtanh.pop %v2576
  %v2617 = vtanh.pop %v2577
  %v2618 = vmul.f32 %v2600, %v2550
  %v2619 = vmul.f32 %v2615, %v2551
  %2622 = vrot.lane.b32.xlu0 %v2616, 125
  %v2623 = vpop.permute.xlu0 %2622
  %2624 = vrot.lane.b32.xlu0 %v2617, 125
  %v2625 = vpop.permute.xlu0 %2624
  %v2628 = vmul.f32 %v2600, %v2623
  %v2629 = vmul.f32 %v2615, %v2625
  %2632 = vrot.lane.b32.xlu0 %v2628, 1
  %v2633 = vpop.permute.xlu0 %2632
  %2634 = vrot.lane.b32.xlu0 %v2629, 1
  %v2635 = vpop.permute.xlu0 %2634
  %v2638 = vadd.f32 %v2618, %v2633
  %v2639 = vadd.f32 %v2619, %v2635
  %v2640 = vtanh.pop %v2638
  %v2641 = vtanh.pop %v2639
  %2644 = vrot.lane.b32.xlu0 %v2640, 1
  %v2645 = vpop.permute.xlu0 %2644
  %2646 = vrot.lane.b32.xlu0 %v2641, 1
  %v2647 = vpop.permute.xlu0 %2646
  %v2650 = vmul.f32 %v2600, %v2645
  %v2651 = vmul.f32 %v2615, %v2647
  %2653 = vset.pattern.permute.xlu0 2
  %2654 = vperm.xlu0 %2653, %v2650
  %v2655 = vpop.permute.xlu0 %2654
  %2658 = vset.pattern.permute.xlu0 2
  %2659 = vperm.xlu0 %2658, %v2651
  %v2660 = vpop.permute.xlu0 %2659
  %v2662 = vmul.f32 %v2655, %v2396
  %v2663 = vmul.f32 %v2660, %v2397
  %v2664 = vadd.f32 %v2349, %v2662
  %v2665 = vadd.f32 %v2377, %v2663
  %v2666 = vxor.u32 %v2664, 2147483648
  %v2667 = vxor.u32 %v2665, 2147483648
  %v2668 = vmul.f32 %v2666, 1.442695
  %v2669 = vpow.pop %v2668
  %v2670 = vmul.f32 %v2667, 1.442695
  %v2671 = vpow.pop %v2670
  %v2672 = vadd.f32 %v2669, 1.0
  %v2673 = vadd.f32 %v2671, 1.0
  %v2674 = vrcp.pop %v2672
  %v2675 = vmul.f32 %v2672, %v2674
  %v2676 = vsub.f32 1.0, %v2675
  %v2677 = vmul.f32 %v2674, %v2676
  %v2678 = vadd.f32 %v2674, %v2677
  %vm2679 = vweird.f32 %v2672
  %vm2680 = vweird.f32 %v2674
  %vm2681 = vmor %vm2679, %vm2680
  %v2682 = vsel %vm2681, %v2674, %v2678
  %v2683 = vand.u32 2147483647, %v2672
  %vm2684 = vcmp.eq.f32.partialorder %v2683, 8.507059e+37
  %v2685 = vand.u32 %v2672, 2147483648
  %v2686 = vor.u32 1.1754944e-38, %v2685
  %v2687 = vsel %vm2684, %v2686, %v2682
  %v2688 = vmul.f32 1.0, %v2687
  %v2689 = vrcp.pop %v2673
  %v2690 = vmul.f32 %v2673, %v2689
  %v2691 = vsub.f32 1.0, %v2690
  %v2692 = vmul.f32 %v2689, %v2691
  %v2693 = vadd.f32 %v2689, %v2692
  %vm2694 = vweird.f32 %v2673
  %vm2695 = vweird.f32 %v2689
  %vm2696 = vmor %vm2694, %vm2695
  %v2697 = vsel %vm2696, %v2689, %v2693
  %v2698 = vand.u32 2147483647, %v2673
  %vm2699 = vcmp.eq.f32.partialorder %v2698, 8.507059e+37
  %v2700 = vand.u32 %v2673, 2147483648
  %v2701 = vor.u32 1.1754944e-38, %v2700
  %v2702 = vsel %vm2699, %v2701, %v2697
  %v2703 = vmul.f32 1.0, %v2702
  %v2704 = vtanh.pop %v2664
  %v2705 = vtanh.pop %v2665
  %v2706 = vmul.f32 %v2688, %v2638
  %v2707 = vmul.f32 %v2703, %v2639
  %2710 = vrot.lane.b32.xlu0 %v2704, 125
  %v2711 = vpop.permute.xlu0 %2710
  %2712 = vrot.lane.b32.xlu0 %v2705, 125
  %v2713 = vpop.permute.xlu0 %2712
  %v2716 = vmul.f32 %v2688, %v2711
  %v2717 = vmul.f32 %v2703, %v2713
  %2720 = vrot.lane.b32.xlu0 %v2716, 1
  %v2721 = vpop.permute.xlu0 %2720
  %2722 = vrot.lane.b32.xlu0 %v2717, 1
  %v2723 = vpop.permute.xlu0 %2722
  %v2726 = vadd.f32 %v2706, %v2721
  %v2727 = vadd.f32 %v2707, %v2723
  %v2728 = vtanh.pop %v2726
  %v2729 = vtanh.pop %v2727
  %2732 = vrot.lane.b32.xlu0 %v2728, 1
  %v2733 = vpop.permute.xlu0 %2732
  %2734 = vrot.lane.b32.xlu0 %v2729, 1
  %v2735 = vpop.permute.xlu0 %2734
  %v2738 = vmul.f32 %v2688, %v2733
  %v2739 = vmul.f32 %v2703, %v2735
  %2741 = vset.pattern.permute.xlu0 2
  %2742 = vperm.xlu0 %2741, %v2738
  %v2743 = vpop.permute.xlu0 %2742
  %2746 = vset.pattern.permute.xlu0 2
  %2747 = vperm.xlu0 %2746, %v2739
  %v2748 = vpop.permute.xlu0 %2747
  %v2750 = vmul.f32 %v2743, %v2396
  %v2751 = vmul.f32 %v2748, %v2397
  %v2752 = vadd.f32 %v2352, %v2750
  %v2753 = vadd.f32 %v2381, %v2751
  %v2754 = vxor.u32 %v2752, 2147483648
  %v2755 = vxor.u32 %v2753, 2147483648
  %v2756 = vmul.f32 %v2754, 1.442695
  %v2757 = vpow.pop %v2756
  %v2758 = vmul.f32 %v2755, 1.442695
  %v2759 = vpow.pop %v2758
  %v2760 = vadd.f32 %v2757, 1.0
  %v2761 = vadd.f32 %v2759, 1.0
  %v2762 = vrcp.pop %v2760
  %v2763 = vmul.f32 %v2760, %v2762
  %v2764 = vsub.f32 1.0, %v2763
  %v2765 = vmul.f32 %v2762, %v2764
  %v2766 = vadd.f32 %v2762, %v2765
  %vm2767 = vweird.f32 %v2760
  %vm2768 = vweird.f32 %v2762
  %vm2769 = vmor %vm2767, %vm2768
  %v2770 = vsel %vm2769, %v2762, %v2766
  %v2771 = vand.u32 2147483647, %v2760
  %vm2772 = vcmp.eq.f32.partialorder %v2771, 8.507059e+37
  %v2773 = vand.u32 %v2760, 2147483648
  %v2774 = vor.u32 1.1754944e-38, %v2773
  %v2775 = vsel %vm2772, %v2774, %v2770
  %v2776 = vmul.f32 1.0, %v2775
  %v2777 = vrcp.pop %v2761
  %v2778 = vmul.f32 %v2761, %v2777
  %v2779 = vsub.f32 1.0, %v2778
  %v2780 = vmul.f32 %v2777, %v2779
  %v2781 = vadd.f32 %v2777, %v2780
  %vm2782 = vweird.f32 %v2761
  %vm2783 = vweird.f32 %v2777
  %vm2784 = vmor %vm2782, %vm2783
  %v2785 = vsel %vm2784, %v2777, %v2781
  %v2786 = vand.u32 2147483647, %v2761
  %vm2787 = vcmp.eq.f32.partialorder %v2786, 8.507059e+37
  %v2788 = vand.u32 %v2761, 2147483648
  %v2789 = vor.u32 1.1754944e-38, %v2788
  %v2790 = vsel %vm2787, %v2789, %v2785
  %v2791 = vmul.f32 1.0, %v2790
  %v2792 = vtanh.pop %v2752
  %v2793 = vtanh.pop %v2753
  %v2794 = vmul.f32 %v2776, %v2726
  %v2795 = vmul.f32 %v2791, %v2727
  %2798 = vrot.lane.b32.xlu0 %v2792, 125
  %v2799 = vpop.permute.xlu0 %2798
  %2800 = vrot.lane.b32.xlu0 %v2793, 125
  %v2801 = vpop.permute.xlu0 %2800
  %v2804 = vmul.f32 %v2776, %v2799
  %v2805 = vmul.f32 %v2791, %v2801
  %2808 = vrot.lane.b32.xlu0 %v2804, 1
  %v2809 = vpop.permute.xlu0 %2808
  %2810 = vrot.lane.b32.xlu0 %v2805, 1
  %v2811 = vpop.permute.xlu0 %2810
  %v2814 = vadd.f32 %v2794, %v2809
  %v2815 = vadd.f32 %v2795, %v2811
  %v2816 = vtanh.pop %v2814
  %v2817 = vtanh.pop %v2815
  %2820 = vrot.lane.b32.xlu0 %v2816, 1
  %v2821 = vpop.permute.xlu0 %2820
  %2822 = vrot.lane.b32.xlu0 %v2817, 1
  %v2823 = vpop.permute.xlu0 %2822
  %v2826 = vmul.f32 %v2776, %v2821
  %v2827 = vmul.f32 %v2791, %v2823
  %2829 = vset.pattern.permute.xlu0 2
  %2830 = vperm.xlu0 %2829, %v2826
  %v2831 = vpop.permute.xlu0 %2830
  %2834 = vset.pattern.permute.xlu0 2
  %2835 = vperm.xlu0 %2834, %v2827
  %v2836 = vpop.permute.xlu0 %2835
  %v2838 = vmul.f32 %v2831, %v2396
  %v2839 = vmul.f32 %v2836, %v2397
  %v2840 = vadd.f32 %v2355, %v2838
  %v2841 = vadd.f32 %v2385, %v2839
  %v2842 = vxor.u32 %v2840, 2147483648
  %v2843 = vxor.u32 %v2841, 2147483648
  %v2844 = vmul.f32 %v2842, 1.442695
  %v2845 = vpow.pop %v2844
  %v2846 = vmul.f32 %v2843, 1.442695
  %v2847 = vpow.pop %v2846
  %v2848 = vadd.f32 %v2845, 1.0
  %v2849 = vadd.f32 %v2847, 1.0
  %v2850 = vrcp.pop %v2848
  %v2851 = vmul.f32 %v2848, %v2850
  %v2852 = vsub.f32 1.0, %v2851
  %v2853 = vmul.f32 %v2850, %v2852
  %v2854 = vadd.f32 %v2850, %v2853
  %vm2855 = vweird.f32 %v2848
  %vm2856 = vweird.f32 %v2850
  %vm2857 = vmor %vm2855, %vm2856
  %v2858 = vsel %vm2857, %v2850, %v2854
  %v2859 = vand.u32 2147483647, %v2848
  %vm2860 = vcmp.eq.f32.partialorder %v2859, 8.507059e+37
  %v2861 = vand.u32 %v2848, 2147483648
  %v2862 = vor.u32 1.1754944e-38, %v2861
  %v2863 = vsel %vm2860, %v2862, %v2858
  %v2864 = vmul.f32 1.0, %v2863
  %v2865 = vrcp.pop %v2849
  %v2866 = vmul.f32 %v2849, %v2865
  %v2867 = vsub.f32 1.0, %v2866
  %v2868 = vmul.f32 %v2865, %v2867
  %v2869 = vadd.f32 %v2865, %v2868
  %vm2870 = vweird.f32 %v2849
  %vm2871 = vweird.f32 %v2865
  %vm2872 = vmor %vm2870, %vm2871
  %v2873 = vsel %vm2872, %v2865, %v2869
  %v2874 = vand.u32 2147483647, %v2849
  %vm2875 = vcmp.eq.f32.partialorder %v2874, 8.507059e+37
  %v2876 = vand.u32 %v2849, 2147483648
  %v2877 = vor.u32 1.1754944e-38, %v2876
  %v2878 = vsel %vm2875, %v2877, %v2873
  %v2879 = vmul.f32 1.0, %v2878
  %v2880 = vtanh.pop %v2840
  %v2881 = vtanh.pop %v2841
  %v2882 = vmul.f32 %v2864, %v2814
  %v2883 = vmul.f32 %v2879, %v2815
  %2886 = vrot.lane.b32.xlu0 %v2880, 125
  %v2887 = vpop.permute.xlu0 %2886
  %2888 = vrot.lane.b32.xlu0 %v2881, 125
  %v2889 = vpop.permute.xlu0 %2888
  %v2892 = vmul.f32 %v2864, %v2887
  %v2893 = vmul.f32 %v2879, %v2889
  %2896 = vrot.lane.b32.xlu0 %v2892, 1
  %v2897 = vpop.permute.xlu0 %2896
  %2898 = vrot.lane.b32.xlu0 %v2893, 1
  %v2899 = vpop.permute.xlu0 %2898
  %v2902 = vadd.f32 %v2882, %v2897
  %v2903 = vadd.f32 %v2883, %v2899
  %v2904 = vtanh.pop %v2902
  %v2905 = vtanh.pop %v2903
  %2908 = vrot.lane.b32.xlu0 %v2904, 1
  %v2909 = vpop.permute.xlu0 %2908
  %2910 = vrot.lane.b32.xlu0 %v2905, 1
  %v2911 = vpop.permute.xlu0 %2910
  %v2914 = vmul.f32 %v2864, %v2909
  %v2915 = vmul.f32 %v2879, %v2911
  %2917 = vset.pattern.permute.xlu0 2
  %2918 = vperm.xlu0 %2917, %v2914
  %v2919 = vpop.permute.xlu0 %2918
  %2922 = vset.pattern.permute.xlu0 2
  %2923 = vperm.xlu0 %2922, %v2915
  %v2924 = vpop.permute.xlu0 %2923
  %v2926 = vmul.f32 %v2919, %v2396
  %v2927 = vmul.f32 %v2924, %v2397
  %v2928 = vadd.f32 %v2358, %v2926
  %v2929 = vadd.f32 %v2389, %v2927
  %v2930 = vxor.u32 %v2928, 2147483648
  %v2931 = vxor.u32 %v2929, 2147483648
  %v2932 = vmul.f32 %v2930, 1.442695
  %v2933 = vpow.pop %v2932
  %v2934 = vmul.f32 %v2931, 1.442695
  %v2935 = vpow.pop %v2934
  %v2936 = vadd.f32 %v2933, 1.0
  %v2937 = vadd.f32 %v2935, 1.0
  %v2938 = vrcp.pop %v2936
  %v2939 = vmul.f32 %v2936, %v2938
  %v2940 = vsub.f32 1.0, %v2939
  %v2941 = vmul.f32 %v2938, %v2940
  %v2942 = vadd.f32 %v2938, %v2941
  %vm2943 = vweird.f32 %v2936
  %vm2944 = vweird.f32 %v2938
  %vm2945 = vmor %vm2943, %vm2944
  %v2946 = vsel %vm2945, %v2938, %v2942
  %v2947 = vand.u32 2147483647, %v2936
  %vm2948 = vcmp.eq.f32.partialorder %v2947, 8.507059e+37
  %v2949 = vand.u32 %v2936, 2147483648
  %v2950 = vor.u32 1.1754944e-38, %v2949
  %v2951 = vsel %vm2948, %v2950, %v2946
  %v2952 = vmul.f32 1.0, %v2951
  %v2953 = vrcp.pop %v2937
  %v2954 = vmul.f32 %v2937, %v2953
  %v2955 = vsub.f32 1.0, %v2954
  %v2956 = vmul.f32 %v2953, %v2955
  %v2957 = vadd.f32 %v2953, %v2956
  %vm2958 = vweird.f32 %v2937
  %vm2959 = vweird.f32 %v2953
  %vm2960 = vmor %vm2958, %vm2959
  %v2961 = vsel %vm2960, %v2953, %v2957
  %v2962 = vand.u32 2147483647, %v2937
  %vm2963 = vcmp.eq.f32.partialorder %v2962, 8.507059e+37
  %v2964 = vand.u32 %v2937, 2147483648
  %v2965 = vor.u32 1.1754944e-38, %v2964
  %v2966 = vsel %vm2963, %v2965, %v2961
  %v2967 = vmul.f32 1.0, %v2966
  %v2968 = vtanh.pop %v2928
  %v2969 = vtanh.pop %v2929
  %v2970 = vmul.f32 %v2952, %v2902
  %v2971 = vmul.f32 %v2967, %v2903
  %2974 = vrot.lane.b32.xlu0 %v2968, 125
  %v2975 = vpop.permute.xlu0 %2974
  %2976 = vrot.lane.b32.xlu0 %v2969, 125
  %v2977 = vpop.permute.xlu0 %2976
  %v2980 = vmul.f32 %v2952, %v2975
  %v2981 = vmul.f32 %v2967, %v2977
  %2984 = vrot.lane.b32.xlu0 %v2980, 1
  %v2985 = vpop.permute.xlu0 %2984
  %2986 = vrot.lane.b32.xlu0 %v2981, 1
  %v2987 = vpop.permute.xlu0 %2986
  %v2990 = vadd.f32 %v2970, %v2985
  %v2991 = vadd.f32 %v2971, %v2987
  %v2992 = vtanh.pop %v2990
  %v2993 = vtanh.pop %v2991
  %2996 = vrot.lane.b32.xlu0 %v2992, 1
  %v2997 = vpop.permute.xlu0 %2996
  %2998 = vrot.lane.b32.xlu0 %v2993, 1
  %v2999 = vpop.permute.xlu0 %2998
  %v3002 = vmul.f32 %v2952, %v2997
  %v3003 = vmul.f32 %v2967, %v2999
  %3005 = vset.pattern.permute.xlu0 2
  %3006 = vperm.xlu0 %3005, %v3002
  %v3007 = vpop.permute.xlu0 %3006
  %3010 = vset.pattern.permute.xlu0 2
  %3011 = vperm.xlu0 %3010, %v3003
  %v3012 = vpop.permute.xlu0 %3011
  %v3014 = vmul.f32 %v3007, %v2396
  %v3015 = vmul.f32 %v3012, %v2397
  %v3016 = vadd.f32 %v2361, %v3014
  %v3017 = vadd.f32 %v2393, %v3015
  %v3018 = vxor.u32 %v3016, 2147483648
  %v3019 = vxor.u32 %v3017, 2147483648
  %v3020 = vmul.f32 %v3018, 1.442695
  %v3021 = vpow.pop %v3020
  %v3022 = vmul.f32 %v3019, 1.442695
  %v3023 = vpow.pop %v3022
  %v3024 = vadd.f32 %v3021, 1.0
  %v3025 = vadd.f32 %v3023, 1.0
  %v3026 = vrcp.pop %v3024
  %v3027 = vmul.f32 %v3024, %v3026
  %v3028 = vsub.f32 1.0, %v3027
  %v3029 = vmul.f32 %v3026, %v3028
  %v3030 = vadd.f32 %v3026, %v3029
  %vm3031 = vweird.f32 %v3024
  %vm3032 = vweird.f32 %v3026
  %vm3033 = vmor %vm3031, %vm3032
  %v3034 = vsel %vm3033, %v3026, %v3030
  %v3035 = vand.u32 2147483647, %v3024
  %vm3036 = vcmp.eq.f32.partialorder %v3035, 8.507059e+37
  %v3037 = vand.u32 %v3024, 2147483648
  %v3038 = vor.u32 1.1754944e-38, %v3037
  %v3039 = vsel %vm3036, %v3038, %v3034
  %v3040 = vmul.f32 1.0, %v3039
  %v3041 = vrcp.pop %v3025
  %v3042 = vmul.f32 %v3025, %v3041
  %v3043 = vsub.f32 1.0, %v3042
  %v3044 = vmul.f32 %v3041, %v3043
  %v3045 = vadd.f32 %v3041, %v3044
  %vm3046 = vweird.f32 %v3025
  %vm3047 = vweird.f32 %v3041
  %vm3048 = vmor %vm3046, %vm3047
  %v3049 = vsel %vm3048, %v3041, %v3045
  %v3050 = vand.u32 2147483647, %v3025
  %vm3051 = vcmp.eq.f32.partialorder %v3050, 8.507059e+37
  %v3052 = vand.u32 %v3025, 2147483648
  %v3053 = vor.u32 1.1754944e-38, %v3052
  %v3054 = vsel %vm3051, %v3053, %v3049
  %v3055 = vmul.f32 1.0, %v3054
  %v3056 = vtanh.pop %v3016
  %v3057 = vtanh.pop %v3017
  %v3058 = vmul.f32 %v3040, %v2990
  %v3059 = vmul.f32 %v3055, %v2991
  %3062 = vrot.lane.b32.xlu0 %v3056, 125
  %v3063 = vpop.permute.xlu0 %3062
  %3064 = vrot.lane.b32.xlu0 %v3057, 125
  %v3065 = vpop.permute.xlu0 %3064
  %v3068 = vmul.f32 %v3040, %v3063
  %v3069 = vmul.f32 %v3055, %v3065
  %3072 = vrot.lane.b32.xlu0 %v3068, 1
  %v3073 = vpop.permute.xlu0 %3072
  %3074 = vrot.lane.b32.xlu0 %v3069, 1
  %v3075 = vpop.permute.xlu0 %3074
  %v3078 = vadd.f32 %v3058, %v3073
  %v3079 = vadd.f32 %v3059, %v3075
  %v3080 = vtanh.pop %v3078
  %v3081 = vtanh.pop %v3079
  %3084 = vrot.lane.b32.xlu0 %v3080, 1
  %v3085 = vpop.permute.xlu0 %3084
  %3086 = vrot.lane.b32.xlu0 %v3081, 1
  %v3087 = vpop.permute.xlu0 %3086
  %v3090 = vmul.f32 %v3040, %v3085
  %v3091 = vmul.f32 %v3055, %v3087
  %v3092 = vadd.f32 %v2474, %v3091
  %v3093 = vadd.f32 %v2562, %v3003
  %v3094 = vadd.f32 %v2650, %v2915
  %v3095 = vadd.f32 %v2738, %v2827
  %v3096 = vadd.f32 %v2826, %v2739
  %v3097 = vadd.f32 %v2914, %v2651
  %v3098 = vadd.f32 %v3002, %v2563
  %v3099 = vadd.f32 %v3090, %v2475
  %3101 = vrot.lane.b32.xlu0 %v3092, 126
  %v3102 = vpop.permute.xlu0 %3101
  %3105 = vrot.lane.b32.xlu0 %v3093, 127
  %v3106 = vpop.permute.xlu0 %3105
  %3109 = vrot.lane.b32.xlu0 %v3095, 1
  %v3110 = vpop.permute.xlu0 %3109
  %3113 = vrot.lane.b32.xlu0 %v3096, 2
  %v3114 = vpop.permute.xlu0 %3113
  %3117 = vrot.lane.b32.xlu0 %v3097, 3
  %v3118 = vpop.permute.xlu0 %3117
  %3121 = vrot.lane.b32.xlu0 %v3098, 4
  %v3122 = vpop.permute.xlu0 %3121
  %3125 = vrot.lane.b32.xlu0 %v3099, 5
  %v3126 = vpop.permute.xlu0 %3125
  %vm3128 = vcmask 7168
  %v3129 = vsel %vm3128, %v3102, %v3106
  %vm3130 = vcmask 15360
  %v3131 = vsel %vm3130, %v3129, %v3094
  %vm3132 = vcmask 23552
  %v3133 = vsel %vm3132, %v3131, %v3110
  %vm3134 = vcmask 31744
  %v3135 = vsel %vm3134, %v3133, %v3114
  %vm3136 = vcmask 39936
  %v3137 = vsel %vm3136, %v3135, %v3118
  %vm3138 = vcmask 48128
  %v3139 = vsel %vm3138, %v3137, %v3122
  %vm3140 = vcmask 56320
  %v3141 = vsel %vm3140, %v3139, %v3126
  %vm3142 = vcmask 64512
  %v3143 = vsel %vm3142, %v3141, 0.0
  %3144 = vst [vmem:[%s11] sm:$0xff] %v3143
  %v3145 = vld [vmem:[%s9] sm:$0xff]
  %v3146 = vld [vmem:[%s9 + $0x8] sm:$0xff]
  %v3147 = vld [vmem:[%s9 + $0x10] sm:$0xff]
  %v3148 = vld [vmem:[%s9 + $0x18] sm:$0xff]
  %v3149 = vld [vmem:[%s9 + $0x20] sm:$0xff]
  %v3150 = vld [vmem:[%s9 + $0x28] sm:$0xff]
  %v3151 = vld [vmem:[%s9 + $0x30] sm:$0xff]
  %v3152 = vld [vmem:[%s9 + $0x38] sm:$0xff]
  %v3153 = vld [vmem:[%s9 + $0x40] sm:$0xff]
  %v3154 = vld [vmem:[%s9 + $0x48] sm:$0xff]
  %v3155 = vld [vmem:[%s9 + $0x50] sm:$0xff]
  %v3156 = vld [vmem:[%s9 + $0x58] sm:$0xff]
  %v3157 = vld [vmem:[%s9 + $0x60] sm:$0xff]
  %v3158 = vld [vmem:[%s9 + $0x68] sm:$0xff]
  %v3159 = vld [vmem:[%s9 + $0x70] sm:$0xff]
  %v3160 = vld [vmem:[%s9 + $0x78] sm:$0xff]
  %v3161 = vld [vmem:[%s10] sm:$0x1]
  %v3163 = vperm.slane %v3161, 0
  %3165 = vmatpush.msra.mxu0 %v3160
  %3166 = vmatpush.msra.mxu0 %v3159
  %3167 = vmatpush.msra.mxu0 %v3158
  %3168 = vmatpush.msra.mxu0 %v3157
  %3169 = vmatpush.msra.mxu0 %v3156
  %3170 = vmatpush.msra.mxu0 %v3155
  %3171 = vmatpush.msra.mxu0 %v3154
  %3172 = vmatpush.msra.mxu0 %v3153
  %3173 = vmatpush.msra.mxu0 %v3152
  %3174 = vmatpush.msra.mxu0 %v3151
  %3175 = vmatpush.msra.mxu0 %v3150
  %3176 = vmatpush.msra.mxu0 %v3149
  %3177 = vmatpush.msra.mxu0 %v3148
  %3178 = vmatpush.msra.mxu0 %v3147
  %3179 = vmatpush.msra.mxu0 %v3146
  %3180 = vmatpush.msra.mxu0 %v3145
  %3181 = vmatmul.f32.gmra.mxu0 %v3143
  %v3182 = vpop.f32.mrf.mxu0
  %v3183 = vadd.f32 %v3163, %v3182
  %3184 = vdwg.mxu0
  %3185 = vst [vmem:[%s12] sm:$0xff] %v3183
  // Predicated region
  $region46: #{tae_forward.1} parent=0 // pred_check
    _
  $region47: #{tae_forward.1} parent=0 // pred_check_branch
    %3187 = sbr.rel (0) target = $region49
  $region48: #{tae_forward.1} parent=0 // pred_region
    _
  $region49: #{tae_forward.1} parent=0 // pred_fallthru
    _
  // Predicated region
  $region50: #{tae_forward.1} parent=0 // pred_check
    _
  $region51: #{tae_forward.1} parent=0 // pred_check_branch
    %3189 = sbr.rel (0) target = $region53
  $region52: #{tae_forward.1} parent=0 // pred_region
    _
  $region53: #{tae_forward.1} parent=0 // pred_fallthru
    _
  // Predicated region
  $region54: #{tae_forward.1} parent=0 // pred_check
    _
  $region55: #{tae_forward.1} parent=0 // pred_check_branch
    %3191 = sbr.rel (0) target = $region57
  $region56: #{tae_forward.1} parent=0 // pred_region
    _
  $region57: #{tae_forward.1} parent=0 // pred_fallthru
    _
  // Predicated region
  $region58: #{tae_forward.1} parent=0 // pred_check
    _
  $region59: #{tae_forward.1} parent=0 // pred_check_branch
    %3193 = sbr.rel (0) target = $region61
  $region60: #{tae_forward.1} parent=0 // pred_region
    _
  $region61: #{tae_forward.1} parent=0 // pred_fallthru
    _

</llo_original>
